<compile_context>
chip_gen: v5e
topology: v5e:2x2
jax: 0.10.0
libtpu: 0.0.40
codegen_flags: <defaults>
</compile_context>

<pallas_src>
import functools

import jax
import jax.numpy as jnp
from jax.experimental import pallas as pl
from jax.experimental.pallas import tpu as pltpu

EXPANSION = 4
BN_EPS = 1e-5
LANE = 128


def _round_up(x, m):
    return (x + m - 1) // m * m


@functools.lru_cache(maxsize=None)
def _vmem_limit_bytes():
    """Scoped-VMEM limit: physical minus headroom, capped (v7x ~48MiB, v5e/v6e ~100MiB)."""
    phys = 64 * 1024 * 1024
    try:
        info = pltpu.get_tpu_info()
        phys = int(getattr(info, "vmem_capacity_bytes", phys))
    except Exception:
        pass
    return int(max(32 * 1024 * 1024, min(phys - 16 * 1024 * 1024, 100 * 1024 * 1024)))


def _channel_tile(c):
    # Prefer 256-wide tiles (v6e/v7x MXU is 2x256x256); 128 is always legal.
    # TODO(synk): on v5e a 128-wide tile already fills its 4x128x128 MXU.
    if c % 256 == 0:
        return 256
    return 128 if c % 128 == 0 else c


def _row_tile(m):
    for t in (1024, 512, 256, 128):
        if m >= t:
            return t
    return _round_up(m, 8)


# ------------------------------ Pallas kernels ------------------------------ #

def _conv1x1_bn_relu_pad_kernel(x_ref, w_ref, b_ref, o_ref, *, H, W, pad):
    """1x1 conv (BN scale folded into w) + bias + ReLU, written straight into a
    spatially zero-padded NHWC block -> no separate halo-pad HBM pass."""
    y = jnp.dot(x_ref[0], w_ref[...], preferred_element_type=jnp.float32)
    y = jnp.maximum(y + b_ref[...], 0.0).astype(o_ref.dtype)
    # Zero the whole padded block (halo + one slack row), then store valid rows.
    o_ref[...] = jnp.zeros_like(o_ref)
    for h in range(H):  # static unrolled row stores into the halo interior
        o_ref[0, pad + h, pad:pad + W, :] = y[h * W:(h + 1) * W, :]


def _conv3x3_bn_relu_kernel(x_ref, w_ref, b_ref, o_ref, acc_ref, *,
                            dilation, Wp, Ho, Wo):
    """3x3 conv over a FLAT padded activation: each tap is a contiguous static
    row-range slice (garbage columns over-computed, dropped in the epilogue);
    the 9 MXU dots are chained locally and the f32 acc is updated once/step."""
    k = pl.program_id(2)

    @pl.when(k == 0)
    def _init():
        acc_ref[...] = jnp.zeros_like(acc_ref)

    rows = Ho * Wp
    part = None
    for t in range(9):
        kh, kw = divmod(t, 3)
        off = (kh * Wp + kw) * dilation          # static contiguous offset
        xt = x_ref[0, off:off + rows, :]
        dv = jnp.dot(xt, w_ref[t], preferred_element_type=jnp.float32)
        part = dv if part is None else part + dv
    acc_ref[...] += part                          # single accumulator RMW

    @pl.when(k == pl.num_programs(2) - 1)
    def _epilogue():
        y = jnp.maximum(acc_ref[...] + b_ref[...], 0.0).astype(o_ref.dtype)
        for ho in range(Ho):                      # drop the 2*dilation garbage cols
            o_ref[0, ho, :, :] = y[ho * Wp:ho * Wp + Wo, :]


def _conv1x1_bn_add_relu_kernel(x_ref, w_ref, b_ref, r_ref, o_ref):
    """1x1 conv (BN scale folded) + bias + streamed residual add + ReLU."""
    acc = jnp.dot(x_ref[...], w_ref[...], preferred_element_type=jnp.float32)
    y = acc + b_ref[...] + r_ref[...].astype(jnp.float32)
    o_ref[...] = jnp.maximum(y, 0.0).astype(o_ref.dtype)


# --------------------------- pallas_call wrappers --------------------------- #

def conv1x1_bn_relu_pad(x3, w, bias, *, H, W, pad, out_dtype=jnp.bfloat16):
    """x3: (N, H*W, Cin_p).  Returns (N, H+2*pad+1, W+2*pad, Cout_p) with a zero
    halo plus one extra zero slack row for conv2's flat-tap over-read."""
    N, HW, K = x3.shape
    Cop = w.shape[1]
    Hp = H + 2 * pad + 1
    Wp = W + 2 * pad
    kernel = functools.partial(_conv1x1_bn_relu_pad_kernel, H=H, W=W, pad=pad)
    return pl.pallas_call(
        kernel,
        out_shape=jax.ShapeDtypeStruct((N, Hp, Wp, Cop), out_dtype),
        grid_spec=pltpu.PrefetchScalarGridSpec(
            num_scalar_prefetch=0,
            grid=(N,),
            in_specs=[
                pl.BlockSpec((1, HW, K), lambda n: (n, 0, 0)),
                pl.BlockSpec((K, Cop), lambda n: (0, 0)),   # whole weight in VMEM
                pl.BlockSpec((1, Cop), lambda n: (0, 0)),
            ],
            out_specs=pl.BlockSpec((1, Hp, Wp, Cop), lambda n: (n, 0, 0, 0)),
        ),
        compiler_params=pltpu.CompilerParams(
            dimension_semantics=("parallel",),
            vmem_limit_bytes=_vmem_limit_bytes()),
    )(x3, w, bias)


def conv3x3_bn_relu(x_flat, w_taps, bias, *, Wp, Ho, Wo, dilation,
                    out_dtype=jnp.bfloat16):
    """x_flat: (N, Hpad*Wp, Cp) flattened zero-padded NHWC.  w_taps: (9, Cp, Cop).
    Returns (N, Ho, Wo, Cop)."""
    N, F, Cp = x_flat.shape
    Cop = w_taps.shape[2]
    TCk = _channel_tile(Cp)
    TCo = _channel_tile(Cop)
    grid = (N, Cop // TCo, Cp // TCk)
    kernel = functools.partial(_conv3x3_bn_relu_kernel,
                               dilation=dilation, Wp=Wp, Ho=Ho, Wo=Wo)
    return pl.pallas_call(
        kernel,
        out_shape=jax.ShapeDtypeStruct((N, Ho, Wo, Cop), out_dtype),
        grid_spec=pltpu.PrefetchScalarGridSpec(
            num_scalar_prefetch=0,
            grid=grid,
            in_specs=[
                pl.BlockSpec((1, F, TCk), lambda n, j, k: (n, 0, k)),
                pl.BlockSpec((9, TCk, TCo), lambda n, j, k: (0, k, j)),
                pl.BlockSpec((1, TCo), lambda n, j, k: (0, j)),
            ],
            out_specs=pl.BlockSpec((1, Ho, Wo, TCo), lambda n, j, k: (n, 0, 0, j)),
            scratch_shapes=[pltpu.VMEM((Ho * Wp, TCo), jnp.float32)],
        ),
        compiler_params=pltpu.CompilerParams(
            dimension_semantics=("parallel", "parallel", "arbitrary"),
            vmem_limit_bytes=_vmem_limit_bytes()),
    )(x_flat, w_taps, bias)


def conv1x1_bn_add_relu(x, w, bias, res, *, out_dtype=jnp.bfloat16):
    """x: (M, K), w: (K, N) whole weight in VMEM, res streamed per M-tile.
    M is padded up to a tile multiple (zero rows are harmless, sliced off)."""
    M, K = x.shape
    Np = w.shape[1]
    TM = _row_tile(M)
    Mp = _round_up(M, TM)
    if Mp != M:
        x = jnp.pad(x, ((0, Mp - M), (0, 0)))
        res = jnp.pad(res, ((0, Mp - M), (0, 0)))
    out = pl.pallas_call(
        _conv1x1_bn_add_relu_kernel,
        out_shape=jax.ShapeDtypeStruct((Mp, Np), out_dtype),
        grid_spec=pltpu.PrefetchScalarGridSpec(
            num_scalar_prefetch=0,
            grid=(Mp // TM,),
            in_specs=[
                pl.BlockSpec((TM, K), lambda i: (i, 0)),
                pl.BlockSpec((K, Np), lambda i: (0, 0)),    # whole weight in VMEM
                pl.BlockSpec((1, Np), lambda i: (0, 0)),
                pl.BlockSpec((TM, Np), lambda i: (i, 0)),   # streamed residual
            ],
            out_specs=pl.BlockSpec((TM, Np), lambda i: (i, 0)),
        ),
        compiler_params=pltpu.CompilerParams(
            dimension_semantics=("parallel",),
            vmem_limit_bytes=_vmem_limit_bytes()),
    )(x, w, bias, res)
    return out[:M] if Mp != M else out


# ------------------------------ parameter prep ------------------------------ #

def fold_bn(gamma, beta, mean, var, eps=BN_EPS):
    scale = gamma / jnp.sqrt(var + eps)
    bias = beta - mean * scale
    return scale.astype(jnp.float32), bias.astype(jnp.float32)


def prepare_params(params, inplanes, planes):
    """One-time prep: fold BN scale into the weights (output-channel axis),
    pad channels to 128-lane multiples, cast weights to bf16, keep f32 biases."""
    cin_p = _round_up(inplanes, LANE)
    cmid_p = _round_up(planes, LANE)
    cout = planes * EXPANSION
    cout_p = _round_up(cout, LANE)

    s1, b1 = fold_bn(params["bn1_gamma"], params["bn1_beta"],
                     params["bn1_mean"], params["bn1_var"])
    s2, b2 = fold_bn(params["bn2_gamma"], params["bn2_beta"],
                     params["bn2_mean"], params["bn2_var"])
    s3, b3 = fold_bn(params["bn3_gamma"], params["bn3_beta"],
                     params["bn3_mean"], params["bn3_var"])

    # conv1: (planes, inplanes, 1, 1) -> (Cin_p, Cmid_p), scale folded.
    w1 = params["w1"].reshape(planes, inplanes).T * s1[None, :]
    w1 = jnp.pad(w1, ((0, cin_p - inplanes), (0, cmid_p - planes))).astype(jnp.bfloat16)

    # conv2: (planes, planes, 3, 3) -> (9 taps [kh,kw], Cin_p, Cout_p), scale folded.
    w2 = jnp.transpose(params["w2"], (2, 3, 1, 0)).reshape(9, planes, planes)
    w2 = w2 * s2[None, None, :]
    w2 = jnp.pad(w2, ((0, 0), (0, cmid_p - planes), (0, cmid_p - planes)))
    w2 = w2.astype(jnp.bfloat16)

    # conv3: (4*planes, planes, 1, 1) -> (Cmid_p, Cout_p), scale folded.
    w3 = params["w3"].reshape(cout, planes).T * s3[None, :]
    w3 = jnp.pad(w3, ((0, cmid_p - planes), (0, cout_p - cout))).astype(jnp.bfloat16)

    def pad_bias(b, cp):
        return jnp.pad(b, (0, cp - b.shape[0])).reshape(1, cp)

    return dict(w1=w1, w2=w2, w3=w3,
                b1=pad_bias(b1, cmid_p), b2=pad_bias(b2, cmid_p),
                b3=pad_bias(b3, cout_p))


def init_params(key, inplanes, planes):
    """Deterministic synthetic parameters matching BottleneckV1b.__init__ shapes."""
    ks = jax.random.split(key, 15)
    p = {
        "w1": 0.1 * jax.random.normal(ks[0], (planes, inplanes, 1, 1), jnp.float32),
        "w2": 0.1 * jax.random.normal(ks[1], (planes, planes, 3, 3), jnp.float32),
        "w3": 0.1 * jax.random.normal(ks[2], (planes * EXPANSION, planes, 1, 1),
                                      jnp.float32),
    }
    for idx, (i, c) in enumerate(zip((1, 2, 3), (planes, planes, planes * EXPANSION))):
        base = 3 + 4 * idx
        p[f"bn{i}_gamma"] = 1.0 + 0.05 * jax.random.normal(ks[base + 0], (c,), jnp.float32)
        p[f"bn{i}_beta"] = 0.05 * jax.random.normal(ks[base + 1], (c,), jnp.float32)
        p[f"bn{i}_mean"] = 0.05 * jax.random.normal(ks[base + 2], (c,), jnp.float32)
        p[f"bn{i}_var"] = 1.0 + 0.1 * jax.random.uniform(ks[base + 3], (c,), jnp.float32)
    return p


# --------------------------------- forward ---------------------------------- #

def _bottleneck_v1b_forward(x_nchw, prepared, out_channels, stride, dilation):
    N, Cin, H, W = x_nchw.shape
    cin_p = prepared["w1"].shape[0]
    cmid_p = prepared["w1"].shape[1]
    cout_p = prepared["w3"].shape[1]

    # TODO(synk): downsample branch (1x1 conv + BN on the identity) not implemented.
    if stride != 1 or Cin != out_channels:
        raise NotImplementedError(
            "identity shortcut requires stride == 1 and inplanes == planes * 4 "
            "(downsample=None)")

    # NCHW -> NHWC (channels on the lane axis), bf16, zero-pad channels to 128.
    x_nhwc = jnp.transpose(x_nchw, (0, 2, 3, 1)).astype(jnp.bfloat16)
    x_nhwc = jnp.pad(x_nhwc, ((0, 0), (0, 0), (0, 0), (0, cin_p - Cin)))
    x3 = x_nhwc.reshape(N, H * W, cin_p)

    pad = dilation
    Wp = W + 2 * pad
    Hp = H + 2 * pad + 1          # one extra zero slack row for conv2's over-read
    Ho, Wo = H, W                 # stride == 1

    # conv1 (1x1) + bn1 + relu, written directly into the zero-halo layout.
    out1_pad = conv1x1_bn_relu_pad(x3, prepared["w1"], prepared["b1"],
                                   H=H, W=W, pad=pad)
    out1_flat = out1_pad.reshape(N, Hp * Wp, cmid_p)   # free, contiguous reshape

    # conv2 (3x3, dilation, padding=dilation) + bn2 + relu (flat-tap MXU reduction).
    out2 = conv3x3_bn_relu(out1_flat, prepared["w2"], prepared["b2"],
                           Wp=Wp, Ho=Ho, Wo=Wo, dilation=dilation)
    out2_2d = out2.reshape(N * Ho * Wo, cmid_p)

    # conv3 (1x1) + bn3 + residual add + relu, bf16 output.
    identity2d = x3.reshape(N * H * W, cin_p)          # cin_p == cout_p here
    out3 = conv1x1_bn_add_relu(out2_2d, prepared["w3"], prepared["b3"], identity2d)

    out_nhwc = out3.reshape(N, Ho, Wo, cout_p)[..., :out_channels]
    return jnp.transpose(out_nhwc, (0, 3, 1, 2)).astype(jnp.float32)  # back to NCHW


bottleneck_v1b_forward = jax.jit(
    _bottleneck_v1b_forward, static_argnames=("out_channels", "stride", "dilation"))


# ----------------------------- plain-JAX reference --------------------------- #

def reference_forward(x_nchw, p, stride=1, dilation=1):
    x = jnp.transpose(x_nchw, (0, 2, 3, 1)).astype(jnp.float32)

    def conv(inp, w_oihw, s, d, padding):
        w = jnp.transpose(w_oihw, (2, 3, 1, 0))  # OIHW -> HWIO
        return jax.lax.conv_general_dilated(
            inp, w, window_strides=(s, s),
            padding=((padding, padding), (padding, padding)),
            rhs_dilation=(d, d), dimension_numbers=("NHWC", "HWIO", "NHWC"))

    def bn(y, prefix):
        s, b = fold_bn(p[f"{prefix}_gamma"], p[f"{prefix}_beta"],
                       p[f"{prefix}_mean"], p[f"{prefix}_var"])
        return y * s + b

    out = jax.nn.relu(bn(conv(x, p["w1"], 1, 1, 0), "bn1"))
    out = jax.nn.relu(bn(conv(out, p["w2"], stride, dilation, dilation), "bn2"))
    out = bn(conv(out, p["w3"], 1, 1, 0), "bn3")
    out = jax.nn.relu(out + x)
    return jnp.transpose(out, (0, 3, 1, 2))


# ----------------------------------- main ------------------------------------ #

if __name__ == "__main__":
    # Small shapes: batch=2, inplanes=16, planes=4 (=> out channels 16), 16x16.
    N, inplanes, H, W = 2, 16, 16, 16
    planes = inplanes // EXPANSION

    key = jax.random.PRNGKey(0)
    kx, kp = jax.random.split(key)
    x = jax.random.normal(kx, (N, inplanes, H, W), jnp.float32)
    raw_params = init_params(kp, inplanes, planes)
    prepared = prepare_params(raw_params, inplanes, planes)

    out = bottleneck_v1b_forward(x, prepared,
                                 out_channels=planes * EXPANSION,
                                 stride=1, dilation=1)
    out = jax.block_until_ready(out)

    assert out.shape == (N, planes * EXPANSION, H, W), out.shape
    assert bool(jnp.all(out >= 0.0))            # final ReLU
    assert bool(jnp.all(jnp.isfinite(out)))

    # Loose-tolerance check vs a plain-JAX f32 reference (bf16 MXU path).
    ref = reference_forward(x, raw_params, stride=1, dilation=1)
    max_err = float(jnp.max(jnp.abs(out - ref)))
    assert max_err < 0.1, f"max abs error {max_err}"

    print("KERNEL_OK")
</pallas_src>

<mosaic_0001>
module attributes {stable_mosaic.version = 11 : i64} {
  func.func @_conv1x1_bn_relu_pad_kernel(%arg0: i32, %arg1: memref<1x256x128xbf16, #tpu.memory_space<vmem>>, %arg2: memref<128x128xbf16, #tpu.memory_space<vmem>>, %arg3: memref<1x128xf32, #tpu.memory_space<vmem>>, %arg4: memref<1x19x18x128xbf16, #tpu.memory_space<vmem>>) attributes {dimension_semantics = [#tpu.dimension_semantics<parallel>], iteration_bounds = array<i64: 2>, scalar_prefetch = 0 : i64, scratch_operands = 0 : i64, tpu.core_type = #tpu.core_type<tc>, window_params = [{transform_indices = @transform_0, window_bounds = array<i64: 1, 256, 128>}, {pipeline_mode = #tpu.pipeline_mode<synchronous>, transform_indices = @transform_1, window_bounds = array<i64: 128, 128>}, {pipeline_mode = #tpu.pipeline_mode<synchronous>, transform_indices = @transform_2, window_bounds = array<i64: 1, 128>}, {transform_indices = @transform_3, window_bounds = array<i64: 1, 19, 18, 128>}]} {
    %c0 = arith.constant 0 : index
    %c0_0 = arith.constant 0 : index
    %c0_1 = arith.constant 0 : index
    %0 = vector.load %arg1[%c0, %c0_0, %c0_1] : memref<1x256x128xbf16, #tpu.memory_space<vmem>>, vector<1x256x128xbf16>
    %1 = vector.shape_cast %0 : vector<1x256x128xbf16> to vector<256x128xbf16>
    %c0_2 = arith.constant 0 : index
    %c0_3 = arith.constant 0 : index
    %2 = vector.load %arg2[%c0_2, %c0_3] : memref<128x128xbf16, #tpu.memory_space<vmem>>, vector<128x128xbf16>
    %cst = arith.constant dense<0.000000e+00> : vector<256x128xf32>
    %3 = tpu.matmul %1, %2, %cst {dimension_numbers = #tpu.dot_dimension_numbers<[1], [0], [0], [1], [0, 0, 1, 1], [], []>} : vector<256x128xbf16>, vector<128x128xbf16>, vector<256x128xf32> -> vector<256x128xf32>
    %c0_4 = arith.constant 0 : index
    %c0_5 = arith.constant 0 : index
    %4 = vector.load %arg3[%c0_4, %c0_5] : memref<1x128xf32, #tpu.memory_space<vmem>>, vector<1x128xf32>
    %5 = vector.broadcast %4 : vector<1x128xf32> to vector<256x128xf32>
    %6 = arith.addf %3, %5 : vector<256x128xf32>
    %cst_6 = arith.constant 0.000000e+00 : f32
    %7 = vector.broadcast %cst_6 : f32 to vector<256x128xf32>
    %8 = arith.maximumf %6, %7 : vector<256x128xf32>
    %9 = arith.truncf %8 : vector<256x128xf32> to vector<256x128xbf16>
    %cst_7 = arith.constant 0.000000e+00 : bf16
    %10 = vector.broadcast %cst_7 : bf16 to vector<1x19x18x128xbf16>
    %c0_8 = arith.constant 0 : index
    %c0_9 = arith.constant 0 : index
    %c0_10 = arith.constant 0 : index
    %c0_11 = arith.constant 0 : index
    %11 = vector.load %arg4[%c0_8, %c0_9, %c0_10, %c0_11] : memref<1x19x18x128xbf16, #tpu.memory_space<vmem>>, vector<1x19x18x128xbf16>
    tpu.vector_store %arg4[%c0_8, %c0_9, %c0_10, %c0_11], %10 {strides = array<i32>} : memref<1x19x18x128xbf16, #tpu.memory_space<vmem>>, vector<1x19x18x128xbf16>,
    %12 = vector.extract_strided_slice %9 {offsets = [0, 0], sizes = [16, 128], strides = [1, 1]} : vector<256x128xbf16> to vector<16x128xbf16>
    %c0_12 = arith.constant 0 : index
    %c1 = arith.constant 1 : index
    %c1_13 = arith.constant 1 : index
    %c0_14 = arith.constant 0 : index
    %13 = vector.load %arg4[%c0_12, %c1, %c1_13, %c0_14] : memref<1x19x18x128xbf16, #tpu.memory_space<vmem>>, vector<1x1x16x128xbf16>
    %14 = vector.shape_cast %13 : vector<1x1x16x128xbf16> to vector<16x128xbf16>
    %15 = vector.shape_cast %12 : vector<16x128xbf16> to vector<1x1x16x128xbf16>
    tpu.vector_store %arg4[%c0_12, %c1, %c1_13, %c0_14], %15 {strides = array<i32>} : memref<1x19x18x128xbf16, #tpu.memory_space<vmem>>, vector<1x1x16x128xbf16>,
    %16 = vector.extract_strided_slice %9 {offsets = [16, 0], sizes = [16, 128], strides = [1, 1]} : vector<256x128xbf16> to vector<16x128xbf16>
    %c0_15 = arith.constant 0 : index
    %c2 = arith.constant 2 : index
    %c1_16 = arith.constant 1 : index
    %c0_17 = arith.constant 0 : index
    %17 = vector.load %arg4[%c0_15, %c2, %c1_16, %c0_17] : memref<1x19x18x128xbf16, #tpu.memory_space<vmem>>, vector<1x1x16x128xbf16>
    %18 = vector.shape_cast %17 : vector<1x1x16x128xbf16> to vector<16x128xbf16>
    %19 = vector.shape_cast %16 : vector<16x128xbf16> to vector<1x1x16x128xbf16>
    tpu.vector_store %arg4[%c0_15, %c2, %c1_16, %c0_17], %19 {strides = array<i32>} : memref<1x19x18x128xbf16, #tpu.memory_space<vmem>>, vector<1x1x16x128xbf16>,
    %20 = vector.extract_strided_slice %9 {offsets = [32, 0], sizes = [16, 128], strides = [1, 1]} : vector<256x128xbf16> to vector<16x128xbf16>
    %c0_18 = arith.constant 0 : index
    %c3 = arith.constant 3 : index
    %c1_19 = arith.constant 1 : index
    %c0_20 = arith.constant 0 : index
    %21 = vector.load %arg4[%c0_18, %c3, %c1_19, %c0_20] : memref<1x19x18x128xbf16, #tpu.memory_space<vmem>>, vector<1x1x16x128xbf16>
    %22 = vector.shape_cast %21 : vector<1x1x16x128xbf16> to vector<16x128xbf16>
    %23 = vector.shape_cast %20 : vector<16x128xbf16> to vector<1x1x16x128xbf16>
    tpu.vector_store %arg4[%c0_18, %c3, %c1_19, %c0_20], %23 {strides = array<i32>} : memref<1x19x18x128xbf16, #tpu.memory_space<vmem>>, vector<1x1x16x128xbf16>,
    %24 = vector.extract_strided_slice %9 {offsets = [48, 0], sizes = [16, 128], strides = [1, 1]} : vector<256x128xbf16> to vector<16x128xbf16>
    %c0_21 = arith.constant 0 : index
    %c4 = arith.constant 4 : index
    %c1_22 = arith.constant 1 : index
    %c0_23 = arith.constant 0 : index
    %25 = vector.load %arg4[%c0_21, %c4, %c1_22, %c0_23] : memref<1x19x18x128xbf16, #tpu.memory_space<vmem>>, vector<1x1x16x128xbf16>
    %26 = vector.shape_cast %25 : vector<1x1x16x128xbf16> to vector<16x128xbf16>
    %27 = vector.shape_cast %24 : vector<16x128xbf16> to vector<1x1x16x128xbf16>
    tpu.vector_store %arg4[%c0_21, %c4, %c1_22, %c0_23], %27 {strides = array<i32>} : memref<1x19x18x128xbf16, #tpu.memory_space<vmem>>, vector<1x1x16x128xbf16>,
    %28 = vector.extract_strided_slice %9 {offsets = [64, 0], sizes = [16, 128], strides = [1, 1]} : vector<256x128xbf16> to vector<16x128xbf16>
    %c0_24 = arith.constant 0 : index
    %c5 = arith.constant 5 : index
    %c1_25 = arith.constant 1 : index
    %c0_26 = arith.constant 0 : index
    %29 = vector.load %arg4[%c0_24, %c5, %c1_25, %c0_26] : memref<1x19x18x128xbf16, #tpu.memory_space<vmem>>, vector<1x1x16x128xbf16>
    %30 = vector.shape_cast %29 : vector<1x1x16x128xbf16> to vector<16x128xbf16>
    %31 = vector.shape_cast %28 : vector<16x128xbf16> to vector<1x1x16x128xbf16>
    tpu.vector_store %arg4[%c0_24, %c5, %c1_25, %c0_26], %31 {strides = array<i32>} : memref<1x19x18x128xbf16, #tpu.memory_space<vmem>>, vector<1x1x16x128xbf16>,
    %32 = vector.extract_strided_slice %9 {offsets = [80, 0], sizes = [16, 128], strides = [1, 1]} : vector<256x128xbf16> to vector<16x128xbf16>
    %c0_27 = arith.constant 0 : index
    %c6 = arith.constant 6 : index
    %c1_28 = arith.constant 1 : index
    %c0_29 = arith.constant 0 : index
    %33 = vector.load %arg4[%c0_27, %c6, %c1_28, %c0_29] : memref<1x19x18x128xbf16, #tpu.memory_space<vmem>>, vector<1x1x16x128xbf16>
    %34 = vector.shape_cast %33 : vector<1x1x16x128xbf16> to vector<16x128xbf16>
    %35 = vector.shape_cast %32 : vector<16x128xbf16> to vector<1x1x16x128xbf16>
    tpu.vector_store %arg4[%c0_27, %c6, %c1_28, %c0_29], %35 {strides = array<i32>} : memref<1x19x18x128xbf16, #tpu.memory_space<vmem>>, vector<1x1x16x128xbf16>,
    %36 = vector.extract_strided_slice %9 {offsets = [96, 0], sizes = [16, 128], strides = [1, 1]} : vector<256x128xbf16> to vector<16x128xbf16>
    %c0_30 = arith.constant 0 : index
    %c7 = arith.constant 7 : index
    %c1_31 = arith.constant 1 : index
    %c0_32 = arith.constant 0 : index
    %37 = vector.load %arg4[%c0_30, %c7, %c1_31, %c0_32] : memref<1x19x18x128xbf16, #tpu.memory_space<vmem>>, vector<1x1x16x128xbf16>
    %38 = vector.shape_cast %37 : vector<1x1x16x128xbf16> to vector<16x128xbf16>
    %39 = vector.shape_cast %36 : vector<16x128xbf16> to vector<1x1x16x128xbf16>
    tpu.vector_store %arg4[%c0_30, %c7, %c1_31, %c0_32], %39 {strides = array<i32>} : memref<1x19x18x128xbf16, #tpu.memory_space<vmem>>, vector<1x1x16x128xbf16>,
    %40 = vector.extract_strided_slice %9 {offsets = [112, 0], sizes = [16, 128], strides = [1, 1]} : vector<256x128xbf16> to vector<16x128xbf16>
    %c0_33 = arith.constant 0 : index
    %c8 = arith.constant 8 : index
    %c1_34 = arith.constant 1 : index
    %c0_35 = arith.constant 0 : index
    %41 = vector.load %arg4[%c0_33, %c8, %c1_34, %c0_35] : memref<1x19x18x128xbf16, #tpu.memory_space<vmem>>, vector<1x1x16x128xbf16>
    %42 = vector.shape_cast %41 : vector<1x1x16x128xbf16> to vector<16x128xbf16>
    %43 = vector.shape_cast %40 : vector<16x128xbf16> to vector<1x1x16x128xbf16>
    tpu.vector_store %arg4[%c0_33, %c8, %c1_34, %c0_35], %43 {strides = array<i32>} : memref<1x19x18x128xbf16, #tpu.memory_space<vmem>>, vector<1x1x16x128xbf16>,
    %44 = vector.extract_strided_slice %9 {offsets = [128, 0], sizes = [16, 128], strides = [1, 1]} : vector<256x128xbf16> to vector<16x128xbf16>
    %c0_36 = arith.constant 0 : index
    %c9 = arith.constant 9 : index
    %c1_37 = arith.constant 1 : index
    %c0_38 = arith.constant 0 : index
    %45 = vector.load %arg4[%c0_36, %c9, %c1_37, %c0_38] : memref<1x19x18x128xbf16, #tpu.memory_space<vmem>>, vector<1x1x16x128xbf16>
    %46 = vector.shape_cast %45 : vector<1x1x16x128xbf16> to vector<16x128xbf16>
    %47 = vector.shape_cast %44 : vector<16x128xbf16> to vector<1x1x16x128xbf16>
    tpu.vector_store %arg4[%c0_36, %c9, %c1_37, %c0_38], %47 {strides = array<i32>} : memref<1x19x18x128xbf16, #tpu.memory_space<vmem>>, vector<1x1x16x128xbf16>,
    %48 = vector.extract_strided_slice %9 {offsets = [144, 0], sizes = [16, 128], strides = [1, 1]} : vector<256x128xbf16> to vector<16x128xbf16>
    %c0_39 = arith.constant 0 : index
    %c10 = arith.constant 10 : index
    %c1_40 = arith.constant 1 : index
    %c0_41 = arith.constant 0 : index
    %49 = vector.load %arg4[%c0_39, %c10, %c1_40, %c0_41] : memref<1x19x18x128xbf16, #tpu.memory_space<vmem>>, vector<1x1x16x128xbf16>
    %50 = vector.shape_cast %49 : vector<1x1x16x128xbf16> to vector<16x128xbf16>
    %51 = vector.shape_cast %48 : vector<16x128xbf16> to vector<1x1x16x128xbf16>
    tpu.vector_store %arg4[%c0_39, %c10, %c1_40, %c0_41], %51 {strides = array<i32>} : memref<1x19x18x128xbf16, #tpu.memory_space<vmem>>, vector<1x1x16x128xbf16>,
    %52 = vector.extract_strided_slice %9 {offsets = [160, 0], sizes = [16, 128], strides = [1, 1]} : vector<256x128xbf16> to vector<16x128xbf16>
    %c0_42 = arith.constant 0 : index
    %c11 = arith.constant 11 : index
    %c1_43 = arith.constant 1 : index
    %c0_44 = arith.constant 0 : index
    %53 = vector.load %arg4[%c0_42, %c11, %c1_43, %c0_44] : memref<1x19x18x128xbf16, #tpu.memory_space<vmem>>, vector<1x1x16x128xbf16>
    %54 = vector.shape_cast %53 : vector<1x1x16x128xbf16> to vector<16x128xbf16>
    %55 = vector.shape_cast %52 : vector<16x128xbf16> to vector<1x1x16x128xbf16>
    tpu.vector_store %arg4[%c0_42, %c11, %c1_43, %c0_44], %55 {strides = array<i32>} : memref<1x19x18x128xbf16, #tpu.memory_space<vmem>>, vector<1x1x16x128xbf16>,
    %56 = vector.extract_strided_slice %9 {offsets = [176, 0], sizes = [16, 128], strides = [1, 1]} : vector<256x128xbf16> to vector<16x128xbf16>
    %c0_45 = arith.constant 0 : index
    %c12 = arith.constant 12 : index
    %c1_46 = arith.constant 1 : index
    %c0_47 = arith.constant 0 : index
    %57 = vector.load %arg4[%c0_45, %c12, %c1_46, %c0_47] : memref<1x19x18x128xbf16, #tpu.memory_space<vmem>>, vector<1x1x16x128xbf16>
    %58 = vector.shape_cast %57 : vector<1x1x16x128xbf16> to vector<16x128xbf16>
    %59 = vector.shape_cast %56 : vector<16x128xbf16> to vector<1x1x16x128xbf16>
    tpu.vector_store %arg4[%c0_45, %c12, %c1_46, %c0_47], %59 {strides = array<i32>} : memref<1x19x18x128xbf16, #tpu.memory_space<vmem>>, vector<1x1x16x128xbf16>,
    %60 = vector.extract_strided_slice %9 {offsets = [192, 0], sizes = [16, 128], strides = [1, 1]} : vector<256x128xbf16> to vector<16x128xbf16>
    %c0_48 = arith.constant 0 : index
    %c13 = arith.constant 13 : index
    %c1_49 = arith.constant 1 : index
    %c0_50 = arith.constant 0 : index
    %61 = vector.load %arg4[%c0_48, %c13, %c1_49, %c0_50] : memref<1x19x18x128xbf16, #tpu.memory_space<vmem>>, vector<1x1x16x128xbf16>
    %62 = vector.shape_cast %61 : vector<1x1x16x128xbf16> to vector<16x128xbf16>
    %63 = vector.shape_cast %60 : vector<16x128xbf16> to vector<1x1x16x128xbf16>
    tpu.vector_store %arg4[%c0_48, %c13, %c1_49, %c0_50], %63 {strides = array<i32>} : memref<1x19x18x128xbf16, #tpu.memory_space<vmem>>, vector<1x1x16x128xbf16>,
    %64 = vector.extract_strided_slice %9 {offsets = [208, 0], sizes = [16, 128], strides = [1, 1]} : vector<256x128xbf16> to vector<16x128xbf16>
    %c0_51 = arith.constant 0 : index
    %c14 = arith.constant 14 : index
    %c1_52 = arith.constant 1 : index
    %c0_53 = arith.constant 0 : index
    %65 = vector.load %arg4[%c0_51, %c14, %c1_52, %c0_53] : memref<1x19x18x128xbf16, #tpu.memory_space<vmem>>, vector<1x1x16x128xbf16>
    %66 = vector.shape_cast %65 : vector<1x1x16x128xbf16> to vector<16x128xbf16>
    %67 = vector.shape_cast %64 : vector<16x128xbf16> to vector<1x1x16x128xbf16>
    tpu.vector_store %arg4[%c0_51, %c14, %c1_52, %c0_53], %67 {strides = array<i32>} : memref<1x19x18x128xbf16, #tpu.memory_space<vmem>>, vector<1x1x16x128xbf16>,
    %68 = vector.extract_strided_slice %9 {offsets = [224, 0], sizes = [16, 128], strides = [1, 1]} : vector<256x128xbf16> to vector<16x128xbf16>
    %c0_54 = arith.constant 0 : index
    %c15 = arith.constant 15 : index
    %c1_55 = arith.constant 1 : index
    %c0_56 = arith.constant 0 : index
    %69 = vector.load %arg4[%c0_54, %c15, %c1_55, %c0_56] : memref<1x19x18x128xbf16, #tpu.memory_space<vmem>>, vector<1x1x16x128xbf16>
    %70 = vector.shape_cast %69 : vector<1x1x16x128xbf16> to vector<16x128xbf16>
    %71 = vector.shape_cast %68 : vector<16x128xbf16> to vector<1x1x16x128xbf16>
    tpu.vector_store %arg4[%c0_54, %c15, %c1_55, %c0_56], %71 {strides = array<i32>} : memref<1x19x18x128xbf16, #tpu.memory_space<vmem>>, vector<1x1x16x128xbf16>,
    %72 = vector.extract_strided_slice %9 {offsets = [240, 0], sizes = [16, 128], strides = [1, 1]} : vector<256x128xbf16> to vector<16x128xbf16>
    %c0_57 = arith.constant 0 : index
    %c16 = arith.constant 16 : index
    %c1_58 = arith.constant 1 : index
    %c0_59 = arith.constant 0 : index
    %73 = vector.load %arg4[%c0_57, %c16, %c1_58, %c0_59] : memref<1x19x18x128xbf16, #tpu.memory_space<vmem>>, vector<1x1x16x128xbf16>
    %74 = vector.shape_cast %73 : vector<1x1x16x128xbf16> to vector<16x128xbf16>
    %75 = vector.shape_cast %72 : vector<16x128xbf16> to vector<1x1x16x128xbf16>
    tpu.vector_store %arg4[%c0_57, %c16, %c1_58, %c0_59], %75 {strides = array<i32>} : memref<1x19x18x128xbf16, #tpu.memory_space<vmem>>, vector<1x1x16x128xbf16>,
    return
  }
  func.func @transform_0(%arg0: i32) -> (i32, i32, i32) {
    %c0_i32 = arith.constant 0 : i32
    %c0_i32_0 = arith.constant 0 : i32
    %c0_i32_1 = arith.constant 0 : i32
    return %arg0, %c0_i32, %c0_i32_0 : i32, i32, i32
  }
  func.func @transform_1(%arg0: i32) -> (i32, i32) {
    %c0_i32 = arith.constant 0 : i32
    %c0_i32_0 = arith.constant 0 : i32
    %c0_i32_1 = arith.constant 0 : i32
    return %c0_i32, %c0_i32_0 : i32, i32
  }
  func.func @transform_2(%arg0: i32) -> (i32, i32) {
    %c0_i32 = arith.constant 0 : i32
    %c0_i32_0 = arith.constant 0 : i32
    %c0_i32_1 = arith.constant 0 : i32
    return %c0_i32, %c0_i32_0 : i32, i32
  }
  func.func @transform_3(%arg0: i32) -> (i32, i32, i32, i32) {
    %c0_i32 = arith.constant 0 : i32
    %c0_i32_0 = arith.constant 0 : i32
    %c0_i32_1 = arith.constant 0 : i32
    %c0_i32_2 = arith.constant 0 : i32
    return %arg0, %c0_i32, %c0_i32_0, %c0_i32_1 : i32, i32, i32, i32
  }
}

module attributes {stable_mosaic.version = 11 : i64} {
  func.func @_conv3x3_bn_relu_kernel(%arg0: i32, %arg1: i32, %arg2: i32, %arg3: memref<1x342x128xbf16, #tpu.memory_space<vmem>>, %arg4: memref<9x128x128xbf16, #tpu.memory_space<vmem>>, %arg5: memref<1x128xf32, #tpu.memory_space<vmem>>, %arg6: memref<1x16x16x128xbf16, #tpu.memory_space<vmem>>, %arg7: memref<288x128xf32, #tpu.memory_space<vmem>>) attributes {dimension_semantics = [#tpu.dimension_semantics<parallel>, #tpu.dimension_semantics<parallel>, #tpu.dimension_semantics<arbitrary>], iteration_bounds = array<i64: 2, 1, 1>, scalar_prefetch = 0 : i64, scratch_operands = 1 : i64, tpu.core_type = #tpu.core_type<tc>, window_params = [{transform_indices = @transform_0, window_bounds = array<i64: 1, 342, 128>}, {transform_indices = @transform_1, window_bounds = array<i64: 9, 128, 128>}, {transform_indices = @transform_2, window_bounds = array<i64: 1, 128>}, {transform_indices = @transform_3, window_bounds = array<i64: 1, 16, 16, 128>}]} {
    %c0_i32 = arith.constant 0 : i32
    %0 = arith.cmpi eq, %arg2, %c0_i32 : i32
    %1 = arith.extui %0 : i1 to i32
    %c0_i32_0 = arith.constant 0 : i32
    %2 = arith.cmpi ne, %1, %c0_i32_0 : i32
    scf.if %2 {
      %cst_54 = arith.constant 0.000000e+00 : f32
      %62 = vector.broadcast %cst_54 : f32 to vector<288x128xf32>
      %c0_55 = arith.constant 0 : index
      %c0_56 = arith.constant 0 : index
      %63 = vector.load %arg7[%c0_55, %c0_56] : memref<288x128xf32, #tpu.memory_space<vmem>>, vector<288x128xf32>
      tpu.vector_store %arg7[%c0_55, %c0_56], %62 {strides = array<i32>} : memref<288x128xf32, #tpu.memory_space<vmem>>, vector<288x128xf32>,
    } else {
    }
    %c0 = arith.constant 0 : index
    %c0_1 = arith.constant 0 : index
    %c0_2 = arith.constant 0 : index
    %3 = vector.load %arg3[%c0, %c0_1, %c0_2] : memref<1x342x128xbf16, #tpu.memory_space<vmem>>, vector<1x288x128xbf16>
    %4 = vector.shape_cast %3 : vector<1x288x128xbf16> to vector<288x128xbf16>
    %c0_3 = arith.constant 0 : index
    %c0_4 = arith.constant 0 : index
    %c0_5 = arith.constant 0 : index
    %5 = vector.load %arg4[%c0_3, %c0_4, %c0_5] : memref<9x128x128xbf16, #tpu.memory_space<vmem>>, vector<1x128x128xbf16>
    %6 = vector.shape_cast %5 : vector<1x128x128xbf16> to vector<128x128xbf16>
    %cst = arith.constant dense<0.000000e+00> : vector<288x128xf32>
    %7 = tpu.matmul %4, %6, %cst {dimension_numbers = #tpu.dot_dimension_numbers<[1], [0], [0], [1], [0, 0, 1, 1], [], []>} : vector<288x128xbf16>, vector<128x128xbf16>, vector<288x128xf32> -> vector<288x128xf32>
    %c0_6 = arith.constant 0 : index
    %c1 = arith.constant 1 : index
    %c0_7 = arith.constant 0 : index
    %8 = vector.load %arg3[%c0_6, %c1, %c0_7] : memref<1x342x128xbf16, #tpu.memory_space<vmem>>, vector<1x288x128xbf16>
    %9 = vector.shape_cast %8 : vector<1x288x128xbf16> to vector<288x128xbf16>
    %c1_8 = arith.constant 1 : index
    %c0_9 = arith.constant 0 : index
    %c0_10 = arith.constant 0 : index
    %10 = vector.load %arg4[%c1_8, %c0_9, %c0_10] : memref<9x128x128xbf16, #tpu.memory_space<vmem>>, vector<1x128x128xbf16>
    %11 = vector.shape_cast %10 : vector<1x128x128xbf16> to vector<128x128xbf16>
    %cst_11 = arith.constant dense<0.000000e+00> : vector<288x128xf32>
    %12 = tpu.matmul %9, %11, %cst_11 {dimension_numbers = #tpu.dot_dimension_numbers<[1], [0], [0], [1], [0, 0, 1, 1], [], []>} : vector<288x128xbf16>, vector<128x128xbf16>, vector<288x128xf32> -> vector<288x128xf32>
    %13 = arith.addf %7, %12 : vector<288x128xf32>
    %c0_12 = arith.constant 0 : index
    %c2 = arith.constant 2 : index
    %c0_13 = arith.constant 0 : index
    %14 = vector.load %arg3[%c0_12, %c2, %c0_13] : memref<1x342x128xbf16, #tpu.memory_space<vmem>>, vector<1x288x128xbf16>
    %15 = vector.shape_cast %14 : vector<1x288x128xbf16> to vector<288x128xbf16>
    %c2_14 = arith.constant 2 : index
    %c0_15 = arith.constant 0 : index
    %c0_16 = arith.constant 0 : index
    %16 = vector.load %arg4[%c2_14, %c0_15, %c0_16] : memref<9x128x128xbf16, #tpu.memory_space<vmem>>, vector<1x128x128xbf16>
    %17 = vector.shape_cast %16 : vector<1x128x128xbf16> to vector<128x128xbf16>
    %cst_17 = arith.constant dense<0.000000e+00> : vector<288x128xf32>
    %18 = tpu.matmul %15, %17, %cst_17 {dimension_numbers = #tpu.dot_dimension_numbers<[1], [0], [0], [1], [0, 0, 1, 1], [], []>} : vector<288x128xbf16>, vector<128x128xbf16>, vector<288x128xf32> -> vector<288x128xf32>
    %19 = arith.addf %13, %18 : vector<288x128xf32>
    %c0_18 = arith.constant 0 : index
    %c18 = arith.constant 18 : index
    %c0_19 = arith.constant 0 : index
    %20 = vector.load %arg3[%c0_18, %c18, %c0_19] : memref<1x342x128xbf16, #tpu.memory_space<vmem>>, vector<1x288x128xbf16>
    %21 = vector.shape_cast %20 : vector<1x288x128xbf16> to vector<288x128xbf16>
    %c3 = arith.constant 3 : index
    %c0_20 = arith.constant 0 : index
    %c0_21 = arith.constant 0 : index
    %22 = vector.load %arg4[%c3, %c0_20, %c0_21] : memref<9x128x128xbf16, #tpu.memory_space<vmem>>, vector<1x128x128xbf16>
    %23 = vector.shape_cast %22 : vector<1x128x128xbf16> to vector<128x128xbf16>
    %cst_22 = arith.constant dense<0.000000e+00> : vector<288x128xf32>
    %24 = tpu.matmul %21, %23, %cst_22 {dimension_numbers = #tpu.dot_dimension_numbers<[1], [0], [0], [1], [0, 0, 1, 1], [], []>} : vector<288x128xbf16>, vector<128x128xbf16>, vector<288x128xf32> -> vector<288x128xf32>
    %25 = arith.addf %19, %24 : vector<288x128xf32>
    %c0_23 = arith.constant 0 : index
    %c19 = arith.constant 19 : index
    %c0_24 = arith.constant 0 : index
    %26 = vector.load %arg3[%c0_23, %c19, %c0_24] : memref<1x342x128xbf16, #tpu.memory_space<vmem>>, vector<1x288x128xbf16>
    %27 = vector.shape_cast %26 : vector<1x288x128xbf16> to vector<288x128xbf16>
    %c4 = arith.constant 4 : index
    %c0_25 = arith.constant 0 : index
    %c0_26 = arith.constant 0 : index
    %28 = vector.load %arg4[%c4, %c0_25, %c0_26] : memref<9x128x128xbf16, #tpu.memory_space<vmem>>, vector<1x128x128xbf16>
    %29 = vector.shape_cast %28 : vector<1x128x128xbf16> to vector<128x128xbf16>
    %cst_27 = arith.constant dense<0.000000e+00> : vector<288x128xf32>
    %30 = tpu.matmul %27, %29, %cst_27 {dimension_numbers = #tpu.dot_dimension_numbers<[1], [0], [0], [1], [0, 0, 1, 1], [], []>} : vector<288x128xbf16>, vector<128x128xbf16>, vector<288x128xf32> -> vector<288x128xf32>
    %31 = arith.addf %25, %30 : vector<288x128xf32>
    %c0_28 = arith.constant 0 : index
    %c20 = arith.constant 20 : index
    %c0_29 = arith.constant 0 : index
    %32 = vector.load %arg3[%c0_28, %c20, %c0_29] : memref<1x342x128xbf16, #tpu.memory_space<vmem>>, vector<1x288x128xbf16>
    %33 = vector.shape_cast %32 : vector<1x288x128xbf16> to vector<288x128xbf16>
    %c5 = arith.constant 5 : index
    %c0_30 = arith.constant 0 : index
    %c0_31 = arith.constant 0 : index
    %34 = vector.load %arg4[%c5, %c0_30, %c0_31] : memref<9x128x128xbf16, #tpu.memory_space<vmem>>, vector<1x128x128xbf16>
    %35 = vector.shape_cast %34 : vector<1x128x128xbf16> to vector<128x128xbf16>
    %cst_32 = arith.constant dense<0.000000e+00> : vector<288x128xf32>
    %36 = tpu.matmul %33, %35, %cst_32 {dimension_numbers = #tpu.dot_dimension_numbers<[1], [0], [0], [1], [0, 0, 1, 1], [], []>} : vector<288x128xbf16>, vector<128x128xbf16>, vector<288x128xf32> -> vector<288x128xf32>
    %37 = arith.addf %31, %36 : vector<288x128xf32>
    %c0_33 = arith.constant 0 : index
    %c36 = arith.constant 36 : index
    %c0_34 = arith.constant 0 : index
    %38 = vector.load %arg3[%c0_33, %c36, %c0_34] : memref<1x342x128xbf16, #tpu.memory_space<vmem>>, vector<1x288x128xbf16>
    %39 = vector.shape_cast %38 : vector<1x288x128xbf16> to vector<288x128xbf16>
    %c6 = arith.constant 6 : index
    %c0_35 = arith.constant 0 : index
    %c0_36 = arith.constant 0 : index
    %40 = vector.load %arg4[%c6, %c0_35, %c0_36] : memref<9x128x128xbf16, #tpu.memory_space<vmem>>, vector<1x128x128xbf16>
    %41 = vector.shape_cast %40 : vector<1x128x128xbf16> to vector<128x128xbf16>
    %cst_37 = arith.constant dense<0.000000e+00> : vector<288x128xf32>
    %42 = tpu.matmul %39, %41, %cst_37 {dimension_numbers = #tpu.dot_dimension_numbers<[1], [0], [0], [1], [0, 0, 1, 1], [], []>} : vector<288x128xbf16>, vector<128x128xbf16>, vector<288x128xf32> -> vector<288x128xf32>
    %43 = arith.addf %37, %42 : vector<288x128xf32>
    %c0_38 = arith.constant 0 : index
    %c37 = arith.constant 37 : index
    %c0_39 = arith.constant 0 : index
    %44 = vector.load %arg3[%c0_38, %c37, %c0_39] : memref<1x342x128xbf16, #tpu.memory_space<vmem>>, vector<1x288x128xbf16>
    %45 = vector.shape_cast %44 : vector<1x288x128xbf16> to vector<288x128xbf16>
    %c7 = arith.constant 7 : index
    %c0_40 = arith.constant 0 : index
    %c0_41 = arith.constant 0 : index
    %46 = vector.load %arg4[%c7, %c0_40, %c0_41] : memref<9x128x128xbf16, #tpu.memory_space<vmem>>, vector<1x128x128xbf16>
    %47 = vector.shape_cast %46 : vector<1x128x128xbf16> to vector<128x128xbf16>
    %cst_42 = arith.constant dense<0.000000e+00> : vector<288x128xf32>
    %48 = tpu.matmul %45, %47, %cst_42 {dimension_numbers = #tpu.dot_dimension_numbers<[1], [0], [0], [1], [0, 0, 1, 1], [], []>} : vector<288x128xbf16>, vector<128x128xbf16>, vector<288x128xf32> -> vector<288x128xf32>
    %49 = arith.addf %43, %48 : vector<288x128xf32>
    %c0_43 = arith.constant 0 : index
    %c38 = arith.constant 38 : index
    %c0_44 = arith.constant 0 : index
    %50 = vector.load %arg3[%c0_43, %c38, %c0_44] : memref<1x342x128xbf16, #tpu.memory_space<vmem>>, vector<1x288x128xbf16>
    %51 = vector.shape_cast %50 : vector<1x288x128xbf16> to vector<288x128xbf16>
    %c8 = arith.constant 8 : index
    %c0_45 = arith.constant 0 : index
    %c0_46 = arith.constant 0 : index
    %52 = vector.load %arg4[%c8, %c0_45, %c0_46] : memref<9x128x128xbf16, #tpu.memory_space<vmem>>, vector<1x128x128xbf16>
    %53 = vector.shape_cast %52 : vector<1x128x128xbf16> to vector<128x128xbf16>
    %cst_47 = arith.constant dense<0.000000e+00> : vector<288x128xf32>
    %54 = tpu.matmul %51, %53, %cst_47 {dimension_numbers = #tpu.dot_dimension_numbers<[1], [0], [0], [1], [0, 0, 1, 1], [], []>} : vector<288x128xbf16>, vector<128x128xbf16>, vector<288x128xf32> -> vector<288x128xf32>
    %55 = arith.addf %49, %54 : vector<288x128xf32>
    %c0_48 = arith.constant 0 : index
    %c0_49 = arith.constant 0 : index
    %56 = vector.load %arg7[%c0_48, %c0_49] : memref<288x128xf32, #tpu.memory_space<vmem>>, vector<288x128xf32>
    %57 = arith.addf %56, %55 : vector<288x128xf32>
    %c0_50 = arith.constant 0 : index
    %c0_51 = arith.constant 0 : index
    %58 = vector.load %arg7[%c0_50, %c0_51] : memref<288x128xf32, #tpu.memory_space<vmem>>, vector<288x128xf32>
    tpu.vector_store %arg7[%c0_50, %c0_51], %57 {strides = array<i32>} : memref<288x128xf32, #tpu.memory_space<vmem>>, vector<288x128xf32>,
    %c0_i32_52 = arith.constant 0 : i32
    %59 = arith.cmpi eq, %arg2, %c0_i32_52 : i32
    %60 = arith.extui %59 : i1 to i32
    %c0_i32_53 = arith.constant 0 : i32
    %61 = arith.cmpi ne, %60, %c0_i32_53 : i32
    scf.if %61 {
      %c0_54 = arith.constant 0 : index
      %c0_55 = arith.constant 0 : index
      %62 = vector.load %arg7[%c0_54, %c0_55] : memref<288x128xf32, #tpu.memory_space<vmem>>, vector<288x128xf32>
      %c0_56 = arith.constant 0 : index
      %c0_57 = arith.constant 0 : index
      %63 = vector.load %arg5[%c0_56, %c0_57] : memref<1x128xf32, #tpu.memory_space<vmem>>, vector<1x128xf32>
      %64 = vector.broadcast %63 : vector<1x128xf32> to vector<288x128xf32>
      %65 = arith.addf %62, %64 : vector<288x128xf32>
      %cst_58 = arith.constant 0.000000e+00 : f32
      %66 = vector.broadcast %cst_58 : f32 to vector<288x128xf32>
      %67 = arith.maximumf %65, %66 : vector<288x128xf32>
      %68 = arith.truncf %67 : vector<288x128xf32> to vector<288x128xbf16>
      %69 = vector.extract_strided_slice %68 {offsets = [0, 0], sizes = [16, 128], strides = [1, 1]} : vector<288x128xbf16> to vector<16x128xbf16>
      %c0_59 = arith.constant 0 : index
      %c0_60 = arith.constant 0 : index
      %c0_61 = arith.constant 0 : index
      %c0_62 = arith.constant 0 : index
      %70 = vector.load %arg6[%c0_59, %c0_60, %c0_61, %c0_62] : memref<1x16x16x128xbf16, #tpu.memory_space<vmem>>, vector<1x1x16x128xbf16>
      %71 = vector.shape_cast %70 : vector<1x1x16x128xbf16> to vector<16x128xbf16>
      %72 = vector.shape_cast %69 : vector<16x128xbf16> to vector<1x1x16x128xbf16>
      tpu.vector_store %arg6[%c0_59, %c0_60, %c0_61, %c0_62], %72 {strides = array<i32>} : memref<1x16x16x128xbf16, #tpu.memory_space<vmem>>, vector<1x1x16x128xbf16>,
      %73 = vector.extract_strided_slice %68 {offsets = [18, 0], sizes = [16, 128], strides = [1, 1]} : vector<288x128xbf16> to vector<16x128xbf16>
      %c0_63 = arith.constant 0 : index
      %c1_64 = arith.constant 1 : index
      %c0_65 = arith.constant 0 : index
      %c0_66 = arith.constant 0 : index
      %74 = vector.load %arg6[%c0_63, %c1_64, %c0_65, %c0_66] : memref<1x16x16x128xbf16, #tpu.memory_space<vmem>>, vector<1x1x16x128xbf16>
      %75 = vector.shape_cast %74 : vector<1x1x16x128xbf16> to vector<16x128xbf16>
      %76 = vector.shape_cast %73 : vector<16x128xbf16> to vector<1x1x16x128xbf16>
      tpu.vector_store %arg6[%c0_63, %c1_64, %c0_65, %c0_66], %76 {strides = array<i32>} : memref<1x16x16x128xbf16, #tpu.memory_space<vmem>>, vector<1x1x16x128xbf16>,
      %77 = vector.extract_strided_slice %68 {offsets = [36, 0], sizes = [16, 128], strides = [1, 1]} : vector<288x128xbf16> to vector<16x128xbf16>
      %c0_67 = arith.constant 0 : index
      %c2_68 = arith.constant 2 : index
      %c0_69 = arith.constant 0 : index
      %c0_70 = arith.constant 0 : index
      %78 = vector.load %arg6[%c0_67, %c2_68, %c0_69, %c0_70] : memref<1x16x16x128xbf16, #tpu.memory_space<vmem>>, vector<1x1x16x128xbf16>
      %79 = vector.shape_cast %78 : vector<1x1x16x128xbf16> to vector<16x128xbf16>
      %80 = vector.shape_cast %77 : vector<16x128xbf16> to vector<1x1x16x128xbf16>
      tpu.vector_store %arg6[%c0_67, %c2_68, %c0_69, %c0_70], %80 {strides = array<i32>} : memref<1x16x16x128xbf16, #tpu.memory_space<vmem>>, vector<1x1x16x128xbf16>,
      %81 = vector.extract_strided_slice %68 {offsets = [54, 0], sizes = [16, 128], strides = [1, 1]} : vector<288x128xbf16> to vector<16x128xbf16>
      %c0_71 = arith.constant 0 : index
      %c3_72 = arith.constant 3 : index
      %c0_73 = arith.constant 0 : index
      %c0_74 = arith.constant 0 : index
      %82 = vector.load %arg6[%c0_71, %c3_72, %c0_73, %c0_74] : memref<1x16x16x128xbf16, #tpu.memory_space<vmem>>, vector<1x1x16x128xbf16>
      %83 = vector.shape_cast %82 : vector<1x1x16x128xbf16> to vector<16x128xbf16>
      %84 = vector.shape_cast %81 : vector<16x128xbf16> to vector<1x1x16x128xbf16>
      tpu.vector_store %arg6[%c0_71, %c3_72, %c0_73, %c0_74], %84 {strides = array<i32>} : memref<1x16x16x128xbf16, #tpu.memory_space<vmem>>, vector<1x1x16x128xbf16>,
      %85 = vector.extract_strided_slice %68 {offsets = [72, 0], sizes = [16, 128], strides = [1, 1]} : vector<288x128xbf16> to vector<16x128xbf16>
      %c0_75 = arith.constant 0 : index
      %c4_76 = arith.constant 4 : index
      %c0_77 = arith.constant 0 : index
      %c0_78 = arith.constant 0 : index
      %86 = vector.load %arg6[%c0_75, %c4_76, %c0_77, %c0_78] : memref<1x16x16x128xbf16, #tpu.memory_space<vmem>>, vector<1x1x16x128xbf16>
      %87 = vector.shape_cast %86 : vector<1x1x16x128xbf16> to vector<16x128xbf16>
      %88 = vector.shape_cast %85 : vector<16x128xbf16> to vector<1x1x16x128xbf16>
      tpu.vector_store %arg6[%c0_75, %c4_76, %c0_77, %c0_78], %88 {strides = array<i32>} : memref<1x16x16x128xbf16, #tpu.memory_space<vmem>>, vector<1x1x16x128xbf16>,
      %89 = vector.extract_strided_slice %68 {offsets = [90, 0], sizes = [16, 128], strides = [1, 1]} : vector<288x128xbf16> to vector<16x128xbf16>
      %c0_79 = arith.constant 0 : index
      %c5_80 = arith.constant 5 : index
      %c0_81 = arith.constant 0 : index
      %c0_82 = arith.constant 0 : index
      %90 = vector.load %arg6[%c0_79, %c5_80, %c0_81, %c0_82] : memref<1x16x16x128xbf16, #tpu.memory_space<vmem>>, vector<1x1x16x128xbf16>
      %91 = vector.shape_cast %90 : vector<1x1x16x128xbf16> to vector<16x128xbf16>
      %92 = vector.shape_cast %89 : vector<16x128xbf16> to vector<1x1x16x128xbf16>
      tpu.vector_store %arg6[%c0_79, %c5_80, %c0_81, %c0_82], %92 {strides = array<i32>} : memref<1x16x16x128xbf16, #tpu.memory_space<vmem>>, vector<1x1x16x128xbf16>,
      %93 = vector.extract_strided_slice %68 {offsets = [108, 0], sizes = [16, 128], strides = [1, 1]} : vector<288x128xbf16> to vector<16x128xbf16>
      %c0_83 = arith.constant 0 : index
      %c6_84 = arith.constant 6 : index
      %c0_85 = arith.constant 0 : index
      %c0_86 = arith.constant 0 : index
      %94 = vector.load %arg6[%c0_83, %c6_84, %c0_85, %c0_86] : memref<1x16x16x128xbf16, #tpu.memory_space<vmem>>, vector<1x1x16x128xbf16>
      %95 = vector.shape_cast %94 : vector<1x1x16x128xbf16> to vector<16x128xbf16>
      %96 = vector.shape_cast %93 : vector<16x128xbf16> to vector<1x1x16x128xbf16>
      tpu.vector_store %arg6[%c0_83, %c6_84, %c0_85, %c0_86], %96 {strides = array<i32>} : memref<1x16x16x128xbf16, #tpu.memory_space<vmem>>, vector<1x1x16x128xbf16>,
      %97 = vector.extract_strided_slice %68 {offsets = [126, 0], sizes = [16, 128], strides = [1, 1]} : vector<288x128xbf16> to vector<16x128xbf16>
      %c0_87 = arith.constant 0 : index
      %c7_88 = arith.constant 7 : index
      %c0_89 = arith.constant 0 : index
      %c0_90 = arith.constant 0 : index
      %98 = vector.load %arg6[%c0_87, %c7_88, %c0_89, %c0_90] : memref<1x16x16x128xbf16, #tpu.memory_space<vmem>>, vector<1x1x16x128xbf16>
      %99 = vector.shape_cast %98 : vector<1x1x16x128xbf16> to vector<16x128xbf16>
      %100 = vector.shape_cast %97 : vector<16x128xbf16> to vector<1x1x16x128xbf16>
      tpu.vector_store %arg6[%c0_87, %c7_88, %c0_89, %c0_90], %100 {strides = array<i32>} : memref<1x16x16x128xbf16, #tpu.memory_space<vmem>>, vector<1x1x16x128xbf16>,
      %101 = vector.extract_strided_slice %68 {offsets = [144, 0], sizes = [16, 128], strides = [1, 1]} : vector<288x128xbf16> to vector<16x128xbf16>
      %c0_91 = arith.constant 0 : index
      %c8_92 = arith.constant 8 : index
      %c0_93 = arith.constant 0 : index
      %c0_94 = arith.constant 0 : index
      %102 = vector.load %arg6[%c0_91, %c8_92, %c0_93, %c0_94] : memref<1x16x16x128xbf16, #tpu.memory_space<vmem>>, vector<1x1x16x128xbf16>
      %103 = vector.shape_cast %102 : vector<1x1x16x128xbf16> to vector<16x128xbf16>
      %104 = vector.shape_cast %101 : vector<16x128xbf16> to vector<1x1x16x128xbf16>
      tpu.vector_store %arg6[%c0_91, %c8_92, %c0_93, %c0_94], %104 {strides = array<i32>} : memref<1x16x16x128xbf16, #tpu.memory_space<vmem>>, vector<1x1x16x128xbf16>,
      %105 = vector.extract_strided_slice %68 {offsets = [162, 0], sizes = [16, 128], strides = [1, 1]} : vector<288x128xbf16> to vector<16x128xbf16>
      %c0_95 = arith.constant 0 : index
      %c9 = arith.constant 9 : index
      %c0_96 = arith.constant 0 : index
      %c0_97 = arith.constant 0 : index
      %106 = vector.load %arg6[%c0_95, %c9, %c0_96, %c0_97] : memref<1x16x16x128xbf16, #tpu.memory_space<vmem>>, vector<1x1x16x128xbf16>
      %107 = vector.shape_cast %106 : vector<1x1x16x128xbf16> to vector<16x128xbf16>
      %108 = vector.shape_cast %105 : vector<16x128xbf16> to vector<1x1x16x128xbf16>
      tpu.vector_store %arg6[%c0_95, %c9, %c0_96, %c0_97], %108 {strides = array<i32>} : memref<1x16x16x128xbf16, #tpu.memory_space<vmem>>, vector<1x1x16x128xbf16>,
      %109 = vector.extract_strided_slice %68 {offsets = [180, 0], sizes = [16, 128], strides = [1, 1]} : vector<288x128xbf16> to vector<16x128xbf16>
      %c0_98 = arith.constant 0 : index
      %c10 = arith.constant 10 : index
      %c0_99 = arith.constant 0 : index
      %c0_100 = arith.constant 0 : index
      %110 = vector.load %arg6[%c0_98, %c10, %c0_99, %c0_100] : memref<1x16x16x128xbf16, #tpu.memory_space<vmem>>, vector<1x1x16x128xbf16>
      %111 = vector.shape_cast %110 : vector<1x1x16x128xbf16> to vector<16x128xbf16>
      %112 = vector.shape_cast %109 : vector<16x128xbf16> to vector<1x1x16x128xbf16>
      tpu.vector_store %arg6[%c0_98, %c10, %c0_99, %c0_100], %112 {strides = array<i32>} : memref<1x16x16x128xbf16, #tpu.memory_space<vmem>>, vector<1x1x16x128xbf16>,
      %113 = vector.extract_strided_slice %68 {offsets = [198, 0], sizes = [16, 128], strides = [1, 1]} : vector<288x128xbf16> to vector<16x128xbf16>
      %c0_101 = arith.constant 0 : index
      %c11 = arith.constant 11 : index
      %c0_102 = arith.constant 0 : index
      %c0_103 = arith.constant 0 : index
      %114 = vector.load %arg6[%c0_101, %c11, %c0_102, %c0_103] : memref<1x16x16x128xbf16, #tpu.memory_space<vmem>>, vector<1x1x16x128xbf16>
      %115 = vector.shape_cast %114 : vector<1x1x16x128xbf16> to vector<16x128xbf16>
      %116 = vector.shape_cast %113 : vector<16x128xbf16> to vector<1x1x16x128xbf16>
      tpu.vector_store %arg6[%c0_101, %c11, %c0_102, %c0_103], %116 {strides = array<i32>} : memref<1x16x16x128xbf16, #tpu.memory_space<vmem>>, vector<1x1x16x128xbf16>,
      %117 = vector.extract_strided_slice %68 {offsets = [216, 0], sizes = [16, 128], strides = [1, 1]} : vector<288x128xbf16> to vector<16x128xbf16>
      %c0_104 = arith.constant 0 : index
      %c12 = arith.constant 12 : index
      %c0_105 = arith.constant 0 : index
      %c0_106 = arith.constant 0 : index
      %118 = vector.load %arg6[%c0_104, %c12, %c0_105, %c0_106] : memref<1x16x16x128xbf16, #tpu.memory_space<vmem>>, vector<1x1x16x128xbf16>
      %119 = vector.shape_cast %118 : vector<1x1x16x128xbf16> to vector<16x128xbf16>
      %120 = vector.shape_cast %117 : vector<16x128xbf16> to vector<1x1x16x128xbf16>
      tpu.vector_store %arg6[%c0_104, %c12, %c0_105, %c0_106], %120 {strides = array<i32>} : memref<1x16x16x128xbf16, #tpu.memory_space<vmem>>, vector<1x1x16x128xbf16>,
      %121 = vector.extract_strided_slice %68 {offsets = [234, 0], sizes = [16, 128], strides = [1, 1]} : vector<288x128xbf16> to vector<16x128xbf16>
      %c0_107 = arith.constant 0 : index
      %c13 = arith.constant 13 : index
      %c0_108 = arith.constant 0 : index
      %c0_109 = arith.constant 0 : index
      %122 = vector.load %arg6[%c0_107, %c13, %c0_108, %c0_109] : memref<1x16x16x128xbf16, #tpu.memory_space<vmem>>, vector<1x1x16x128xbf16>
      %123 = vector.shape_cast %122 : vector<1x1x16x128xbf16> to vector<16x128xbf16>
      %124 = vector.shape_cast %121 : vector<16x128xbf16> to vector<1x1x16x128xbf16>
      tpu.vector_store %arg6[%c0_107, %c13, %c0_108, %c0_109], %124 {strides = array<i32>} : memref<1x16x16x128xbf16, #tpu.memory_space<vmem>>, vector<1x1x16x128xbf16>,
      %125 = vector.extract_strided_slice %68 {offsets = [252, 0], sizes = [16, 128], strides = [1, 1]} : vector<288x128xbf16> to vector<16x128xbf16>
      %c0_110 = arith.constant 0 : index
      %c14 = arith.constant 14 : index
      %c0_111 = arith.constant 0 : index
      %c0_112 = arith.constant 0 : index
      %126 = vector.load %arg6[%c0_110, %c14, %c0_111, %c0_112] : memref<1x16x16x128xbf16, #tpu.memory_space<vmem>>, vector<1x1x16x128xbf16>
      %127 = vector.shape_cast %126 : vector<1x1x16x128xbf16> to vector<16x128xbf16>
      %128 = vector.shape_cast %125 : vector<16x128xbf16> to vector<1x1x16x128xbf16>
      tpu.vector_store %arg6[%c0_110, %c14, %c0_111, %c0_112], %128 {strides = array<i32>} : memref<1x16x16x128xbf16, #tpu.memory_space<vmem>>, vector<1x1x16x128xbf16>,
      %129 = vector.extract_strided_slice %68 {offsets = [270, 0], sizes = [16, 128], strides = [1, 1]} : vector<288x128xbf16> to vector<16x128xbf16>
      %c0_113 = arith.constant 0 : index
      %c15 = arith.constant 15 : index
      %c0_114 = arith.constant 0 : index
      %c0_115 = arith.constant 0 : index
      %130 = vector.load %arg6[%c0_113, %c15, %c0_114, %c0_115] : memref<1x16x16x128xbf16, #tpu.memory_space<vmem>>, vector<1x1x16x128xbf16>
      %131 = vector.shape_cast %130 : vector<1x1x16x128xbf16> to vector<16x128xbf16>
      %132 = vector.shape_cast %129 : vector<16x128xbf16> to vector<1x1x16x128xbf16>
      tpu.vector_store %arg6[%c0_113, %c15, %c0_114, %c0_115], %132 {strides = array<i32>} : memref<1x16x16x128xbf16, #tpu.memory_space<vmem>>, vector<1x1x16x128xbf16>,
    } else {
    }
    return
  }
  func.func @transform_0(%arg0: i32, %arg1: i32, %arg2: i32) -> (i32, i32, i32) {
    %c0_i32 = arith.constant 0 : i32
    %c0_i32_0 = arith.constant 0 : i32
    return %arg0, %c0_i32, %arg2 : i32, i32, i32
  }
  func.func @transform_1(%arg0: i32, %arg1: i32, %arg2: i32) -> (i32, i32, i32) {
    %c0_i32 = arith.constant 0 : i32
    %c0_i32_0 = arith.constant 0 : i32
    return %c0_i32, %arg2, %arg1 : i32, i32, i32
  }
  func.func @transform_2(%arg0: i32, %arg1: i32, %arg2: i32) -> (i32, i32) {
    %c0_i32 = arith.constant 0 : i32
    %c0_i32_0 = arith.constant 0 : i32
    return %c0_i32, %arg1 : i32, i32
  }
  func.func @transform_3(%arg0: i32, %arg1: i32, %arg2: i32) -> (i32, i32, i32, i32) {
    %c0_i32 = arith.constant 0 : i32
    %c0_i32_0 = arith.constant 0 : i32
    %c0_i32_1 = arith.constant 0 : i32
    return %arg0, %c0_i32, %c0_i32_0, %arg1 : i32, i32, i32, i32
  }
}

module attributes {stable_mosaic.version = 11 : i64} {
  func.func @_conv1x1_bn_add_relu_kernel(%arg0: i32, %arg1: memref<512x128xbf16, #tpu.memory_space<vmem>>, %arg2: memref<128x128xbf16, #tpu.memory_space<vmem>>, %arg3: memref<1x128xf32, #tpu.memory_space<vmem>>, %arg4: memref<512x128xbf16, #tpu.memory_space<vmem>>, %arg5: memref<512x128xbf16, #tpu.memory_space<vmem>>) attributes {dimension_semantics = [#tpu.dimension_semantics<parallel>], iteration_bounds = array<i64: 1>, scalar_prefetch = 0 : i64, scratch_operands = 0 : i64, tpu.core_type = #tpu.core_type<tc>, window_params = [{transform_indices = @transform_0, window_bounds = array<i64: 512, 128>}, {pipeline_mode = #tpu.pipeline_mode<synchronous>, transform_indices = @transform_1, window_bounds = array<i64: 128, 128>}, {pipeline_mode = #tpu.pipeline_mode<synchronous>, transform_indices = @transform_2, window_bounds = array<i64: 1, 128>}, {transform_indices = @transform_3, window_bounds = array<i64: 512, 128>}, {transform_indices = @transform_4, window_bounds = array<i64: 512, 128>}]} {
    %c0 = arith.constant 0 : index
    %c0_0 = arith.constant 0 : index
    %0 = vector.load %arg1[%c0, %c0_0] : memref<512x128xbf16, #tpu.memory_space<vmem>>, vector<512x128xbf16>
    %c0_1 = arith.constant 0 : index
    %c0_2 = arith.constant 0 : index
    %1 = vector.load %arg2[%c0_1, %c0_2] : memref<128x128xbf16, #tpu.memory_space<vmem>>, vector<128x128xbf16>
    %cst = arith.constant dense<0.000000e+00> : vector<512x128xf32>
    %2 = tpu.matmul %0, %1, %cst {dimension_numbers = #tpu.dot_dimension_numbers<[1], [0], [0], [1], [0, 0, 1, 1], [], []>} : vector<512x128xbf16>, vector<128x128xbf16>, vector<512x128xf32> -> vector<512x128xf32>
    %c0_3 = arith.constant 0 : index
    %c0_4 = arith.constant 0 : index
    %3 = vector.load %arg3[%c0_3, %c0_4] : memref<1x128xf32, #tpu.memory_space<vmem>>, vector<1x128xf32>
    %4 = vector.broadcast %3 : vector<1x128xf32> to vector<512x128xf32>
    %5 = arith.addf %2, %4 : vector<512x128xf32>
    %c0_5 = arith.constant 0 : index
    %c0_6 = arith.constant 0 : index
    %6 = vector.load %arg4[%c0_5, %c0_6] : memref<512x128xbf16, #tpu.memory_space<vmem>>, vector<512x128xbf16>
    %7 = arith.extf %6 : vector<512x128xbf16> to vector<512x128xf32>
    %8 = arith.addf %5, %7 : vector<512x128xf32>
    %cst_7 = arith.constant 0.000000e+00 : f32
    %9 = vector.broadcast %cst_7 : f32 to vector<512x128xf32>
    %10 = arith.maximumf %8, %9 : vector<512x128xf32>
    %11 = arith.truncf %10 : vector<512x128xf32> to vector<512x128xbf16>
    %c0_8 = arith.constant 0 : index
    %c0_9 = arith.constant 0 : index
    %12 = vector.load %arg5[%c0_8, %c0_9] : memref<512x128xbf16, #tpu.memory_space<vmem>>, vector<512x128xbf16>
    tpu.vector_store %arg5[%c0_8, %c0_9], %11 {strides = array<i32>} : memref<512x128xbf16, #tpu.memory_space<vmem>>, vector<512x128xbf16>,
    return
  }
  func.func @transform_0(%arg0: i32) -> (i32, i32) {
    %c0_i32 = arith.constant 0 : i32
    %c0_i32_0 = arith.constant 0 : i32
    return %arg0, %c0_i32 : i32, i32
  }
  func.func @transform_1(%arg0: i32) -> (i32, i32) {
    %c0_i32 = arith.constant 0 : i32
    %c0_i32_0 = arith.constant 0 : i32
    %c0_i32_1 = arith.constant 0 : i32
    return %c0_i32, %c0_i32_0 : i32, i32
  }
  func.func @transform_2(%arg0: i32) -> (i32, i32) {
    %c0_i32 = arith.constant 0 : i32
    %c0_i32_0 = arith.constant 0 : i32
    %c0_i32_1 = arith.constant 0 : i32
    return %c0_i32, %c0_i32_0 : i32, i32
  }
  func.func @transform_3(%arg0: i32) -> (i32, i32) {
    %c0_i32 = arith.constant 0 : i32
    %c0_i32_0 = arith.constant 0 : i32
    return %arg0, %c0_i32 : i32, i32
  }
  func.func @transform_4(%arg0: i32) -> (i32, i32) {
    %c0_i32 = arith.constant 0 : i32
    %c0_i32_0 = arith.constant 0 : i32
    return %arg0, %c0_i32 : i32, i32
  }
}

</mosaic_0001>

<llo_original>
// kernel: _bottleneck_v1b_forward.3
$region0: #{_bottleneck_v1b_forward.3}
  #allocation0 [shape = 'u32[]', space=smem, size = 0x4, offset = 0x4, fixed_abs, tag = 'smem constant byte address 0x4 - core index']
  #allocation1 [shape = 'u32[72,128]{1,0:T(1,128)}', space=vmem, size = 0x9000, scoped, tag = 'internal scratch']
  %s0 = inlined_call_operand.vmem [shape: bf16[2,256,128], index: 0, kind: input, shape index: {}]
  %s1 = inlined_call_operand.vmem [shape: bf16[128,128], index: 1, kind: input, shape index: {}]
  %s2 = inlined_call_operand.vmem [shape: f32[1,128], index: 2, kind: input, shape index: {}]
  %s3 = inlined_call_operand.vmem [shape: bf16[2,19,18,128], index: 3, kind: output, shape index: {}]
  %s4 = sld [smem:[#allocation0]]
  $region45: #{_bottleneck_v1b_forward.3} parent=0
    _
  %s6 = ssub.s32 1, %s4
  %s7 = scalar_select 0, %s6, %s4
  loop: start=0, step=1, limit=4
  $region2: #{_bottleneck_v1b_forward.3} parent=0 // loop_pre_header
    _
  $region3: #{_bottleneck_v1b_forward.3} parent=0 // loop_header
    %s9 = sphi 0, %s13
    %p10 = scmp.ge.s32.totalorder %s9, 4
    %s19 = sphi 0, %s21
    %s22 = sphi 0, %s19
    %s23 = sphi 0, %s22
    %s39 = sphi 0, %s23
    %s43 = sphi 0, %s43
    %s45 = sphi 0, %s43
    %s46 = sphi 0, %s45
    %s60 = sphi 0, %s46
    %s64 = sphi 0, %s64
    %s66 = sphi 0, %s64
    %s67 = sphi 0, %s66
    %s81 = sphi 0, %s67
    %s87 = sphi 0, %s89
    %s90 = sphi 0, %s87
    %s91 = sphi 0, %s90
    %s107 = sphi 0, %s91
  $region4: #{_bottleneck_v1b_forward.3} parent=0 // loop_header_branch
    %12 = sbr.rel (%p10) target = $region8
  $region5: #{_bottleneck_v1b_forward.3} parent=0 // loop_body
    %s14 = ssub.s32 %s9, 1
    %s15 = ssub.s32 %s9, 2
    %s16 = sadd.s32 %s9, 1
    %s17 = ssub.s32 %s9, %s16
    %p18 = scmp.eq.s32.totalorder %s17, 0
    %s20 = sadd.s32 %s19, 1
    %s21 = scalar_select %p18, %s19, %s20
    %p24 = pneg %p18
    %p25 = scmp.eq.s32.totalorder %s9, 1
    %p26 = por %p24, %p25
    %p27 = scmp.ne.s32.totalorder %s19, %s22
    %p28 = scmp.eq.s32.totalorder %s9, 0
    %p29 = por %p27, %p28
    %p30 = scmp.ne.s32.totalorder %s19, %s22
    %p31 = scmp.eq.s32.totalorder %s14, 1
    %p32 = por %p30, %p31
    %p33 = scmp.ne.s32.totalorder %s22, %s23
    %p34 = scmp.eq.s32.totalorder %s14, 0
    %p35 = por %p33, %p34
    %p36 = scmp.ne.s32.totalorder %s22, %s23
    %p37 = scmp.eq.s32.totalorder %s15, 1
    %p38 = por %p36, %p37
    %p40 = scmp.ne.s32.totalorder %s23, %s39
    %p41 = scmp.eq.s32.totalorder %s15, 0
    %p42 = por %p40, %p41
    %s44 = sadd.s32 %s43, 1
    %p47 = scmp.eq.s32.totalorder %s9, 1
    %p48 = scmp.ne.s32.totalorder %s43, %s45
    %p49 = scmp.eq.s32.totalorder %s9, 0
    %p50 = por %p48, %p49
    %p51 = scmp.ne.s32.totalorder %s43, %s45
    %p52 = scmp.eq.s32.totalorder %s14, 1
    %p53 = por %p51, %p52
    %p54 = scmp.ne.s32.totalorder %s45, %s46
    %p55 = scmp.eq.s32.totalorder %s14, 0
    %p56 = por %p54, %p55
    %p57 = scmp.ne.s32.totalorder %s45, %s46
    %p58 = scmp.eq.s32.totalorder %s15, 1
    %p59 = por %p57, %p58
    %p61 = scmp.ne.s32.totalorder %s46, %s60
    %p62 = scmp.eq.s32.totalorder %s15, 0
    %p63 = por %p61, %p62
    %s65 = sadd.s32 %s64, 1
    %p68 = scmp.eq.s32.totalorder %s9, 1
    %p69 = scmp.ne.s32.totalorder %s64, %s66
    %p70 = scmp.eq.s32.totalorder %s9, 0
    %p71 = por %p69, %p70
    %p72 = scmp.ne.s32.totalorder %s64, %s66
    %p73 = scmp.eq.s32.totalorder %s14, 1
    %p74 = por %p72, %p73
    %p75 = scmp.ne.s32.totalorder %s66, %s67
    %p76 = scmp.eq.s32.totalorder %s14, 0
    %p77 = por %p75, %p76
    %p78 = scmp.ne.s32.totalorder %s66, %s67
    %p79 = scmp.eq.s32.totalorder %s15, 1
    %p80 = por %p78, %p79
    %p82 = scmp.ne.s32.totalorder %s67, %s81
    %p83 = scmp.eq.s32.totalorder %s15, 0
    %p84 = por %p82, %p83
    %s85 = ssub.s32 %s9, %s16
    %p86 = scmp.eq.s32.totalorder %s85, 0
    %s88 = sadd.s32 %s87, 1
    %s89 = scalar_select %p86, %s87, %s88
    %p92 = pneg %p86
    %p93 = scmp.eq.s32.totalorder %s9, 1
    %p94 = por %p92, %p93
    %p95 = scmp.ne.s32.totalorder %s87, %s90
    %p96 = scmp.eq.s32.totalorder %s9, 0
    %p97 = por %p95, %p96
    %p98 = scmp.ne.s32.totalorder %s87, %s90
    %p99 = scmp.eq.s32.totalorder %s14, 1
    %p100 = por %p98, %p99
    %p101 = scmp.ne.s32.totalorder %s90, %s91
    %p102 = scmp.eq.s32.totalorder %s14, 0
    %p103 = por %p101, %p102
    %p104 = scmp.ne.s32.totalorder %s90, %s91
    %p105 = scmp.eq.s32.totalorder %s15, 1
    %p106 = por %p104, %p105
    %p108 = scmp.ne.s32.totalorder %s91, %s107
    %p109 = scmp.eq.s32.totalorder %s15, 0
    %p110 = por %p108, %p109
    %p111 = scmp.le.s32.totalorder 1, %s9
    %p112 = scmp.lt.s32.totalorder %s9, 3
    %p113 = pnand %p111, %p112
    %p114 = pneg %p113
    // Predicated region
    $region9: #{_bottleneck_v1b_forward.3} parent=5 // pred_check
      _
    $region10: #{_bottleneck_v1b_forward.3} parent=5 // pred_check_branch
      %116 = sbr.rel (%p113) target = $region12
    $region11: #{_bottleneck_v1b_forward.3} parent=5 // pred_region
      %s117 = ssub.s32 %s9, 1
      // Predicated region
      $region13: #{_bottleneck_v1b_forward.3} parent=11 // pred_check
        %p118 = pneg %p56
      $region14: #{_bottleneck_v1b_forward.3} parent=11 // pred_check_branch
        %120 = sbr.rel (%p118) target = $region16
      $region15: #{_bottleneck_v1b_forward.3} parent=11 // pred_region
        _
      $region16: #{_bottleneck_v1b_forward.3} parent=11 // pred_fallthru
        _
      // Predicated region
      $region17: #{_bottleneck_v1b_forward.3} parent=11 // pred_check
        %p121 = pneg %p77
      $region18: #{_bottleneck_v1b_forward.3} parent=11 // pred_check_branch
        %123 = sbr.rel (%p121) target = $region20
      $region19: #{_bottleneck_v1b_forward.3} parent=11 // pred_region
        _
      $region20: #{_bottleneck_v1b_forward.3} parent=11 // pred_fallthru
        _
    $region12: #{_bottleneck_v1b_forward.3} parent=5 // pred_fallthru
      _
    %p124 = scmp.lt.s32.totalorder %s9, 2
    // Predicated region
    $region21: #{_bottleneck_v1b_forward.3} parent=5 // pred_check
      %p125 = pneg %p124
    $region22: #{_bottleneck_v1b_forward.3} parent=5 // pred_check_branch
      %127 = sbr.rel (%p125) target = $region24
    $region23: #{_bottleneck_v1b_forward.3} parent=5 // pred_region
      // Predicated region
      $region25: #{_bottleneck_v1b_forward.3} parent=23 // pred_check
        %p128 = pneg %p29
      $region26: #{_bottleneck_v1b_forward.3} parent=23 // pred_check_branch
        %130 = sbr.rel (%p128) target = $region28
      $region27: #{_bottleneck_v1b_forward.3} parent=23 // pred_region
        %p131 = scmp.lt.s32.totalorder %s9, 1
        %s132 = scalar_select %p131, %s9, 1
        %s133 = smul.addr %s132, 32
        %s134 = smul.addr %s133, 4
        %s135 = scalar_lea.vmem %s0, %s134
      $region28: #{_bottleneck_v1b_forward.3} parent=23 // pred_fallthru
        _
    $region24: #{_bottleneck_v1b_forward.3} parent=5 // pred_fallthru
      _
    %p136 = scmp.le.s32.totalorder 1, %s9
    %p137 = scmp.lt.s32.totalorder %s9, 3
    %p138 = pnand %p136, %p137
    %p139 = pneg %p138
    // Predicated region
    $region29: #{_bottleneck_v1b_forward.3} parent=5 // pred_check
      _
    $region30: #{_bottleneck_v1b_forward.3} parent=5 // pred_check_branch
      %141 = sbr.rel (%p138) target = $region32
    $region31: #{_bottleneck_v1b_forward.3} parent=5 // pred_region
      %s142 = ssub.s32 %s9, 1
      %p143 = scmp.lt.s32.totalorder %s14, 1
      %s144 = scalar_select %p143, %s14, 1
      %s145 = smul.addr %s144, 32
      %s146 = smul.addr %s145, 4
      %s147 = scalar_lea.vmem %s0, %s146
      %p148 = pneg %p35
      %p149 = pneg %p32
      %p150 = pneg %p56
      %p151 = pneg %p53
      %p152 = pneg %p77
      %p153 = pneg %p74
      %p154 = pneg %p103
      %p155 = pneg %p100
      %p156 = scmp.lt.s32.totalorder %s14, 1
      %s157 = scalar_select %p156, %s14, 1
      %s158 = smul.addr %s157, 57
      %s159 = smul.addr %s158, 4
      %s160 = scalar_lea.vmem %s3, %s159
      %p161 = scmp.lt.s32.totalorder %s14, 1
      %s162 = scalar_select %p161, %s14, 1
      %s163 = smul.addr %s162, 32
      %s164 = smul.addr %s163, 4
      %s165 = scalar_lea.vmem %s0, %s164
      %p166 = scmp.lt.s32.totalorder %s14, 1
      %s167 = scalar_select %p166, %s14, 1
      %s168 = smul.addr %s167, 57
      %s169 = smul.addr %s168, 4
      %s170 = scalar_lea.vmem %s3, %s169
      %v172 = vld [vmem:[%s165] sm:$0xf]
      %v173 = vld [vmem:[%s165 + $0x4] sm:$0xf]
      %v174 = vld [vmem:[%s165 + $0x8] sm:$0xf]
      %v175 = vld [vmem:[%s165 + $0xc] sm:$0xf]
      %v176 = vld [vmem:[%s165 + $0x10] sm:$0xf]
      %v177 = vld [vmem:[%s165 + $0x14] sm:$0xf]
      %v178 = vld [vmem:[%s165 + $0x18] sm:$0xf]
      %v179 = vld [vmem:[%s165 + $0x1c] sm:$0xf]
      %v180 = vld [vmem:[%s165 + $0x20] sm:$0xf]
      %v181 = vld [vmem:[%s165 + $0x24] sm:$0xf]
      %v182 = vld [vmem:[%s165 + $0x28] sm:$0xf]
      %v183 = vld [vmem:[%s165 + $0x2c] sm:$0xf]
      %v184 = vld [vmem:[%s165 + $0x30] sm:$0xf]
      %v185 = vld [vmem:[%s165 + $0x34] sm:$0xf]
      %v186 = vld [vmem:[%s165 + $0x38] sm:$0xf]
      %v187 = vld [vmem:[%s165 + $0x3c] sm:$0xf]
      %v188 = vld [vmem:[%s165 + $0x40] sm:$0xf]
      %v189 = vld [vmem:[%s165 + $0x44] sm:$0xf]
      %v190 = vld [vmem:[%s165 + $0x48] sm:$0xf]
      %v191 = vld [vmem:[%s165 + $0x4c] sm:$0xf]
      %v192 = vld [vmem:[%s165 + $0x50] sm:$0xf]
      %v193 = vld [vmem:[%s165 + $0x54] sm:$0xf]
      %v194 = vld [vmem:[%s165 + $0x58] sm:$0xf]
      %v195 = vld [vmem:[%s165 + $0x5c] sm:$0xf]
      %v196 = vld [vmem:[%s165 + $0x60] sm:$0xf]
      %v197 = vld [vmem:[%s165 + $0x64] sm:$0xf]
      %v198 = vld [vmem:[%s165 + $0x68] sm:$0xf]
      %v199 = vld [vmem:[%s165 + $0x6c] sm:$0xf]
      %v200 = vld [vmem:[%s165 + $0x70] sm:$0xf]
      %v201 = vld [vmem:[%s165 + $0x74] sm:$0xf]
      %v202 = vld [vmem:[%s165 + $0x78] sm:$0xf]
      %v203 = vld [vmem:[%s165 + $0x7c] sm:$0xf]
      %v204 = vld [vmem:[%s1] sm:$0xf]
      %v205 = vld [vmem:[%s1 + $0x4] sm:$0xf]
      %v206 = vld [vmem:[%s1 + $0x8] sm:$0xf]
      %v207 = vld [vmem:[%s1 + $0xc] sm:$0xf]
      %v208 = vld [vmem:[%s1 + $0x10] sm:$0xf]
      %v209 = vld [vmem:[%s1 + $0x14] sm:$0xf]
      %v210 = vld [vmem:[%s1 + $0x18] sm:$0xf]
      %v211 = vld [vmem:[%s1 + $0x1c] sm:$0xf]
      %v212 = vld [vmem:[%s1 + $0x20] sm:$0xf]
      %v213 = vld [vmem:[%s1 + $0x24] sm:$0xf]
      %v214 = vld [vmem:[%s1 + $0x28] sm:$0xf]
      %v215 = vld [vmem:[%s1 + $0x2c] sm:$0xf]
      %v216 = vld [vmem:[%s1 + $0x30] sm:$0xf]
      %v217 = vld [vmem:[%s1 + $0x34] sm:$0xf]
      %v218 = vld [vmem:[%s1 + $0x38] sm:$0xf]
      %v219 = vld [vmem:[%s1 + $0x3c] sm:$0xf]
      %v220 = vld [vmem:[%s2] sm:$0x1]
      %v222 = vperm.slane %v220, 0
      %v256 = vunpack.c.l.b16 %v172
      %v257 = vunpack.c.l.b16 %v173
      %v258 = vunpack.c.l.b16 %v174
      %v259 = vunpack.c.l.b16 %v175
      %v260 = vunpack.c.l.b16 %v176
      %v261 = vunpack.c.l.b16 %v177
      %v262 = vunpack.c.l.b16 %v178
      %v263 = vunpack.c.l.b16 %v179
      %v264 = vunpack.c.l.b16 %v180
      %v265 = vunpack.c.l.b16 %v181
      %v266 = vunpack.c.l.b16 %v182
      %v267 = vunpack.c.l.b16 %v183
      %v268 = vunpack.c.l.b16 %v184
      %v269 = vunpack.c.l.b16 %v185
      %v270 = vunpack.c.l.b16 %v186
      %v271 = vunpack.c.l.b16 %v187
      %v272 = vunpack.c.l.b16 %v188
      %v273 = vunpack.c.l.b16 %v189
      %v274 = vunpack.c.l.b16 %v190
      %v275 = vunpack.c.l.b16 %v191
      %v276 = vunpack.c.l.b16 %v192
      %v277 = vunpack.c.l.b16 %v193
      %v278 = vunpack.c.l.b16 %v194
      %v279 = vunpack.c.l.b16 %v195
      %v280 = vunpack.c.l.b16 %v196
      %v281 = vunpack.c.l.b16 %v197
      %v282 = vunpack.c.l.b16 %v198
      %v283 = vunpack.c.l.b16 %v199
      %v284 = vunpack.c.l.b16 %v200
      %v285 = vunpack.c.l.b16 %v201
      %v286 = vunpack.c.l.b16 %v202
      %v287 = vunpack.c.l.b16 %v203
      %v288 = vpack.c.b16 %v257, %v256
      %v289 = vpack.c.b16 %v259, %v258
      %v290 = vpack.c.b16 %v261, %v260
      %v291 = vpack.c.b16 %v263, %v262
      %v292 = vpack.c.b16 %v265, %v264
      %v293 = vpack.c.b16 %v267, %v266
      %v294 = vpack.c.b16 %v269, %v268
      %v295 = vpack.c.b16 %v271, %v270
      %v296 = vpack.c.b16 %v273, %v272
      %v297 = vpack.c.b16 %v275, %v274
      %v298 = vpack.c.b16 %v277, %v276
      %v299 = vpack.c.b16 %v279, %v278
      %v300 = vpack.c.b16 %v281, %v280
      %v301 = vpack.c.b16 %v283, %v282
      %v302 = vpack.c.b16 %v285, %v284
      %v303 = vpack.c.b16 %v287, %v286
      %v336 = vunpack.c.l.b16 %v204
      %v337 = vunpack.c.l.b16 %v205
      %v338 = vunpack.c.l.b16 %v206
      %v339 = vunpack.c.l.b16 %v207
      %v340 = vunpack.c.l.b16 %v208
      %v341 = vunpack.c.l.b16 %v209
      %v342 = vunpack.c.l.b16 %v210
      %v343 = vunpack.c.l.b16 %v211
      %v344 = vunpack.c.l.b16 %v212
      %v345 = vunpack.c.l.b16 %v213
      %v346 = vunpack.c.l.b16 %v214
      %v347 = vunpack.c.l.b16 %v215
      %v348 = vunpack.c.l.b16 %v216
      %v349 = vunpack.c.l.b16 %v217
      %v350 = vunpack.c.l.b16 %v218
      %v351 = vunpack.c.l.b16 %v219
      %v352 = vpack.c.b16 %v337, %v336
      %v353 = vpack.c.b16 %v339, %v338
      %v354 = vpack.c.b16 %v341, %v340
      %v355 = vpack.c.b16 %v343, %v342
      %v356 = vpack.c.b16 %v345, %v344
      %v357 = vpack.c.b16 %v347, %v346
      %v358 = vpack.c.b16 %v349, %v348
      %v359 = vpack.c.b16 %v351, %v350
      %368 = vmatpush.bf16.msra.mxu0 %v359
      %369 = vmatpush.bf16.msra.mxu0 %v358
      %370 = vmatpush.bf16.msra.mxu0 %v357
      %371 = vmatpush.bf16.msra.mxu0 %v356
      %372 = vmatpush.bf16.msra.mxu0 %v355
      %373 = vmatpush.bf16.msra.mxu0 %v354
      %374 = vmatpush.bf16.msra.mxu0 %v353
      %375 = vmatpush.bf16.msra.mxu0 %v352
      %376 = vmatmul.bf16.gmra.mxu0 %v288
      %v377 = vpop.f32.mrf.mxu0
      %v378 = vadd.f32 %v222, %v377
      %v379 = vpop.f32.mrf.mxu0
      %v380 = vadd.f32 %v222, %v379
      %381 = vmatmul.bf16.gmra.mxu0 %v289
      %v382 = vpop.f32.mrf.mxu0
      %v383 = vadd.f32 %v222, %v382
      %v384 = vpop.f32.mrf.mxu0
      %v385 = vadd.f32 %v222, %v384
      %386 = vmatmul.bf16.gmra.mxu0 %v290
      %v387 = vpop.f32.mrf.mxu0
      %v388 = vadd.f32 %v222, %v387
      %v389 = vpop.f32.mrf.mxu0
      %v390 = vadd.f32 %v222, %v389
      %391 = vmatmul.bf16.gmra.mxu0 %v291
      %v392 = vpop.f32.mrf.mxu0
      %v393 = vadd.f32 %v222, %v392
      %v394 = vpop.f32.mrf.mxu0
      %v395 = vadd.f32 %v222, %v394
      %396 = vmatmul.bf16.gmra.mxu0 %v292
      %v397 = vpop.f32.mrf.mxu0
      %v398 = vadd.f32 %v222, %v397
      %v399 = vpop.f32.mrf.mxu0
      %v400 = vadd.f32 %v222, %v399
      %401 = vmatmul.bf16.gmra.mxu0 %v293
      %v402 = vpop.f32.mrf.mxu0
      %v403 = vadd.f32 %v222, %v402
      %v404 = vpop.f32.mrf.mxu0
      %v405 = vadd.f32 %v222, %v404
      %406 = vmatmul.bf16.gmra.mxu0 %v294
      %v407 = vpop.f32.mrf.mxu0
      %v408 = vadd.f32 %v222, %v407
      %v409 = vpop.f32.mrf.mxu0
      %v410 = vadd.f32 %v222, %v409
      %411 = vmatmul.bf16.gmra.mxu0 %v295
      %v412 = vpop.f32.mrf.mxu0
      %v413 = vadd.f32 %v222, %v412
      %v414 = vpop.f32.mrf.mxu0
      %v415 = vadd.f32 %v222, %v414
      %416 = vmatmul.bf16.gmra.mxu0 %v296
      %v417 = vpop.f32.mrf.mxu0
      %v418 = vadd.f32 %v222, %v417
      %v419 = vpop.f32.mrf.mxu0
      %v420 = vadd.f32 %v222, %v419
      %421 = vmatmul.bf16.gmra.mxu0 %v297
      %v422 = vpop.f32.mrf.mxu0
      %v423 = vadd.f32 %v222, %v422
      %v424 = vpop.f32.mrf.mxu0
      %v425 = vadd.f32 %v222, %v424
      %426 = vmatmul.bf16.gmra.mxu0 %v298
      %v427 = vpop.f32.mrf.mxu0
      %v428 = vadd.f32 %v222, %v427
      %v429 = vpop.f32.mrf.mxu0
      %v430 = vadd.f32 %v222, %v429
      %431 = vmatmul.bf16.gmra.mxu0 %v299
      %v432 = vpop.f32.mrf.mxu0
      %v433 = vadd.f32 %v222, %v432
      %v434 = vpop.f32.mrf.mxu0
      %v435 = vadd.f32 %v222, %v434
      %436 = vmatmul.bf16.gmra.mxu0 %v300
      %v437 = vpop.f32.mrf.mxu0
      %v438 = vadd.f32 %v222, %v437
      %v439 = vpop.f32.mrf.mxu0
      %v440 = vadd.f32 %v222, %v439
      %441 = vmatmul.bf16.gmra.mxu0 %v301
      %v442 = vpop.f32.mrf.mxu0
      %v443 = vadd.f32 %v222, %v442
      %v444 = vpop.f32.mrf.mxu0
      %v445 = vadd.f32 %v222, %v444
      %446 = vmatmul.bf16.gmra.mxu0 %v302
      %v447 = vpop.f32.mrf.mxu0
      %v448 = vadd.f32 %v222, %v447
      %v449 = vpop.f32.mrf.mxu0
      %v450 = vadd.f32 %v222, %v449
      %451 = vmatmul.bf16.gmra.mxu0 %v303
      %v452 = vpop.f32.mrf.mxu0
      %v453 = vadd.f32 %v222, %v452
      %v454 = vpop.f32.mrf.mxu0
      %v455 = vadd.f32 %v222, %v454
      %456 = vdwg.mxu0
      %v457 = vmax.f32 %v378, 0.0
      %v458 = vmax.f32 %v380, 0.0
      %v459 = vmax.f32 %v383, 0.0
      %v460 = vmax.f32 %v385, 0.0
      %v461 = vmax.f32 %v388, 0.0
      %v462 = vmax.f32 %v390, 0.0
      %v463 = vmax.f32 %v393, 0.0
      %v464 = vmax.f32 %v395, 0.0
      %v465 = vmax.f32 %v398, 0.0
      %v466 = vmax.f32 %v400, 0.0
      %v467 = vmax.f32 %v403, 0.0
      %v468 = vmax.f32 %v405, 0.0
      %v469 = vmax.f32 %v408, 0.0
      %v470 = vmax.f32 %v410, 0.0
      %v471 = vmax.f32 %v413, 0.0
      %v472 = vmax.f32 %v415, 0.0
      %v473 = vmax.f32 %v418, 0.0
      %v474 = vmax.f32 %v420, 0.0
      %v475 = vmax.f32 %v423, 0.0
      %v476 = vmax.f32 %v425, 0.0
      %v477 = vmax.f32 %v428, 0.0
      %v478 = vmax.f32 %v430, 0.0
      %v479 = vmax.f32 %v433, 0.0
      %v480 = vmax.f32 %v435, 0.0
      %v481 = vmax.f32 %v438, 0.0
      %v482 = vmax.f32 %v440, 0.0
      %v483 = vmax.f32 %v443, 0.0
      %v484 = vmax.f32 %v445, 0.0
      %v485 = vmax.f32 %v448, 0.0
      %v486 = vmax.f32 %v450, 0.0
      %v487 = vmax.f32 %v453, 0.0
      %v488 = vmax.f32 %v455, 0.0
      %v489 = vpack.c.bf16 %v457, %v457
      %v490 = vpack.c.bf16 %v458, %v458
      %v491 = vpack.c.bf16 %v459, %v459
      %v492 = vpack.c.bf16 %v460, %v460
      %v493 = vpack.c.bf16 %v461, %v461
      %v494 = vpack.c.bf16 %v462, %v462
      %v495 = vpack.c.bf16 %v463, %v463
      %v496 = vpack.c.bf16 %v464, %v464
      %v497 = vpack.c.bf16 %v465, %v465
      %v498 = vpack.c.bf16 %v466, %v466
      %v499 = vpack.c.bf16 %v467, %v467
      %v500 = vpack.c.bf16 %v468, %v468
      %v501 = vpack.c.bf16 %v469, %v469
      %v502 = vpack.c.bf16 %v470, %v470
      %v503 = vpack.c.bf16 %v471, %v471
      %v504 = vpack.c.bf16 %v472, %v472
      %v505 = vpack.c.bf16 %v473, %v473
      %v506 = vpack.c.bf16 %v474, %v474
      %v507 = vpack.c.bf16 %v475, %v475
      %v508 = vpack.c.bf16 %v476, %v476
      %v509 = vpack.c.bf16 %v477, %v477
      %v510 = vpack.c.bf16 %v478, %v478
      %v511 = vpack.c.bf16 %v479, %v479
      %v512 = vpack.c.bf16 %v480, %v480
      %v513 = vpack.c.bf16 %v481, %v481
      %v514 = vpack.c.bf16 %v482, %v482
      %v515 = vpack.c.bf16 %v483, %v483
      %v516 = vpack.c.bf16 %v484, %v484
      %v517 = vpack.c.bf16 %v485, %v485
      %v518 = vpack.c.bf16 %v486, %v486
      %v519 = vpack.c.bf16 %v487, %v487
      %v520 = vpack.c.bf16 %v488, %v488
      %521 = vst [vmem:[%s170] sm:$0xf] 0
      %522 = vst [vmem:[%s170 + $0x4] sm:$0xf] 0
      %523 = vst [vmem:[%s170 + $0x8] sm:$0x1] 0
      %524 = vst [vmem:[%s170 + $0xc] sm:$0xf] 0
      %525 = vst [vmem:[%s170 + $0x10] sm:$0xf] 0
      %526 = vst [vmem:[%s170 + $0x14] sm:$0x1] 0
      %527 = vst [vmem:[%s170 + $0x18] sm:$0xf] 0
      %528 = vst [vmem:[%s170 + $0x1c] sm:$0xf] 0
      %529 = vst [vmem:[%s170 + $0x20] sm:$0x1] 0
      %530 = vst [vmem:[%s170 + $0x24] sm:$0xf] 0
      %531 = vst [vmem:[%s170 + $0x28] sm:$0xf] 0
      %532 = vst [vmem:[%s170 + $0x2c] sm:$0x1] 0
      %533 = vst [vmem:[%s170 + $0x30] sm:$0xf] 0
      %534 = vst [vmem:[%s170 + $0x34] sm:$0xf] 0
      %535 = vst [vmem:[%s170 + $0x38] sm:$0x1] 0
      %536 = vst [vmem:[%s170 + $0x3c] sm:$0xf] 0
      %537 = vst [vmem:[%s170 + $0x40] sm:$0xf] 0
      %538 = vst [vmem:[%s170 + $0x44] sm:$0x1] 0
      %539 = vst [vmem:[%s170 + $0x48] sm:$0xf] 0
      %540 = vst [vmem:[%s170 + $0x4c] sm:$0xf] 0
      %541 = vst [vmem:[%s170 + $0x50] sm:$0x1] 0
      %542 = vst [vmem:[%s170 + $0x54] sm:$0xf] 0
      %543 = vst [vmem:[%s170 + $0x58] sm:$0xf] 0
      %544 = vst [vmem:[%s170 + $0x5c] sm:$0x1] 0
      %545 = vst [vmem:[%s170 + $0x60] sm:$0xf] 0
      %546 = vst [vmem:[%s170 + $0x64] sm:$0xf] 0
      %547 = vst [vmem:[%s170 + $0x68] sm:$0x1] 0
      %548 = vst [vmem:[%s170 + $0x6c] sm:$0xf] 0
      %549 = vst [vmem:[%s170 + $0x70] sm:$0xf] 0
      %550 = vst [vmem:[%s170 + $0x74] sm:$0x1] 0
      %551 = vst [vmem:[%s170 + $0x78] sm:$0xf] 0
      %552 = vst [vmem:[%s170 + $0x7c] sm:$0xf] 0
      %553 = vst [vmem:[%s170 + $0x80] sm:$0x1] 0
      %554 = vst [vmem:[%s170 + $0x84] sm:$0xf] 0
      %555 = vst [vmem:[%s170 + $0x88] sm:$0xf] 0
      %556 = vst [vmem:[%s170 + $0x8c] sm:$0x1] 0
      %557 = vst [vmem:[%s170 + $0x90] sm:$0xf] 0
      %558 = vst [vmem:[%s170 + $0x94] sm:$0xf] 0
      %559 = vst [vmem:[%s170 + $0x98] sm:$0x1] 0
      %560 = vst [vmem:[%s170 + $0x9c] sm:$0xf] 0
      %561 = vst [vmem:[%s170 + $0xa0] sm:$0xf] 0
      %562 = vst [vmem:[%s170 + $0xa4] sm:$0x1] 0
      %563 = vst [vmem:[%s170 + $0xa8] sm:$0xf] 0
      %564 = vst [vmem:[%s170 + $0xac] sm:$0xf] 0
      %565 = vst [vmem:[%s170 + $0xb0] sm:$0x1] 0
      %566 = vst [vmem:[%s170 + $0xb4] sm:$0xf] 0
      %567 = vst [vmem:[%s170 + $0xb8] sm:$0xf] 0
      %568 = vst [vmem:[%s170 + $0xbc] sm:$0x1] 0
      %569 = vst [vmem:[%s170 + $0xc0] sm:$0xf] 0
      %570 = vst [vmem:[%s170 + $0xc4] sm:$0xf] 0
      %571 = vst [vmem:[%s170 + $0xc8] sm:$0x1] 0
      %572 = vst [vmem:[%s170 + $0xcc] sm:$0xf] 0
      %573 = vst [vmem:[%s170 + $0xd0] sm:$0xf] 0
      %574 = vst [vmem:[%s170 + $0xd4] sm:$0x1] 0
      %575 = vst [vmem:[%s170 + $0xd8] sm:$0xf] 0
      %576 = vst [vmem:[%s170 + $0xdc] sm:$0xf] 0
      %577 = vst [vmem:[%s170 + $0xe0] sm:$0x1] 0
      %vm578 = vsmask.f32 256
      %vm579 = vsmask.f32 4368
      %vm580 = vmor %vm578, %vm579
      %v582 = vshrl.u32 %v489, 16
      %v584 = vrot.slane %v582, 7
      %v585 = vshll.u32 %v489, 16
      %v587 = vor.u32 %v584, %v585
      %v588 = vrot.slane %v584, 4
      %v590 = vshrl.u32 %v490, 16
      %v592 = vrot.slane %v590, 7
      %v593 = vshll.u32 %v490, 16
      %v595 = vor.u32 %v592, %v593
      %v596 = vsel %vm580, %v588, %v595
      %v597 = vrot.slane %v592, 4
      %s601 = scalar_lea.vmem %s170, 12
      %vm602 = vcmask 1043456
      %vm603 = vsmask.f32 7938
      %vm604 = vmand %vm602, %vm603
      %v605 = vld [vmem:[%s601] sm:$0xf]
      %v606 = vsel %vm604, %v587, %v605
      %607 = vst [vmem:[%s601] sm:$0xf] %v606
      %608 = vst [vmem:[%s601 + $0x4] sm:$0xf] %v596
      %vm609 = vcmask 1040384
      %vm610 = vmand %vm609, %vm578
      %v611 = vld [vmem:[%s601 + $0x8] sm:$0x1]
      %v612 = vsel %vm610, %v597, %v611
      %613 = vst [vmem:[%s601 + $0x8] sm:$0x1] %v612
      %v615 = vshrl.u32 %v491, 16
      %v617 = vrot.slane %v615, 7
      %v618 = vshll.u32 %v491, 16
      %v620 = vor.u32 %v617, %v618
      %v621 = vrot.slane %v617, 4
      %v623 = vshrl.u32 %v492, 16
      %v625 = vrot.slane %v623, 7
      %v626 = vshll.u32 %v492, 16
      %v628 = vor.u32 %v625, %v626
      %v629 = vsel %vm580, %v621, %v628
      %v630 = vrot.slane %v625, 4
      %s634 = scalar_lea.vmem %s170, 24
      %v635 = vld [vmem:[%s634] sm:$0xf]
      %v636 = vsel %vm604, %v620, %v635
      %637 = vst [vmem:[%s634] sm:$0xf] %v636
      %638 = vst [vmem:[%s634 + $0x4] sm:$0xf] %v629
      %v639 = vld [vmem:[%s634 + $0x8] sm:$0x1]
      %v640 = vsel %vm610, %v630, %v639
      %641 = vst [vmem:[%s634 + $0x8] sm:$0x1] %v640
      %v643 = vshrl.u32 %v493, 16
      %v645 = vrot.slane %v643, 7
      %v646 = vshll.u32 %v493, 16
      %v648 = vor.u32 %v645, %v646
      %v649 = vrot.slane %v645, 4
      %v651 = vshrl.u32 %v494, 16
      %v653 = vrot.slane %v651, 7
      %v654 = vshll.u32 %v494, 16
      %v656 = vor.u32 %v653, %v654
      %v657 = vsel %vm580, %v649, %v656
      %v658 = vrot.slane %v653, 4
      %s662 = scalar_lea.vmem %s170, 36
      %v663 = vld [vmem:[%s662] sm:$0xf]
      %v664 = vsel %vm604, %v648, %v663
      %665 = vst [vmem:[%s662] sm:$0xf] %v664
      %666 = vst [vmem:[%s662 + $0x4] sm:$0xf] %v657
      %v667 = vld [vmem:[%s662 + $0x8] sm:$0x1]
      %v668 = vsel %vm610, %v658, %v667
      %669 = vst [vmem:[%s662 + $0x8] sm:$0x1] %v668
      %v671 = vshrl.u32 %v495, 16
      %v673 = vrot.slane %v671, 7
      %v674 = vshll.u32 %v495, 16
      %v676 = vor.u32 %v673, %v674
      %v677 = vrot.slane %v673, 4
      %v679 = vshrl.u32 %v496, 16
      %v681 = vrot.slane %v679, 7
      %v682 = vshll.u32 %v496, 16
      %v684 = vor.u32 %v681, %v682
      %v685 = vsel %vm580, %v677, %v684
      %v686 = vrot.slane %v681, 4
      %s690 = scalar_lea.vmem %s170, 48
      %v691 = vld [vmem:[%s690] sm:$0xf]
      %v692 = vsel %vm604, %v676, %v691
      %693 = vst [vmem:[%s690] sm:$0xf] %v692
      %694 = vst [vmem:[%s690 + $0x4] sm:$0xf] %v685
      %v695 = vld [vmem:[%s690 + $0x8] sm:$0x1]
      %v696 = vsel %vm610, %v686, %v695
      %697 = vst [vmem:[%s690 + $0x8] sm:$0x1] %v696
      %v699 = vshrl.u32 %v497, 16
      %v701 = vrot.slane %v699, 7
      %v702 = vshll.u32 %v497, 16
      %v704 = vor.u32 %v701, %v702
      %v705 = vrot.slane %v701, 4
      %v707 = vshrl.u32 %v498, 16
      %v709 = vrot.slane %v707, 7
      %v710 = vshll.u32 %v498, 16
      %v712 = vor.u32 %v709, %v710
      %v713 = vsel %vm580, %v705, %v712
      %v714 = vrot.slane %v709, 4
      %s718 = scalar_lea.vmem %s170, 60
      %v719 = vld [vmem:[%s718] sm:$0xf]
      %v720 = vsel %vm604, %v704, %v719
      %721 = vst [vmem:[%s718] sm:$0xf] %v720
      %722 = vst [vmem:[%s718 + $0x4] sm:$0xf] %v713
      %v723 = vld [vmem:[%s718 + $0x8] sm:$0x1]
      %v724 = vsel %vm610, %v714, %v723
      %725 = vst [vmem:[%s718 + $0x8] sm:$0x1] %v724
      %v727 = vshrl.u32 %v499, 16
      %v729 = vrot.slane %v727, 7
      %v730 = vshll.u32 %v499, 16
      %v732 = vor.u32 %v729, %v730
      %v733 = vrot.slane %v729, 4
      %v735 = vshrl.u32 %v500, 16
      %v737 = vrot.slane %v735, 7
      %v738 = vshll.u32 %v500, 16
      %v740 = vor.u32 %v737, %v738
      %v741 = vsel %vm580, %v733, %v740
      %v742 = vrot.slane %v737, 4
      %s746 = scalar_lea.vmem %s170, 72
      %v747 = vld [vmem:[%s746] sm:$0xf]
      %v748 = vsel %vm604, %v732, %v747
      %749 = vst [vmem:[%s746] sm:$0xf] %v748
      %750 = vst [vmem:[%s746 + $0x4] sm:$0xf] %v741
      %v751 = vld [vmem:[%s746 + $0x8] sm:$0x1]
      %v752 = vsel %vm610, %v742, %v751
      %753 = vst [vmem:[%s746 + $0x8] sm:$0x1] %v752
      %v755 = vshrl.u32 %v501, 16
      %v757 = vrot.slane %v755, 7
      %v758 = vshll.u32 %v501, 16
      %v760 = vor.u32 %v757, %v758
      %v761 = vrot.slane %v757, 4
      %v763 = vshrl.u32 %v502, 16
      %v765 = vrot.slane %v763, 7
      %v766 = vshll.u32 %v502, 16
      %v768 = vor.u32 %v765, %v766
      %v769 = vsel %vm580, %v761, %v768
      %v770 = vrot.slane %v765, 4
      %s774 = scalar_lea.vmem %s170, 84
      %v775 = vld [vmem:[%s774] sm:$0xf]
      %v776 = vsel %vm604, %v760, %v775
      %777 = vst [vmem:[%s774] sm:$0xf] %v776
      %778 = vst [vmem:[%s774 + $0x4] sm:$0xf] %v769
      %v779 = vld [vmem:[%s774 + $0x8] sm:$0x1]
      %v780 = vsel %vm610, %v770, %v779
      %781 = vst [vmem:[%s774 + $0x8] sm:$0x1] %v780
      %v783 = vshrl.u32 %v503, 16
      %v785 = vrot.slane %v783, 7
      %v786 = vshll.u32 %v503, 16
      %v788 = vor.u32 %v785, %v786
      %v789 = vrot.slane %v785, 4
      %v791 = vshrl.u32 %v504, 16
      %v793 = vrot.slane %v791, 7
      %v794 = vshll.u32 %v504, 16
      %v796 = vor.u32 %v793, %v794
      %v797 = vsel %vm580, %v789, %v796
      %v798 = vrot.slane %v793, 4
      %s802 = scalar_lea.vmem %s170, 96
      %v803 = vld [vmem:[%s802] sm:$0xf]
      %v804 = vsel %vm604, %v788, %v803
      %805 = vst [vmem:[%s802] sm:$0xf] %v804
      %806 = vst [vmem:[%s802 + $0x4] sm:$0xf] %v797
      %v807 = vld [vmem:[%s802 + $0x8] sm:$0x1]
      %v808 = vsel %vm610, %v798, %v807
      %809 = vst [vmem:[%s802 + $0x8] sm:$0x1] %v808
      %v811 = vshrl.u32 %v505, 16
      %v813 = vrot.slane %v811, 7
      %v814 = vshll.u32 %v505, 16
      %v816 = vor.u32 %v813, %v814
      %v817 = vrot.slane %v813, 4
      %v819 = vshrl.u32 %v506, 16
      %v821 = vrot.slane %v819, 7
      %v822 = vshll.u32 %v506, 16
      %v824 = vor.u32 %v821, %v822
      %v825 = vsel %vm580, %v817, %v824
      %v826 = vrot.slane %v821, 4
      %s830 = scalar_lea.vmem %s170, 108
      %v831 = vld [vmem:[%s830] sm:$0xf]
      %v832 = vsel %vm604, %v816, %v831
      %833 = vst [vmem:[%s830] sm:$0xf] %v832
      %834 = vst [vmem:[%s830 + $0x4] sm:$0xf] %v825
      %v835 = vld [vmem:[%s830 + $0x8] sm:$0x1]
      %v836 = vsel %vm610, %v826, %v835
      %837 = vst [vmem:[%s830 + $0x8] sm:$0x1] %v836
      %v839 = vshrl.u32 %v507, 16
      %v841 = vrot.slane %v839, 7
      %v842 = vshll.u32 %v507, 16
      %v844 = vor.u32 %v841, %v842
      %v845 = vrot.slane %v841, 4
      %v847 = vshrl.u32 %v508, 16
      %v849 = vrot.slane %v847, 7
      %v850 = vshll.u32 %v508, 16
      %v852 = vor.u32 %v849, %v850
      %v853 = vsel %vm580, %v845, %v852
      %v854 = vrot.slane %v849, 4
      %s858 = scalar_lea.vmem %s170, 120
      %v859 = vld [vmem:[%s858] sm:$0xf]
      %v860 = vsel %vm604, %v844, %v859
      %861 = vst [vmem:[%s858] sm:$0xf] %v860
      %862 = vst [vmem:[%s858 + $0x4] sm:$0xf] %v853
      %v863 = vld [vmem:[%s858 + $0x8] sm:$0x1]
      %v864 = vsel %vm610, %v854, %v863
      %865 = vst [vmem:[%s858 + $0x8] sm:$0x1] %v864
      %v867 = vshrl.u32 %v509, 16
      %v869 = vrot.slane %v867, 7
      %v870 = vshll.u32 %v509, 16
      %v872 = vor.u32 %v869, %v870
      %v873 = vrot.slane %v869, 4
      %v875 = vshrl.u32 %v510, 16
      %v877 = vrot.slane %v875, 7
      %v878 = vshll.u32 %v510, 16
      %v880 = vor.u32 %v877, %v878
      %v881 = vsel %vm580, %v873, %v880
      %v882 = vrot.slane %v877, 4
      %s886 = scalar_lea.vmem %s170, 132
      %v887 = vld [vmem:[%s886] sm:$0xf]
      %v888 = vsel %vm604, %v872, %v887
      %889 = vst [vmem:[%s886] sm:$0xf] %v888
      %890 = vst [vmem:[%s886 + $0x4] sm:$0xf] %v881
      %v891 = vld [vmem:[%s886 + $0x8] sm:$0x1]
      %v892 = vsel %vm610, %v882, %v891
      %893 = vst [vmem:[%s886 + $0x8] sm:$0x1] %v892
      %v895 = vshrl.u32 %v511, 16
      %v897 = vrot.slane %v895, 7
      %v898 = vshll.u32 %v511, 16
      %v900 = vor.u32 %v897, %v898
      %v901 = vrot.slane %v897, 4
      %v903 = vshrl.u32 %v512, 16
      %v905 = vrot.slane %v903, 7
      %v906 = vshll.u32 %v512, 16
      %v908 = vor.u32 %v905, %v906
      %v909 = vsel %vm580, %v901, %v908
      %v910 = vrot.slane %v905, 4
      %s914 = scalar_lea.vmem %s170, 144
      %v915 = vld [vmem:[%s914] sm:$0xf]
      %v916 = vsel %vm604, %v900, %v915
      %917 = vst [vmem:[%s914] sm:$0xf] %v916
      %918 = vst [vmem:[%s914 + $0x4] sm:$0xf] %v909
      %v919 = vld [vmem:[%s914 + $0x8] sm:$0x1]
      %v920 = vsel %vm610, %v910, %v919
      %921 = vst [vmem:[%s914 + $0x8] sm:$0x1] %v920
      %v923 = vshrl.u32 %v513, 16
      %v925 = vrot.slane %v923, 7
      %v926 = vshll.u32 %v513, 16
      %v928 = vor.u32 %v925, %v926
      %v929 = vrot.slane %v925, 4
      %v931 = vshrl.u32 %v514, 16
      %v933 = vrot.slane %v931, 7
      %v934 = vshll.u32 %v514, 16
      %v936 = vor.u32 %v933, %v934
      %v937 = vsel %vm580, %v929, %v936
      %v938 = vrot.slane %v933, 4
      %s942 = scalar_lea.vmem %s170, 156
      %v943 = vld [vmem:[%s942] sm:$0xf]
      %v944 = vsel %vm604, %v928, %v943
      %945 = vst [vmem:[%s942] sm:$0xf] %v944
      %946 = vst [vmem:[%s942 + $0x4] sm:$0xf] %v937
      %v947 = vld [vmem:[%s942 + $0x8] sm:$0x1]
      %v948 = vsel %vm610, %v938, %v947
      %949 = vst [vmem:[%s942 + $0x8] sm:$0x1] %v948
      %v951 = vshrl.u32 %v515, 16
      %v953 = vrot.slane %v951, 7
      %v954 = vshll.u32 %v515, 16
      %v956 = vor.u32 %v953, %v954
      %v957 = vrot.slane %v953, 4
      %v959 = vshrl.u32 %v516, 16
      %v961 = vrot.slane %v959, 7
      %v962 = vshll.u32 %v516, 16
      %v964 = vor.u32 %v961, %v962
      %v965 = vsel %vm580, %v957, %v964
      %v966 = vrot.slane %v961, 4
      %s970 = scalar_lea.vmem %s170, 168
      %v971 = vld [vmem:[%s970] sm:$0xf]
      %v972 = vsel %vm604, %v956, %v971
      %973 = vst [vmem:[%s970] sm:$0xf] %v972
      %974 = vst [vmem:[%s970 + $0x4] sm:$0xf] %v965
      %v975 = vld [vmem:[%s970 + $0x8] sm:$0x1]
      %v976 = vsel %vm610, %v966, %v975
      %977 = vst [vmem:[%s970 + $0x8] sm:$0x1] %v976
      %v979 = vshrl.u32 %v517, 16
      %v981 = vrot.slane %v979, 7
      %v982 = vshll.u32 %v517, 16
      %v984 = vor.u32 %v981, %v982
      %v985 = vrot.slane %v981, 4
      %v987 = vshrl.u32 %v518, 16
      %v989 = vrot.slane %v987, 7
      %v990 = vshll.u32 %v518, 16
      %v992 = vor.u32 %v989, %v990
      %v993 = vsel %vm580, %v985, %v992
      %v994 = vrot.slane %v989, 4
      %s998 = scalar_lea.vmem %s170, 180
      %v999 = vld [vmem:[%s998] sm:$0xf]
      %v1000 = vsel %vm604, %v984, %v999
      %1001 = vst [vmem:[%s998] sm:$0xf] %v1000
      %1002 = vst [vmem:[%s998 + $0x4] sm:$0xf] %v993
      %v1003 = vld [vmem:[%s998 + $0x8] sm:$0x1]
      %v1004 = vsel %vm610, %v994, %v1003
      %1005 = vst [vmem:[%s998 + $0x8] sm:$0x1] %v1004
      %v1007 = vshrl.u32 %v519, 16
      %v1009 = vrot.slane %v1007, 7
      %v1010 = vshll.u32 %v519, 16
      %v1012 = vor.u32 %v1009, %v1010
      %v1013 = vrot.slane %v1009, 4
      %v1015 = vshrl.u32 %v520, 16
      %v1017 = vrot.slane %v1015, 7
      %v1018 = vshll.u32 %v520, 16
      %v1020 = vor.u32 %v1017, %v1018
      %v1021 = vsel %vm580, %v1013, %v1020
      %v1022 = vrot.slane %v1017, 4
      %s1026 = scalar_lea.vmem %s170, 192
      %v1027 = vld [vmem:[%s1026] sm:$0xf]
      %v1028 = vsel %vm604, %v1012, %v1027
      %1029 = vst [vmem:[%s1026] sm:$0xf] %v1028
      %1030 = vst [vmem:[%s1026 + $0x4] sm:$0xf] %v1021
      %v1031 = vld [vmem:[%s1026 + $0x8] sm:$0x1]
      %v1032 = vsel %vm610, %v1022, %v1031
      %1033 = vst [vmem:[%s1026 + $0x8] sm:$0x1] %v1032
      %p1034 = scmp.lt.s32.totalorder %s14, 1
      %s1035 = scalar_select %p1034, %s14, 1
      %s1036 = smul.addr %s1035, 57
      %s1037 = smul.addr %s1036, 4
      %s1038 = scalar_lea.vmem %s3, %s1037
      // Predicated region
      $region33: #{_bottleneck_v1b_forward.3} parent=31 // pred_check
        %p1039 = pneg %p100
      $region34: #{_bottleneck_v1b_forward.3} parent=31 // pred_check_branch
        %1041 = sbr.rel (%p1039) target = $region36
      $region35: #{_bottleneck_v1b_forward.3} parent=31 // pred_region
        _
      $region36: #{_bottleneck_v1b_forward.3} parent=31 // pred_fallthru
        _
    $region32: #{_bottleneck_v1b_forward.3} parent=5 // pred_fallthru
      _
    %p1042 = scmp.le.s32.totalorder 2, %s9
    // Predicated region
    $region37: #{_bottleneck_v1b_forward.3} parent=5 // pred_check
      %p1043 = pneg %p1042
    $region38: #{_bottleneck_v1b_forward.3} parent=5 // pred_check_branch
      %1045 = sbr.rel (%p1043) target = $region40
    $region39: #{_bottleneck_v1b_forward.3} parent=5 // pred_region
      %s1046 = ssub.s32 %s9, 2
      // Predicated region
      $region41: #{_bottleneck_v1b_forward.3} parent=39 // pred_check
        %p1047 = pneg %p106
      $region42: #{_bottleneck_v1b_forward.3} parent=39 // pred_check_branch
        %1049 = sbr.rel (%p1047) target = $region44
      $region43: #{_bottleneck_v1b_forward.3} parent=39 // pred_region
        %p1050 = scmp.lt.s32.totalorder %s15, 1
        %s1051 = scalar_select %p1050, %s15, 1
        %s1052 = smul.addr %s1051, 57
        %s1053 = smul.addr %s1052, 4
        %s1054 = scalar_lea.vmem %s3, %s1053
      $region44: #{_bottleneck_v1b_forward.3} parent=39 // pred_fallthru
        _
    $region40: #{_bottleneck_v1b_forward.3} parent=5 // pred_fallthru
      _
  $region6: #{_bottleneck_v1b_forward.3} parent=0 // loop_footer
    %s13 = sadd.s32 1, %s9
  $region7: #{_bottleneck_v1b_forward.3} parent=0 // loop_footer_branch
    %8 = sbr.rel target = $region3
  $region8: #{_bottleneck_v1b_forward.3} parent=0 // loop_exit
    _

// kernel: _bottleneck_v1b_forward.5
$region0: #{_bottleneck_v1b_forward.5}
  #allocation0 [shape = 'u32[]', space=smem, size = 0x4, offset = 0x4, fixed_abs, tag = 'smem constant byte address 0x4 - core index']
  #allocation1 [shape = 'u32[72,128]{1,0:T(1,128)}', space=vmem, size = 0x9000, scoped, tag = 'internal scratch']
  %s0 = inlined_call_operand.vmem [shape: bf16[512,128], index: 0, kind: input, shape index: {}]
  %s1 = inlined_call_operand.vmem [shape: bf16[128,128], index: 1, kind: input, shape index: {}]
  %s2 = inlined_call_operand.vmem [shape: f32[1,128], index: 2, kind: input, shape index: {}]
  %s3 = inlined_call_operand.vmem [shape: bf16[512,128], index: 3, kind: input, shape index: {}]
  %s4 = inlined_call_operand.vmem [shape: bf16[512,128], index: 4, kind: output, shape index: {}]
  %s5 = sld [smem:[#allocation0]]
  $region26: #{_bottleneck_v1b_forward.5} parent=0
    _
  %s7 = ssub.s32 1, %s5
  %s8 = scalar_select 0, %s7, %s5
  // Predicated region
  $region2: #{_bottleneck_v1b_forward.5} parent=0 // pred_check
    _
  $region3: #{_bottleneck_v1b_forward.5} parent=0 // pred_check_branch
    %10 = sbr.rel (0) target = $region5
  $region4: #{_bottleneck_v1b_forward.5} parent=0 // pred_region
    _
  $region5: #{_bottleneck_v1b_forward.5} parent=0 // pred_fallthru
    _
  // Predicated region
  $region6: #{_bottleneck_v1b_forward.5} parent=0 // pred_check
    _
  $region7: #{_bottleneck_v1b_forward.5} parent=0 // pred_check_branch
    %12 = sbr.rel (0) target = $region9
  $region8: #{_bottleneck_v1b_forward.5} parent=0 // pred_region
    _
  $region9: #{_bottleneck_v1b_forward.5} parent=0 // pred_fallthru
    _
  // Predicated region
  $region10: #{_bottleneck_v1b_forward.5} parent=0 // pred_check
    _
  $region11: #{_bottleneck_v1b_forward.5} parent=0 // pred_check_branch
    %14 = sbr.rel (0) target = $region13
  $region12: #{_bottleneck_v1b_forward.5} parent=0 // pred_region
    _
  $region13: #{_bottleneck_v1b_forward.5} parent=0 // pred_fallthru
    _
  // Predicated region
  $region14: #{_bottleneck_v1b_forward.5} parent=0 // pred_check
    _
  $region15: #{_bottleneck_v1b_forward.5} parent=0 // pred_check_branch
    %16 = sbr.rel (0) target = $region17
  $region16: #{_bottleneck_v1b_forward.5} parent=0 // pred_region
    _
  $region17: #{_bottleneck_v1b_forward.5} parent=0 // pred_fallthru
    _
  %v17 = vld [vmem:[%s0] sm:$0xf]
  %v18 = vld [vmem:[%s0 + $0x4] sm:$0xf]
  %v19 = vld [vmem:[%s0 + $0x8] sm:$0xf]
  %v20 = vld [vmem:[%s0 + $0xc] sm:$0xf]
  %v21 = vld [vmem:[%s0 + $0x10] sm:$0xf]
  %v22 = vld [vmem:[%s0 + $0x14] sm:$0xf]
  %v23 = vld [vmem:[%s0 + $0x18] sm:$0xf]
  %v24 = vld [vmem:[%s0 + $0x1c] sm:$0xf]
  %v25 = vld [vmem:[%s0 + $0x20] sm:$0xf]
  %v26 = vld [vmem:[%s0 + $0x24] sm:$0xf]
  %v27 = vld [vmem:[%s0 + $0x28] sm:$0xf]
  %v28 = vld [vmem:[%s0 + $0x2c] sm:$0xf]
  %v29 = vld [vmem:[%s0 + $0x30] sm:$0xf]
  %v30 = vld [vmem:[%s0 + $0x34] sm:$0xf]
  %v31 = vld [vmem:[%s0 + $0x38] sm:$0xf]
  %v32 = vld [vmem:[%s0 + $0x3c] sm:$0xf]
  %v33 = vld [vmem:[%s0 + $0x40] sm:$0xf]
  %v34 = vld [vmem:[%s0 + $0x44] sm:$0xf]
  %v35 = vld [vmem:[%s0 + $0x48] sm:$0xf]
  %v36 = vld [vmem:[%s0 + $0x4c] sm:$0xf]
  %v37 = vld [vmem:[%s0 + $0x50] sm:$0xf]
  %v38 = vld [vmem:[%s0 + $0x54] sm:$0xf]
  %v39 = vld [vmem:[%s0 + $0x58] sm:$0xf]
  %v40 = vld [vmem:[%s0 + $0x5c] sm:$0xf]
  %v41 = vld [vmem:[%s0 + $0x60] sm:$0xf]
  %v42 = vld [vmem:[%s0 + $0x64] sm:$0xf]
  %v43 = vld [vmem:[%s0 + $0x68] sm:$0xf]
  %v44 = vld [vmem:[%s0 + $0x6c] sm:$0xf]
  %v45 = vld [vmem:[%s0 + $0x70] sm:$0xf]
  %v46 = vld [vmem:[%s0 + $0x74] sm:$0xf]
  %v47 = vld [vmem:[%s0 + $0x78] sm:$0xf]
  %v48 = vld [vmem:[%s0 + $0x7c] sm:$0xf]
  %v49 = vld [vmem:[%s0 + $0x80] sm:$0xf]
  %v50 = vld [vmem:[%s0 + $0x84] sm:$0xf]
  %v51 = vld [vmem:[%s0 + $0x88] sm:$0xf]
  %v52 = vld [vmem:[%s0 + $0x8c] sm:$0xf]
  %v53 = vld [vmem:[%s0 + $0x90] sm:$0xf]
  %v54 = vld [vmem:[%s0 + $0x94] sm:$0xf]
  %v55 = vld [vmem:[%s0 + $0x98] sm:$0xf]
  %v56 = vld [vmem:[%s0 + $0x9c] sm:$0xf]
  %v57 = vld [vmem:[%s0 + $0xa0] sm:$0xf]
  %v58 = vld [vmem:[%s0 + $0xa4] sm:$0xf]
  %v59 = vld [vmem:[%s0 + $0xa8] sm:$0xf]
  %v60 = vld [vmem:[%s0 + $0xac] sm:$0xf]
  %v61 = vld [vmem:[%s0 + $0xb0] sm:$0xf]
  %v62 = vld [vmem:[%s0 + $0xb4] sm:$0xf]
  %v63 = vld [vmem:[%s0 + $0xb8] sm:$0xf]
  %v64 = vld [vmem:[%s0 + $0xbc] sm:$0xf]
  %v65 = vld [vmem:[%s0 + $0xc0] sm:$0xf]
  %v66 = vld [vmem:[%s0 + $0xc4] sm:$0xf]
  %v67 = vld [vmem:[%s0 + $0xc8] sm:$0xf]
  %v68 = vld [vmem:[%s0 + $0xcc] sm:$0xf]
  %v69 = vld [vmem:[%s0 + $0xd0] sm:$0xf]
  %v70 = vld [vmem:[%s0 + $0xd4] sm:$0xf]
  %v71 = vld [vmem:[%s0 + $0xd8] sm:$0xf]
  %v72 = vld [vmem:[%s0 + $0xdc] sm:$0xf]
  %v73 = vld [vmem:[%s0 + $0xe0] sm:$0xf]
  %v74 = vld [vmem:[%s0 + $0xe4] sm:$0xf]
  %v75 = vld [vmem:[%s0 + $0xe8] sm:$0xf]
  %v76 = vld [vmem:[%s0 + $0xec] sm:$0xf]
  %v77 = vld [vmem:[%s0 + $0xf0] sm:$0xf]
  %v78 = vld [vmem:[%s0 + $0xf4] sm:$0xf]
  %v79 = vld [vmem:[%s0 + $0xf8] sm:$0xf]
  %v80 = vld [vmem:[%s0 + $0xfc] sm:$0xf]
  %v81 = vld [vmem:[%s1] sm:$0xf]
  %v82 = vld [vmem:[%s1 + $0x4] sm:$0xf]
  %v83 = vld [vmem:[%s1 + $0x8] sm:$0xf]
  %v84 = vld [vmem:[%s1 + $0xc] sm:$0xf]
  %v85 = vld [vmem:[%s1 + $0x10] sm:$0xf]
  %v86 = vld [vmem:[%s1 + $0x14] sm:$0xf]
  %v87 = vld [vmem:[%s1 + $0x18] sm:$0xf]
  %v88 = vld [vmem:[%s1 + $0x1c] sm:$0xf]
  %v89 = vld [vmem:[%s1 + $0x20] sm:$0xf]
  %v90 = vld [vmem:[%s1 + $0x24] sm:$0xf]
  %v91 = vld [vmem:[%s1 + $0x28] sm:$0xf]
  %v92 = vld [vmem:[%s1 + $0x2c] sm:$0xf]
  %v93 = vld [vmem:[%s1 + $0x30] sm:$0xf]
  %v94 = vld [vmem:[%s1 + $0x34] sm:$0xf]
  %v95 = vld [vmem:[%s1 + $0x38] sm:$0xf]
  %v96 = vld [vmem:[%s1 + $0x3c] sm:$0xf]
  %v97 = vld [vmem:[%s2] sm:$0x1]
  %v99 = vperm.slane %v97, 0
  %v165 = vunpack.c.l.b16 %v17
  %v166 = vunpack.c.l.b16 %v18
  %v167 = vunpack.c.l.b16 %v19
  %v168 = vunpack.c.l.b16 %v20
  %v169 = vunpack.c.l.b16 %v21
  %v170 = vunpack.c.l.b16 %v22
  %v171 = vunpack.c.l.b16 %v23
  %v172 = vunpack.c.l.b16 %v24
  %v173 = vunpack.c.l.b16 %v25
  %v174 = vunpack.c.l.b16 %v26
  %v175 = vunpack.c.l.b16 %v27
  %v176 = vunpack.c.l.b16 %v28
  %v177 = vunpack.c.l.b16 %v29
  %v178 = vunpack.c.l.b16 %v30
  %v179 = vunpack.c.l.b16 %v31
  %v180 = vunpack.c.l.b16 %v32
  %v181 = vunpack.c.l.b16 %v33
  %v182 = vunpack.c.l.b16 %v34
  %v183 = vunpack.c.l.b16 %v35
  %v184 = vunpack.c.l.b16 %v36
  %v185 = vunpack.c.l.b16 %v37
  %v186 = vunpack.c.l.b16 %v38
  %v187 = vunpack.c.l.b16 %v39
  %v188 = vunpack.c.l.b16 %v40
  %v189 = vunpack.c.l.b16 %v41
  %v190 = vunpack.c.l.b16 %v42
  %v191 = vunpack.c.l.b16 %v43
  %v192 = vunpack.c.l.b16 %v44
  %v193 = vunpack.c.l.b16 %v45
  %v194 = vunpack.c.l.b16 %v46
  %v195 = vunpack.c.l.b16 %v47
  %v196 = vunpack.c.l.b16 %v48
  %v197 = vunpack.c.l.b16 %v49
  %v198 = vunpack.c.l.b16 %v50
  %v199 = vunpack.c.l.b16 %v51
  %v200 = vunpack.c.l.b16 %v52
  %v201 = vunpack.c.l.b16 %v53
  %v202 = vunpack.c.l.b16 %v54
  %v203 = vunpack.c.l.b16 %v55
  %v204 = vunpack.c.l.b16 %v56
  %v205 = vunpack.c.l.b16 %v57
  %v206 = vunpack.c.l.b16 %v58
  %v207 = vunpack.c.l.b16 %v59
  %v208 = vunpack.c.l.b16 %v60
  %v209 = vunpack.c.l.b16 %v61
  %v210 = vunpack.c.l.b16 %v62
  %v211 = vunpack.c.l.b16 %v63
  %v212 = vunpack.c.l.b16 %v64
  %v213 = vunpack.c.l.b16 %v65
  %v214 = vunpack.c.l.b16 %v66
  %v215 = vunpack.c.l.b16 %v67
  %v216 = vunpack.c.l.b16 %v68
  %v217 = vunpack.c.l.b16 %v69
  %v218 = vunpack.c.l.b16 %v70
  %v219 = vunpack.c.l.b16 %v71
  %v220 = vunpack.c.l.b16 %v72
  %v221 = vunpack.c.l.b16 %v73
  %v222 = vunpack.c.l.b16 %v74
  %v223 = vunpack.c.l.b16 %v75
  %v224 = vunpack.c.l.b16 %v76
  %v225 = vunpack.c.l.b16 %v77
  %v226 = vunpack.c.l.b16 %v78
  %v227 = vunpack.c.l.b16 %v79
  %v228 = vunpack.c.l.b16 %v80
  %v229 = vpack.c.b16 %v166, %v165
  %v230 = vpack.c.b16 %v168, %v167
  %v231 = vpack.c.b16 %v170, %v169
  %v232 = vpack.c.b16 %v172, %v171
  %v233 = vpack.c.b16 %v174, %v173
  %v234 = vpack.c.b16 %v176, %v175
  %v235 = vpack.c.b16 %v178, %v177
  %v236 = vpack.c.b16 %v180, %v179
  %v237 = vpack.c.b16 %v182, %v181
  %v238 = vpack.c.b16 %v184, %v183
  %v239 = vpack.c.b16 %v186, %v185
  %v240 = vpack.c.b16 %v188, %v187
  %v241 = vpack.c.b16 %v190, %v189
  %v242 = vpack.c.b16 %v192, %v191
  %v243 = vpack.c.b16 %v194, %v193
  %v244 = vpack.c.b16 %v196, %v195
  %v245 = vpack.c.b16 %v198, %v197
  %v246 = vpack.c.b16 %v200, %v199
  %v247 = vpack.c.b16 %v202, %v201
  %v248 = vpack.c.b16 %v204, %v203
  %v249 = vpack.c.b16 %v206, %v205
  %v250 = vpack.c.b16 %v208, %v207
  %v251 = vpack.c.b16 %v210, %v209
  %v252 = vpack.c.b16 %v212, %v211
  %v253 = vpack.c.b16 %v214, %v213
  %v254 = vpack.c.b16 %v216, %v215
  %v255 = vpack.c.b16 %v218, %v217
  %v256 = vpack.c.b16 %v220, %v219
  %v257 = vpack.c.b16 %v222, %v221
  %v258 = vpack.c.b16 %v224, %v223
  %v259 = vpack.c.b16 %v226, %v225
  %v260 = vpack.c.b16 %v228, %v227
  %v309 = vunpack.c.l.b16 %v81
  %v310 = vunpack.c.l.b16 %v82
  %v311 = vunpack.c.l.b16 %v83
  %v312 = vunpack.c.l.b16 %v84
  %v313 = vunpack.c.l.b16 %v85
  %v314 = vunpack.c.l.b16 %v86
  %v315 = vunpack.c.l.b16 %v87
  %v316 = vunpack.c.l.b16 %v88
  %v317 = vunpack.c.l.b16 %v89
  %v318 = vunpack.c.l.b16 %v90
  %v319 = vunpack.c.l.b16 %v91
  %v320 = vunpack.c.l.b16 %v92
  %v321 = vunpack.c.l.b16 %v93
  %v322 = vunpack.c.l.b16 %v94
  %v323 = vunpack.c.l.b16 %v95
  %v324 = vunpack.c.l.b16 %v96
  %v325 = vpack.c.b16 %v310, %v309
  %v326 = vpack.c.b16 %v312, %v311
  %v327 = vpack.c.b16 %v314, %v313
  %v328 = vpack.c.b16 %v316, %v315
  %v329 = vpack.c.b16 %v318, %v317
  %v330 = vpack.c.b16 %v320, %v319
  %v331 = vpack.c.b16 %v322, %v321
  %v332 = vpack.c.b16 %v324, %v323
  %341 = vmatpush.bf16.msra.mxu0 %v332
  %342 = vmatpush.bf16.msra.mxu0 %v331
  %343 = vmatpush.bf16.msra.mxu0 %v330
  %344 = vmatpush.bf16.msra.mxu0 %v329
  %345 = vmatpush.bf16.msra.mxu0 %v328
  %346 = vmatpush.bf16.msra.mxu0 %v327
  %347 = vmatpush.bf16.msra.mxu0 %v326
  %348 = vmatpush.bf16.msra.mxu0 %v325
  %349 = vmatmul.bf16.gmra.mxu0 %v229
  %v350 = vpop.f32.mrf.mxu0
  %v351 = vadd.f32 %v99, %v350
  %v352 = vpop.f32.mrf.mxu0
  %v353 = vadd.f32 %v99, %v352
  %354 = vmatmul.bf16.gmra.mxu0 %v230
  %v355 = vpop.f32.mrf.mxu0
  %v356 = vadd.f32 %v99, %v355
  %v357 = vpop.f32.mrf.mxu0
  %v358 = vadd.f32 %v99, %v357
  %359 = vmatmul.bf16.gmra.mxu0 %v231
  %v360 = vpop.f32.mrf.mxu0
  %v361 = vadd.f32 %v99, %v360
  %v362 = vpop.f32.mrf.mxu0
  %v363 = vadd.f32 %v99, %v362
  %364 = vmatmul.bf16.gmra.mxu0 %v232
  %v365 = vpop.f32.mrf.mxu0
  %v366 = vadd.f32 %v99, %v365
  %v367 = vpop.f32.mrf.mxu0
  %v368 = vadd.f32 %v99, %v367
  %369 = vmatmul.bf16.gmra.mxu0 %v233
  %v370 = vpop.f32.mrf.mxu0
  %v371 = vadd.f32 %v99, %v370
  %v372 = vpop.f32.mrf.mxu0
  %v373 = vadd.f32 %v99, %v372
  %374 = vmatmul.bf16.gmra.mxu0 %v234
  %v375 = vpop.f32.mrf.mxu0
  %v376 = vadd.f32 %v99, %v375
  %v377 = vpop.f32.mrf.mxu0
  %v378 = vadd.f32 %v99, %v377
  %379 = vmatmul.bf16.gmra.mxu0 %v235
  %v380 = vpop.f32.mrf.mxu0
  %v381 = vadd.f32 %v99, %v380
  %v382 = vpop.f32.mrf.mxu0
  %v383 = vadd.f32 %v99, %v382
  %384 = vmatmul.bf16.gmra.mxu0 %v236
  %v385 = vpop.f32.mrf.mxu0
  %v386 = vadd.f32 %v99, %v385
  %v387 = vpop.f32.mrf.mxu0
  %v388 = vadd.f32 %v99, %v387
  %389 = vmatmul.bf16.gmra.mxu0 %v237
  %v390 = vpop.f32.mrf.mxu0
  %v391 = vadd.f32 %v99, %v390
  %v392 = vpop.f32.mrf.mxu0
  %v393 = vadd.f32 %v99, %v392
  %394 = vmatmul.bf16.gmra.mxu0 %v238
  %v395 = vpop.f32.mrf.mxu0
  %v396 = vadd.f32 %v99, %v395
  %v397 = vpop.f32.mrf.mxu0
  %v398 = vadd.f32 %v99, %v397
  %399 = vmatmul.bf16.gmra.mxu0 %v239
  %v400 = vpop.f32.mrf.mxu0
  %v401 = vadd.f32 %v99, %v400
  %v402 = vpop.f32.mrf.mxu0
  %v403 = vadd.f32 %v99, %v402
  %404 = vmatmul.bf16.gmra.mxu0 %v240
  %v405 = vpop.f32.mrf.mxu0
  %v406 = vadd.f32 %v99, %v405
  %v407 = vpop.f32.mrf.mxu0
  %v408 = vadd.f32 %v99, %v407
  %409 = vmatmul.bf16.gmra.mxu0 %v241
  %v410 = vpop.f32.mrf.mxu0
  %v411 = vadd.f32 %v99, %v410
  %v412 = vpop.f32.mrf.mxu0
  %v413 = vadd.f32 %v99, %v412
  %414 = vmatmul.bf16.gmra.mxu0 %v242
  %v415 = vpop.f32.mrf.mxu0
  %v416 = vadd.f32 %v99, %v415
  %v417 = vpop.f32.mrf.mxu0
  %v418 = vadd.f32 %v99, %v417
  %419 = vmatmul.bf16.gmra.mxu0 %v243
  %v420 = vpop.f32.mrf.mxu0
  %v421 = vadd.f32 %v99, %v420
  %v422 = vpop.f32.mrf.mxu0
  %v423 = vadd.f32 %v99, %v422
  %424 = vmatmul.bf16.gmra.mxu0 %v244
  %v425 = vpop.f32.mrf.mxu0
  %v426 = vadd.f32 %v99, %v425
  %v427 = vpop.f32.mrf.mxu0
  %v428 = vadd.f32 %v99, %v427
  %429 = vmatmul.bf16.gmra.mxu0 %v245
  %v430 = vpop.f32.mrf.mxu0
  %v431 = vadd.f32 %v99, %v430
  %v432 = vpop.f32.mrf.mxu0
  %v433 = vadd.f32 %v99, %v432
  %434 = vmatmul.bf16.gmra.mxu0 %v246
  %v435 = vpop.f32.mrf.mxu0
  %v436 = vadd.f32 %v99, %v435
  %v437 = vpop.f32.mrf.mxu0
  %v438 = vadd.f32 %v99, %v437
  %439 = vmatmul.bf16.gmra.mxu0 %v247
  %v440 = vpop.f32.mrf.mxu0
  %v441 = vadd.f32 %v99, %v440
  %v442 = vpop.f32.mrf.mxu0
  %v443 = vadd.f32 %v99, %v442
  %444 = vmatmul.bf16.gmra.mxu0 %v248
  %v445 = vpop.f32.mrf.mxu0
  %v446 = vadd.f32 %v99, %v445
  %v447 = vpop.f32.mrf.mxu0
  %v448 = vadd.f32 %v99, %v447
  %449 = vmatmul.bf16.gmra.mxu0 %v249
  %v450 = vpop.f32.mrf.mxu0
  %v451 = vadd.f32 %v99, %v450
  %v452 = vpop.f32.mrf.mxu0
  %v453 = vadd.f32 %v99, %v452
  %454 = vmatmul.bf16.gmra.mxu0 %v250
  %v455 = vpop.f32.mrf.mxu0
  %v456 = vadd.f32 %v99, %v455
  %v457 = vpop.f32.mrf.mxu0
  %v458 = vadd.f32 %v99, %v457
  %459 = vmatmul.bf16.gmra.mxu0 %v251
  %v460 = vpop.f32.mrf.mxu0
  %v461 = vadd.f32 %v99, %v460
  %v462 = vpop.f32.mrf.mxu0
  %v463 = vadd.f32 %v99, %v462
  %464 = vmatmul.bf16.gmra.mxu0 %v252
  %v465 = vpop.f32.mrf.mxu0
  %v466 = vadd.f32 %v99, %v465
  %v467 = vpop.f32.mrf.mxu0
  %v468 = vadd.f32 %v99, %v467
  %469 = vmatmul.bf16.gmra.mxu0 %v253
  %v470 = vpop.f32.mrf.mxu0
  %v471 = vadd.f32 %v99, %v470
  %v472 = vpop.f32.mrf.mxu0
  %v473 = vadd.f32 %v99, %v472
  %474 = vmatmul.bf16.gmra.mxu0 %v254
  %v475 = vpop.f32.mrf.mxu0
  %v476 = vadd.f32 %v99, %v475
  %v477 = vpop.f32.mrf.mxu0
  %v478 = vadd.f32 %v99, %v477
  %479 = vmatmul.bf16.gmra.mxu0 %v255
  %v480 = vpop.f32.mrf.mxu0
  %v481 = vadd.f32 %v99, %v480
  %v482 = vpop.f32.mrf.mxu0
  %v483 = vadd.f32 %v99, %v482
  %484 = vmatmul.bf16.gmra.mxu0 %v256
  %v485 = vpop.f32.mrf.mxu0
  %v486 = vadd.f32 %v99, %v485
  %v487 = vpop.f32.mrf.mxu0
  %v488 = vadd.f32 %v99, %v487
  %489 = vmatmul.bf16.gmra.mxu0 %v257
  %v490 = vpop.f32.mrf.mxu0
  %v491 = vadd.f32 %v99, %v490
  %v492 = vpop.f32.mrf.mxu0
  %v493 = vadd.f32 %v99, %v492
  %494 = vmatmul.bf16.gmra.mxu0 %v258
  %v495 = vpop.f32.mrf.mxu0
  %v496 = vadd.f32 %v99, %v495
  %v497 = vpop.f32.mrf.mxu0
  %v498 = vadd.f32 %v99, %v497
  %499 = vmatmul.bf16.gmra.mxu0 %v259
  %v500 = vpop.f32.mrf.mxu0
  %v501 = vadd.f32 %v99, %v500
  %v502 = vpop.f32.mrf.mxu0
  %v503 = vadd.f32 %v99, %v502
  %504 = vmatmul.bf16.gmra.mxu0 %v260
  %v505 = vpop.f32.mrf.mxu0
  %v506 = vadd.f32 %v99, %v505
  %v507 = vpop.f32.mrf.mxu0
  %v508 = vadd.f32 %v99, %v507
  %509 = vdwg.mxu0
  %v510 = vld [vmem:[%s3] sm:$0xf]
  %v511 = vld [vmem:[%s3 + $0x4] sm:$0xf]
  %v512 = vld [vmem:[%s3 + $0x8] sm:$0xf]
  %v513 = vld [vmem:[%s3 + $0xc] sm:$0xf]
  %v514 = vld [vmem:[%s3 + $0x10] sm:$0xf]
  %v515 = vld [vmem:[%s3 + $0x14] sm:$0xf]
  %v516 = vld [vmem:[%s3 + $0x18] sm:$0xf]
  %v517 = vld [vmem:[%s3 + $0x1c] sm:$0xf]
  %v518 = vld [vmem:[%s3 + $0x20] sm:$0xf]
  %v519 = vld [vmem:[%s3 + $0x24] sm:$0xf]
  %v520 = vld [vmem:[%s3 + $0x28] sm:$0xf]
  %v521 = vld [vmem:[%s3 + $0x2c] sm:$0xf]
  %v522 = vld [vmem:[%s3 + $0x30] sm:$0xf]
  %v523 = vld [vmem:[%s3 + $0x34] sm:$0xf]
  %v524 = vld [vmem:[%s3 + $0x38] sm:$0xf]
  %v525 = vld [vmem:[%s3 + $0x3c] sm:$0xf]
  %v526 = vld [vmem:[%s3 + $0x40] sm:$0xf]
  %v527 = vld [vmem:[%s3 + $0x44] sm:$0xf]
  %v528 = vld [vmem:[%s3 + $0x48] sm:$0xf]
  %v529 = vld [vmem:[%s3 + $0x4c] sm:$0xf]
  %v530 = vld [vmem:[%s3 + $0x50] sm:$0xf]
  %v531 = vld [vmem:[%s3 + $0x54] sm:$0xf]
  %v532 = vld [vmem:[%s3 + $0x58] sm:$0xf]
  %v533 = vld [vmem:[%s3 + $0x5c] sm:$0xf]
  %v534 = vld [vmem:[%s3 + $0x60] sm:$0xf]
  %v535 = vld [vmem:[%s3 + $0x64] sm:$0xf]
  %v536 = vld [vmem:[%s3 + $0x68] sm:$0xf]
  %v537 = vld [vmem:[%s3 + $0x6c] sm:$0xf]
  %v538 = vld [vmem:[%s3 + $0x70] sm:$0xf]
  %v539 = vld [vmem:[%s3 + $0x74] sm:$0xf]
  %v540 = vld [vmem:[%s3 + $0x78] sm:$0xf]
  %v541 = vld [vmem:[%s3 + $0x7c] sm:$0xf]
  %v542 = vld [vmem:[%s3 + $0x80] sm:$0xf]
  %v543 = vld [vmem:[%s3 + $0x84] sm:$0xf]
  %v544 = vld [vmem:[%s3 + $0x88] sm:$0xf]
  %v545 = vld [vmem:[%s3 + $0x8c] sm:$0xf]
  %v546 = vld [vmem:[%s3 + $0x90] sm:$0xf]
  %v547 = vld [vmem:[%s3 + $0x94] sm:$0xf]
  %v548 = vld [vmem:[%s3 + $0x98] sm:$0xf]
  %v549 = vld [vmem:[%s3 + $0x9c] sm:$0xf]
  %v550 = vld [vmem:[%s3 + $0xa0] sm:$0xf]
  %v551 = vld [vmem:[%s3 + $0xa4] sm:$0xf]
  %v552 = vld [vmem:[%s3 + $0xa8] sm:$0xf]
  %v553 = vld [vmem:[%s3 + $0xac] sm:$0xf]
  %v554 = vld [vmem:[%s3 + $0xb0] sm:$0xf]
  %v555 = vld [vmem:[%s3 + $0xb4] sm:$0xf]
  %v556 = vld [vmem:[%s3 + $0xb8] sm:$0xf]
  %v557 = vld [vmem:[%s3 + $0xbc] sm:$0xf]
  %v558 = vld [vmem:[%s3 + $0xc0] sm:$0xf]
  %v559 = vld [vmem:[%s3 + $0xc4] sm:$0xf]
  %v560 = vld [vmem:[%s3 + $0xc8] sm:$0xf]
  %v561 = vld [vmem:[%s3 + $0xcc] sm:$0xf]
  %v562 = vld [vmem:[%s3 + $0xd0] sm:$0xf]
  %v563 = vld [vmem:[%s3 + $0xd4] sm:$0xf]
  %v564 = vld [vmem:[%s3 + $0xd8] sm:$0xf]
  %v565 = vld [vmem:[%s3 + $0xdc] sm:$0xf]
  %v566 = vld [vmem:[%s3 + $0xe0] sm:$0xf]
  %v567 = vld [vmem:[%s3 + $0xe4] sm:$0xf]
  %v568 = vld [vmem:[%s3 + $0xe8] sm:$0xf]
  %v569 = vld [vmem:[%s3 + $0xec] sm:$0xf]
  %v570 = vld [vmem:[%s3 + $0xf0] sm:$0xf]
  %v571 = vld [vmem:[%s3 + $0xf4] sm:$0xf]
  %v572 = vld [vmem:[%s3 + $0xf8] sm:$0xf]
  %v573 = vld [vmem:[%s3 + $0xfc] sm:$0xf]
  %v574 = vunpack.c.l.bf16 %v510
  %v575 = vunpack.c.l.bf16 %v511
  %v576 = vunpack.c.l.bf16 %v512
  %v577 = vunpack.c.l.bf16 %v513
  %v578 = vunpack.c.l.bf16 %v514
  %v579 = vunpack.c.l.bf16 %v515
  %v580 = vunpack.c.l.bf16 %v516
  %v581 = vunpack.c.l.bf16 %v517
  %v582 = vunpack.c.l.bf16 %v518
  %v583 = vunpack.c.l.bf16 %v519
  %v584 = vunpack.c.l.bf16 %v520
  %v585 = vunpack.c.l.bf16 %v521
  %v586 = vunpack.c.l.bf16 %v522
  %v587 = vunpack.c.l.bf16 %v523
  %v588 = vunpack.c.l.bf16 %v524
  %v589 = vunpack.c.l.bf16 %v525
  %v590 = vunpack.c.l.bf16 %v526
  %v591 = vunpack.c.l.bf16 %v527
  %v592 = vunpack.c.l.bf16 %v528
  %v593 = vunpack.c.l.bf16 %v529
  %v594 = vunpack.c.l.bf16 %v530
  %v595 = vunpack.c.l.bf16 %v531
  %v596 = vunpack.c.l.bf16 %v532
  %v597 = vunpack.c.l.bf16 %v533
  %v598 = vunpack.c.l.bf16 %v534
  %v599 = vunpack.c.l.bf16 %v535
  %v600 = vunpack.c.l.bf16 %v536
  %v601 = vunpack.c.l.bf16 %v537
  %v602 = vunpack.c.l.bf16 %v538
  %v603 = vunpack.c.l.bf16 %v539
  %v604 = vunpack.c.l.bf16 %v540
  %v605 = vunpack.c.l.bf16 %v541
  %v606 = vunpack.c.l.bf16 %v542
  %v607 = vunpack.c.l.bf16 %v543
  %v608 = vunpack.c.l.bf16 %v544
  %v609 = vunpack.c.l.bf16 %v545
  %v610 = vunpack.c.l.bf16 %v546
  %v611 = vunpack.c.l.bf16 %v547
  %v612 = vunpack.c.l.bf16 %v548
  %v613 = vunpack.c.l.bf16 %v549
  %v614 = vunpack.c.l.bf16 %v550
  %v615 = vunpack.c.l.bf16 %v551
  %v616 = vunpack.c.l.bf16 %v552
  %v617 = vunpack.c.l.bf16 %v553
  %v618 = vunpack.c.l.bf16 %v554
  %v619 = vunpack.c.l.bf16 %v555
  %v620 = vunpack.c.l.bf16 %v556
  %v621 = vunpack.c.l.bf16 %v557
  %v622 = vunpack.c.l.bf16 %v558
  %v623 = vunpack.c.l.bf16 %v559
  %v624 = vunpack.c.l.bf16 %v560
  %v625 = vunpack.c.l.bf16 %v561
  %v626 = vunpack.c.l.bf16 %v562
  %v627 = vunpack.c.l.bf16 %v563
  %v628 = vunpack.c.l.bf16 %v564
  %v629 = vunpack.c.l.bf16 %v565
  %v630 = vunpack.c.l.bf16 %v566
  %v631 = vunpack.c.l.bf16 %v567
  %v632 = vunpack.c.l.bf16 %v568
  %v633 = vunpack.c.l.bf16 %v569
  %v634 = vunpack.c.l.bf16 %v570
  %v635 = vunpack.c.l.bf16 %v571
  %v636 = vunpack.c.l.bf16 %v572
  %v637 = vunpack.c.l.bf16 %v573
  %v638 = vadd.f32 %v351, %v574
  %v639 = vadd.f32 %v353, %v575
  %v640 = vadd.f32 %v356, %v576
  %v641 = vadd.f32 %v358, %v577
  %v642 = vadd.f32 %v361, %v578
  %v643 = vadd.f32 %v363, %v579
  %v644 = vadd.f32 %v366, %v580
  %v645 = vadd.f32 %v368, %v581
  %v646 = vadd.f32 %v371, %v582
  %v647 = vadd.f32 %v373, %v583
  %v648 = vadd.f32 %v376, %v584
  %v649 = vadd.f32 %v378, %v585
  %v650 = vadd.f32 %v381, %v586
  %v651 = vadd.f32 %v383, %v587
  %v652 = vadd.f32 %v386, %v588
  %v653 = vadd.f32 %v388, %v589
  %v654 = vadd.f32 %v391, %v590
  %v655 = vadd.f32 %v393, %v591
  %v656 = vadd.f32 %v396, %v592
  %v657 = vadd.f32 %v398, %v593
  %v658 = vadd.f32 %v401, %v594
  %v659 = vadd.f32 %v403, %v595
  %v660 = vadd.f32 %v406, %v596
  %v661 = vadd.f32 %v408, %v597
  %v662 = vadd.f32 %v411, %v598
  %v663 = vadd.f32 %v413, %v599
  %v664 = vadd.f32 %v416, %v600
  %v665 = vadd.f32 %v418, %v601
  %v666 = vadd.f32 %v421, %v602
  %v667 = vadd.f32 %v423, %v603
  %v668 = vadd.f32 %v426, %v604
  %v669 = vadd.f32 %v428, %v605
  %v670 = vadd.f32 %v431, %v606
  %v671 = vadd.f32 %v433, %v607
  %v672 = vadd.f32 %v436, %v608
  %v673 = vadd.f32 %v438, %v609
  %v674 = vadd.f32 %v441, %v610
  %v675 = vadd.f32 %v443, %v611
  %v676 = vadd.f32 %v446, %v612
  %v677 = vadd.f32 %v448, %v613
  %v678 = vadd.f32 %v451, %v614
  %v679 = vadd.f32 %v453, %v615
  %v680 = vadd.f32 %v456, %v616
  %v681 = vadd.f32 %v458, %v617
  %v682 = vadd.f32 %v461, %v618
  %v683 = vadd.f32 %v463, %v619
  %v684 = vadd.f32 %v466, %v620
  %v685 = vadd.f32 %v468, %v621
  %v686 = vadd.f32 %v471, %v622
  %v687 = vadd.f32 %v473, %v623
  %v688 = vadd.f32 %v476, %v624
  %v689 = vadd.f32 %v478, %v625
  %v690 = vadd.f32 %v481, %v626
  %v691 = vadd.f32 %v483, %v627
  %v692 = vadd.f32 %v486, %v628
  %v693 = vadd.f32 %v488, %v629
  %v694 = vadd.f32 %v491, %v630
  %v695 = vadd.f32 %v493, %v631
  %v696 = vadd.f32 %v496, %v632
  %v697 = vadd.f32 %v498, %v633
  %v698 = vadd.f32 %v501, %v634
  %v699 = vadd.f32 %v503, %v635
  %v700 = vadd.f32 %v506, %v636
  %v701 = vadd.f32 %v508, %v637
  %v702 = vmax.f32 %v638, 0.0
  %v703 = vmax.f32 %v639, 0.0
  %v704 = vmax.f32 %v640, 0.0
  %v705 = vmax.f32 %v641, 0.0
  %v706 = vmax.f32 %v642, 0.0
  %v707 = vmax.f32 %v643, 0.0
  %v708 = vmax.f32 %v644, 0.0
  %v709 = vmax.f32 %v645, 0.0
  %v710 = vmax.f32 %v646, 0.0
  %v711 = vmax.f32 %v647, 0.0
  %v712 = vmax.f32 %v648, 0.0
  %v713 = vmax.f32 %v649, 0.0
  %v714 = vmax.f32 %v650, 0.0
  %v715 = vmax.f32 %v651, 0.0
  %v716 = vmax.f32 %v652, 0.0
  %v717 = vmax.f32 %v653, 0.0
  %v718 = vmax.f32 %v654, 0.0
  %v719 = vmax.f32 %v655, 0.0
  %v720 = vmax.f32 %v656, 0.0
  %v721 = vmax.f32 %v657, 0.0
  %v722 = vmax.f32 %v658, 0.0
  %v723 = vmax.f32 %v659, 0.0
  %v724 = vmax.f32 %v660, 0.0
  %v725 = vmax.f32 %v661, 0.0
  %v726 = vmax.f32 %v662, 0.0
  %v727 = vmax.f32 %v663, 0.0
  %v728 = vmax.f32 %v664, 0.0
  %v729 = vmax.f32 %v665, 0.0
  %v730 = vmax.f32 %v666, 0.0
  %v731 = vmax.f32 %v667, 0.0
  %v732 = vmax.f32 %v668, 0.0
  %v733 = vmax.f32 %v669, 0.0
  %v734 = vmax.f32 %v670, 0.0
  %v735 = vmax.f32 %v671, 0.0
  %v736 = vmax.f32 %v672, 0.0
  %v737 = vmax.f32 %v673, 0.0
  %v738 = vmax.f32 %v674, 0.0
  %v739 = vmax.f32 %v675, 0.0
  %v740 = vmax.f32 %v676, 0.0
  %v741 = vmax.f32 %v677, 0.0
  %v742 = vmax.f32 %v678, 0.0
  %v743 = vmax.f32 %v679, 0.0
  %v744 = vmax.f32 %v680, 0.0
  %v745 = vmax.f32 %v681, 0.0
  %v746 = vmax.f32 %v682, 0.0
  %v747 = vmax.f32 %v683, 0.0
  %v748 = vmax.f32 %v684, 0.0
  %v749 = vmax.f32 %v685, 0.0
  %v750 = vmax.f32 %v686, 0.0
  %v751 = vmax.f32 %v687, 0.0
  %v752 = vmax.f32 %v688, 0.0
  %v753 = vmax.f32 %v689, 0.0
  %v754 = vmax.f32 %v690, 0.0
  %v755 = vmax.f32 %v691, 0.0
  %v756 = vmax.f32 %v692, 0.0
  %v757 = vmax.f32 %v693, 0.0
  %v758 = vmax.f32 %v694, 0.0
  %v759 = vmax.f32 %v695, 0.0
  %v760 = vmax.f32 %v696, 0.0
  %v761 = vmax.f32 %v697, 0.0
  %v762 = vmax.f32 %v698, 0.0
  %v763 = vmax.f32 %v699, 0.0
  %v764 = vmax.f32 %v700, 0.0
  %v765 = vmax.f32 %v701, 0.0
  %v766 = vpack.c.bf16 %v702, %v702
  %v767 = vpack.c.bf16 %v703, %v703
  %v768 = vpack.c.bf16 %v704, %v704
  %v769 = vpack.c.bf16 %v705, %v705
  %v770 = vpack.c.bf16 %v706, %v706
  %v771 = vpack.c.bf16 %v707, %v707
  %v772 = vpack.c.bf16 %v708, %v708
  %v773 = vpack.c.bf16 %v709, %v709
  %v774 = vpack.c.bf16 %v710, %v710
  %v775 = vpack.c.bf16 %v711, %v711
  %v776 = vpack.c.bf16 %v712, %v712
  %v777 = vpack.c.bf16 %v713, %v713
  %v778 = vpack.c.bf16 %v714, %v714
  %v779 = vpack.c.bf16 %v715, %v715
  %v780 = vpack.c.bf16 %v716, %v716
  %v781 = vpack.c.bf16 %v717, %v717
  %v782 = vpack.c.bf16 %v718, %v718
  %v783 = vpack.c.bf16 %v719, %v719
  %v784 = vpack.c.bf16 %v720, %v720
  %v785 = vpack.c.bf16 %v721, %v721
  %v786 = vpack.c.bf16 %v722, %v722
  %v787 = vpack.c.bf16 %v723, %v723
  %v788 = vpack.c.bf16 %v724, %v724
  %v789 = vpack.c.bf16 %v725, %v725
  %v790 = vpack.c.bf16 %v726, %v726
  %v791 = vpack.c.bf16 %v727, %v727
  %v792 = vpack.c.bf16 %v728, %v728
  %v793 = vpack.c.bf16 %v729, %v729
  %v794 = vpack.c.bf16 %v730, %v730
  %v795 = vpack.c.bf16 %v731, %v731
  %v796 = vpack.c.bf16 %v732, %v732
  %v797 = vpack.c.bf16 %v733, %v733
  %v798 = vpack.c.bf16 %v734, %v734
  %v799 = vpack.c.bf16 %v735, %v735
  %v800 = vpack.c.bf16 %v736, %v736
  %v801 = vpack.c.bf16 %v737, %v737
  %v802 = vpack.c.bf16 %v738, %v738
  %v803 = vpack.c.bf16 %v739, %v739
  %v804 = vpack.c.bf16 %v740, %v740
  %v805 = vpack.c.bf16 %v741, %v741
  %v806 = vpack.c.bf16 %v742, %v742
  %v807 = vpack.c.bf16 %v743, %v743
  %v808 = vpack.c.bf16 %v744, %v744
  %v809 = vpack.c.bf16 %v745, %v745
  %v810 = vpack.c.bf16 %v746, %v746
  %v811 = vpack.c.bf16 %v747, %v747
  %v812 = vpack.c.bf16 %v748, %v748
  %v813 = vpack.c.bf16 %v749, %v749
  %v814 = vpack.c.bf16 %v750, %v750
  %v815 = vpack.c.bf16 %v751, %v751
  %v816 = vpack.c.bf16 %v752, %v752
  %v817 = vpack.c.bf16 %v753, %v753
  %v818 = vpack.c.bf16 %v754, %v754
  %v819 = vpack.c.bf16 %v755, %v755
  %v820 = vpack.c.bf16 %v756, %v756
  %v821 = vpack.c.bf16 %v757, %v757
  %v822 = vpack.c.bf16 %v758, %v758
  %v823 = vpack.c.bf16 %v759, %v759
  %v824 = vpack.c.bf16 %v760, %v760
  %v825 = vpack.c.bf16 %v761, %v761
  %v826 = vpack.c.bf16 %v762, %v762
  %v827 = vpack.c.bf16 %v763, %v763
  %v828 = vpack.c.bf16 %v764, %v764
  %v829 = vpack.c.bf16 %v765, %v765
  %830 = vst [vmem:[%s4] sm:$0xf] %v766
  %831 = vst [vmem:[%s4 + $0x4] sm:$0xf] %v767
  %832 = vst [vmem:[%s4 + $0x8] sm:$0xf] %v768
  %833 = vst [vmem:[%s4 + $0xc] sm:$0xf] %v769
  %834 = vst [vmem:[%s4 + $0x10] sm:$0xf] %v770
  %835 = vst [vmem:[%s4 + $0x14] sm:$0xf] %v771
  %836 = vst [vmem:[%s4 + $0x18] sm:$0xf] %v772
  %837 = vst [vmem:[%s4 + $0x1c] sm:$0xf] %v773
  %838 = vst [vmem:[%s4 + $0x20] sm:$0xf] %v774
  %839 = vst [vmem:[%s4 + $0x24] sm:$0xf] %v775
  %840 = vst [vmem:[%s4 + $0x28] sm:$0xf] %v776
  %841 = vst [vmem:[%s4 + $0x2c] sm:$0xf] %v777
  %842 = vst [vmem:[%s4 + $0x30] sm:$0xf] %v778
  %843 = vst [vmem:[%s4 + $0x34] sm:$0xf] %v779
  %844 = vst [vmem:[%s4 + $0x38] sm:$0xf] %v780
  %845 = vst [vmem:[%s4 + $0x3c] sm:$0xf] %v781
  %846 = vst [vmem:[%s4 + $0x40] sm:$0xf] %v782
  %847 = vst [vmem:[%s4 + $0x44] sm:$0xf] %v783
  %848 = vst [vmem:[%s4 + $0x48] sm:$0xf] %v784
  %849 = vst [vmem:[%s4 + $0x4c] sm:$0xf] %v785
  %850 = vst [vmem:[%s4 + $0x50] sm:$0xf] %v786
  %851 = vst [vmem:[%s4 + $0x54] sm:$0xf] %v787
  %852 = vst [vmem:[%s4 + $0x58] sm:$0xf] %v788
  %853 = vst [vmem:[%s4 + $0x5c] sm:$0xf] %v789
  %854 = vst [vmem:[%s4 + $0x60] sm:$0xf] %v790
  %855 = vst [vmem:[%s4 + $0x64] sm:$0xf] %v791
  %856 = vst [vmem:[%s4 + $0x68] sm:$0xf] %v792
  %857 = vst [vmem:[%s4 + $0x6c] sm:$0xf] %v793
  %858 = vst [vmem:[%s4 + $0x70] sm:$0xf] %v794
  %859 = vst [vmem:[%s4 + $0x74] sm:$0xf] %v795
  %860 = vst [vmem:[%s4 + $0x78] sm:$0xf] %v796
  %861 = vst [vmem:[%s4 + $0x7c] sm:$0xf] %v797
  %862 = vst [vmem:[%s4 + $0x80] sm:$0xf] %v798
  %863 = vst [vmem:[%s4 + $0x84] sm:$0xf] %v799
  %864 = vst [vmem:[%s4 + $0x88] sm:$0xf] %v800
  %865 = vst [vmem:[%s4 + $0x8c] sm:$0xf] %v801
  %866 = vst [vmem:[%s4 + $0x90] sm:$0xf] %v802
  %867 = vst [vmem:[%s4 + $0x94] sm:$0xf] %v803
  %868 = vst [vmem:[%s4 + $0x98] sm:$0xf] %v804
  %869 = vst [vmem:[%s4 + $0x9c] sm:$0xf] %v805
  %870 = vst [vmem:[%s4 + $0xa0] sm:$0xf] %v806
  %871 = vst [vmem:[%s4 + $0xa4] sm:$0xf] %v807
  %872 = vst [vmem:[%s4 + $0xa8] sm:$0xf] %v808
  %873 = vst [vmem:[%s4 + $0xac] sm:$0xf] %v809
  %874 = vst [vmem:[%s4 + $0xb0] sm:$0xf] %v810
  %875 = vst [vmem:[%s4 + $0xb4] sm:$0xf] %v811
  %876 = vst [vmem:[%s4 + $0xb8] sm:$0xf] %v812
  %877 = vst [vmem:[%s4 + $0xbc] sm:$0xf] %v813
  %878 = vst [vmem:[%s4 + $0xc0] sm:$0xf] %v814
  %879 = vst [vmem:[%s4 + $0xc4] sm:$0xf] %v815
  %880 = vst [vmem:[%s4 + $0xc8] sm:$0xf] %v816
  %881 = vst [vmem:[%s4 + $0xcc] sm:$0xf] %v817
  %882 = vst [vmem:[%s4 + $0xd0] sm:$0xf] %v818
  %883 = vst [vmem:[%s4 + $0xd4] sm:$0xf] %v819
  %884 = vst [vmem:[%s4 + $0xd8] sm:$0xf] %v820
  %885 = vst [vmem:[%s4 + $0xdc] sm:$0xf] %v821
  %886 = vst [vmem:[%s4 + $0xe0] sm:$0xf] %v822
  %887 = vst [vmem:[%s4 + $0xe4] sm:$0xf] %v823
  %888 = vst [vmem:[%s4 + $0xe8] sm:$0xf] %v824
  %889 = vst [vmem:[%s4 + $0xec] sm:$0xf] %v825
  %890 = vst [vmem:[%s4 + $0xf0] sm:$0xf] %v826
  %891 = vst [vmem:[%s4 + $0xf4] sm:$0xf] %v827
  %892 = vst [vmem:[%s4 + $0xf8] sm:$0xf] %v828
  %893 = vst [vmem:[%s4 + $0xfc] sm:$0xf] %v829
  // Predicated region
  $region18: #{_bottleneck_v1b_forward.5} parent=0 // pred_check
    _
  $region19: #{_bottleneck_v1b_forward.5} parent=0 // pred_check_branch
    %895 = sbr.rel (0) target = $region21
  $region20: #{_bottleneck_v1b_forward.5} parent=0 // pred_region
    _
  $region21: #{_bottleneck_v1b_forward.5} parent=0 // pred_fallthru
    _
  // Predicated region
  $region22: #{_bottleneck_v1b_forward.5} parent=0 // pred_check
    _
  $region23: #{_bottleneck_v1b_forward.5} parent=0 // pred_check_branch
    %897 = sbr.rel (0) target = $region25
  $region24: #{_bottleneck_v1b_forward.5} parent=0 // pred_region
    _
  $region25: #{_bottleneck_v1b_forward.5} parent=0 // pred_fallthru
    _

// kernel: _bottleneck_v1b_forward.4
$region0: #{_bottleneck_v1b_forward.4}
  #allocation0 [shape = 'u32[]', space=smem, size = 0x4, offset = 0x4, fixed_abs, tag = 'smem constant byte address 0x4 - core index']
  #allocation1 [shape = 'u32[72,128]{1,0:T(1,128)}', space=vmem, size = 0x9000, scoped, tag = 'internal scratch']
  #allocation2 [shape = 'f32[288,128]{1,0:T(8,128)}', space=vmem, size = 0x24000, scoped, tag = 'scratch operand']
  %s0 = inlined_call_operand.vmem [shape: bf16[2,342,128], index: 0, kind: input, shape index: {}]
  %s1 = inlined_call_operand.vmem [shape: bf16[9,128,128], index: 1, kind: input, shape index: {}]
  %s2 = inlined_call_operand.vmem [shape: f32[1,128], index: 2, kind: input, shape index: {}]
  %s3 = inlined_call_operand.vmem [shape: bf16[2,16,16,128], index: 3, kind: output, shape index: {}]
  %s4 = sld [smem:[#allocation0]]
  $region53: #{_bottleneck_v1b_forward.4} parent=0
    _
  %s6 = ssub.s32 1, %s4
  %s7 = scalar_select 0, %s6, %s4
  loop: start=0, step=1, limit=4
  $region2: #{_bottleneck_v1b_forward.4} parent=0 // loop_pre_header
    _
  $region3: #{_bottleneck_v1b_forward.4} parent=0 // loop_header
    %s9 = sphi 0, %s13
    %p10 = scmp.ge.s32.totalorder %s9, 4
    %s16 = sphi 0, %s35
    %s17 = sphi 0, %s31
    %s18 = sphi 0, %s27
    %s19 = sphi 0, %s16
    %s20 = sphi 0, %s17
    %s21 = sphi 0, %s18
    %s22 = sphi 0, %s19
    %s23 = sphi 0, %s20
    %s24 = sphi 0, %s21
    %s40 = sphi 0, %s42
    %s43 = sphi 0, %s40
    %s44 = sphi 0, %s43
    %s60 = sphi 0, %s44
    %s68 = sphi 0, %s70
    %s71 = sphi 0, %s68
    %s72 = sphi 0, %s71
    %s88 = sphi 0, %s72
    %s94 = sphi 0, %s96
    %s97 = sphi 0, %s94
    %s98 = sphi 0, %s97
    %s114 = sphi 0, %s98
    %s122 = sphi 0, %s124
    %s125 = sphi 0, %s122
    %s126 = sphi 0, %s125
    %s142 = sphi 0, %s126
  $region4: #{_bottleneck_v1b_forward.4} parent=0 // loop_header_branch
    %12 = sbr.rel (%p10) target = $region8
  $region5: #{_bottleneck_v1b_forward.4} parent=0 // loop_body
    %s14 = ssub.s32 %s9, 1
    %s15 = ssub.s32 %s9, 2
    %s25 = sadd.s32 1, %s18
    %p26 = scmp.ge.s32.totalorder %s25, 1
    %s27 = scalar_select %p26, 0, %s25
    %s28 = sadd.s32 1, %s17
    %s29 = scalar_select %p26, %s28, %s17
    %p30 = scmp.ge.s32.totalorder %s29, 1
    %s31 = scalar_select %p30, 0, %s29
    %s32 = sadd.s32 1, %s16
    %s33 = scalar_select %p30, %s32, %s16
    %p34 = scmp.ge.s32.totalorder %s33, 2
    %s35 = scalar_select %p34, 0, %s33
    %s36 = ssub.s32 %s16, %s35
    %s37 = ssub.s32 %s18, %s27
    %s38 = sor.u32 %s36, %s37
    %p39 = scmp.eq.s32.totalorder %s38, 0
    %s41 = sadd.s32 %s40, 1
    %s42 = scalar_select %p39, %s40, %s41
    %p45 = pneg %p39
    %p46 = scmp.eq.s32.totalorder %s9, 1
    %p47 = por %p45, %p46
    %p48 = scmp.ne.s32.totalorder %s40, %s43
    %p49 = scmp.eq.s32.totalorder %s9, 0
    %p50 = por %p48, %p49
    %p51 = scmp.ne.s32.totalorder %s40, %s43
    %p52 = scmp.eq.s32.totalorder %s14, 1
    %p53 = por %p51, %p52
    %p54 = scmp.ne.s32.totalorder %s43, %s44
    %p55 = scmp.eq.s32.totalorder %s14, 0
    %p56 = por %p54, %p55
    %p57 = scmp.ne.s32.totalorder %s43, %s44
    %p58 = scmp.eq.s32.totalorder %s15, 1
    %p59 = por %p57, %p58
    %p61 = scmp.ne.s32.totalorder %s44, %s60
    %p62 = scmp.eq.s32.totalorder %s15, 0
    %p63 = por %p61, %p62
    %s64 = ssub.s32 %s18, %s27
    %s65 = ssub.s32 %s17, %s31
    %s66 = sor.u32 %s64, %s65
    %p67 = scmp.eq.s32.totalorder %s66, 0
    %s69 = sadd.s32 %s68, 1
    %s70 = scalar_select %p67, %s68, %s69
    %p73 = pneg %p67
    %p74 = scmp.eq.s32.totalorder %s9, 1
    %p75 = por %p73, %p74
    %p76 = scmp.ne.s32.totalorder %s68, %s71
    %p77 = scmp.eq.s32.totalorder %s9, 0
    %p78 = por %p76, %p77
    %p79 = scmp.ne.s32.totalorder %s68, %s71
    %p80 = scmp.eq.s32.totalorder %s14, 1
    %p81 = por %p79, %p80
    %p82 = scmp.ne.s32.totalorder %s71, %s72
    %p83 = scmp.eq.s32.totalorder %s14, 0
    %p84 = por %p82, %p83
    %p85 = scmp.ne.s32.totalorder %s71, %s72
    %p86 = scmp.eq.s32.totalorder %s15, 1
    %p87 = por %p85, %p86
    %p89 = scmp.ne.s32.totalorder %s72, %s88
    %p90 = scmp.eq.s32.totalorder %s15, 0
    %p91 = por %p89, %p90
    %s92 = ssub.s32 %s17, %s31
    %p93 = scmp.eq.s32.totalorder %s92, 0
    %s95 = sadd.s32 %s94, 1
    %s96 = scalar_select %p93, %s94, %s95
    %p99 = pneg %p93
    %p100 = scmp.eq.s32.totalorder %s9, 1
    %p101 = por %p99, %p100
    %p102 = scmp.ne.s32.totalorder %s94, %s97
    %p103 = scmp.eq.s32.totalorder %s9, 0
    %p104 = por %p102, %p103
    %p105 = scmp.ne.s32.totalorder %s94, %s97
    %p106 = scmp.eq.s32.totalorder %s14, 1
    %p107 = por %p105, %p106
    %p108 = scmp.ne.s32.totalorder %s97, %s98
    %p109 = scmp.eq.s32.totalorder %s14, 0
    %p110 = por %p108, %p109
    %p111 = scmp.ne.s32.totalorder %s97, %s98
    %p112 = scmp.eq.s32.totalorder %s15, 1
    %p113 = por %p111, %p112
    %p115 = scmp.ne.s32.totalorder %s98, %s114
    %p116 = scmp.eq.s32.totalorder %s15, 0
    %p117 = por %p115, %p116
    %s118 = ssub.s32 %s16, %s35
    %s119 = ssub.s32 %s17, %s31
    %s120 = sor.u32 %s118, %s119
    %p121 = scmp.eq.s32.totalorder %s120, 0
    %s123 = sadd.s32 %s122, 1
    %s124 = scalar_select %p121, %s122, %s123
    %p127 = pneg %p121
    %p128 = scmp.eq.s32.totalorder %s9, 1
    %p129 = por %p127, %p128
    %p130 = scmp.ne.s32.totalorder %s122, %s125
    %p131 = scmp.eq.s32.totalorder %s9, 0
    %p132 = por %p130, %p131
    %p133 = scmp.ne.s32.totalorder %s122, %s125
    %p134 = scmp.eq.s32.totalorder %s14, 1
    %p135 = por %p133, %p134
    %p136 = scmp.ne.s32.totalorder %s125, %s126
    %p137 = scmp.eq.s32.totalorder %s14, 0
    %p138 = por %p136, %p137
    %p139 = scmp.ne.s32.totalorder %s125, %s126
    %p140 = scmp.eq.s32.totalorder %s15, 1
    %p141 = por %p139, %p140
    %p143 = scmp.ne.s32.totalorder %s126, %s142
    %p144 = scmp.eq.s32.totalorder %s15, 0
    %p145 = por %p143, %p144
    %p146 = scmp.le.s32.totalorder 1, %s9
    %p147 = scmp.lt.s32.totalorder %s9, 3
    %p148 = pnand %p146, %p147
    %p149 = pneg %p148
    // Predicated region
    $region9: #{_bottleneck_v1b_forward.4} parent=5 // pred_check
      _
    $region10: #{_bottleneck_v1b_forward.4} parent=5 // pred_check_branch
      %151 = sbr.rel (%p148) target = $region12
    $region11: #{_bottleneck_v1b_forward.4} parent=5 // pred_region
      %s152 = ssub.s32 %s9, 1
      // Predicated region
      $region13: #{_bottleneck_v1b_forward.4} parent=11 // pred_check
        %p153 = pneg %p84
      $region14: #{_bottleneck_v1b_forward.4} parent=11 // pred_check_branch
        %155 = sbr.rel (%p153) target = $region16
      $region15: #{_bottleneck_v1b_forward.4} parent=11 // pred_region
        %s156 = smul.u32 16, %s21
        %p157 = scmp.lt.s32.totalorder %s156, 15
        %s158 = scalar_select %p157, %s156, 15
        %p159 = scmp.lt.s32.totalorder %s20, 0
        %s160 = scalar_select %p159, %s20, 0
        %s161 = sadd.s32 %s160, %s158
        %s162 = smul.addr %s161, 4
        %s163 = scalar_lea.vmem %s1, %s162
        %s164 = smul.u32 16, %s21
      $region16: #{_bottleneck_v1b_forward.4} parent=11 // pred_fallthru
        _
      // Predicated region
      $region17: #{_bottleneck_v1b_forward.4} parent=11 // pred_check
        %p165 = pneg %p110
      $region18: #{_bottleneck_v1b_forward.4} parent=11 // pred_check_branch
        %167 = sbr.rel (%p165) target = $region20
      $region19: #{_bottleneck_v1b_forward.4} parent=11 // pred_region
        %p168 = scmp.lt.s32.totalorder %s20, 0
        %s169 = scalar_select %p168, %s20, 0
        %s170 = scalar_lea.vmem %s2, %s169
      $region20: #{_bottleneck_v1b_forward.4} parent=11 // pred_fallthru
        _
    $region12: #{_bottleneck_v1b_forward.4} parent=5 // pred_fallthru
      _
    %p171 = scmp.lt.s32.totalorder %s9, 2
    // Predicated region
    $region21: #{_bottleneck_v1b_forward.4} parent=5 // pred_check
      %p172 = pneg %p171
    $region22: #{_bottleneck_v1b_forward.4} parent=5 // pred_check_branch
      %174 = sbr.rel (%p172) target = $region24
    $region23: #{_bottleneck_v1b_forward.4} parent=5 // pred_region
      // Predicated region
      $region25: #{_bottleneck_v1b_forward.4} parent=23 // pred_check
        %p175 = pneg %p50
      $region26: #{_bottleneck_v1b_forward.4} parent=23 // pred_check_branch
        %177 = sbr.rel (%p175) target = $region28
      $region27: #{_bottleneck_v1b_forward.4} parent=23 // pred_region
        %p178 = scmp.lt.s32.totalorder %s16, 1
        %s179 = scalar_select %p178, %s16, 1
        %p180 = scmp.lt.s32.totalorder %s18, 0
        %s181 = scalar_select %p180, %s18, 0
        %s182 = smul.addr %s179, 43
        %s183 = sadd.s32 %s181, %s182
        %s184 = smul.addr %s183, 4
        %s185 = scalar_lea.vmem %s0, %s184
      $region28: #{_bottleneck_v1b_forward.4} parent=23 // pred_fallthru
        _
    $region24: #{_bottleneck_v1b_forward.4} parent=5 // pred_fallthru
      _
    %p186 = scmp.le.s32.totalorder 1, %s9
    %p187 = scmp.lt.s32.totalorder %s9, 3
    %p188 = pnand %p186, %p187
    %p189 = pneg %p188
    // Predicated region
    $region29: #{_bottleneck_v1b_forward.4} parent=5 // pred_check
      _
    $region30: #{_bottleneck_v1b_forward.4} parent=5 // pred_check_branch
      %191 = sbr.rel (%p188) target = $region32
    $region31: #{_bottleneck_v1b_forward.4} parent=5 // pred_region
      %s192 = ssub.s32 %s9, 1
      %p193 = scmp.lt.s32.totalorder %s19, 1
      %s194 = scalar_select %p193, %s19, 1
      %p195 = scmp.lt.s32.totalorder %s21, 0
      %s196 = scalar_select %p195, %s21, 0
      %s197 = smul.addr %s194, 43
      %s198 = sadd.s32 %s196, %s197
      %s199 = smul.addr %s198, 4
      %s200 = scalar_lea.vmem %s0, %s199
      %p201 = pneg %p56
      %p202 = pneg %p53
      %s203 = smul.u32 16, %s21
      %p204 = scmp.lt.s32.totalorder %s203, 15
      %s205 = scalar_select %p204, %s203, 15
      %p206 = scmp.lt.s32.totalorder %s20, 0
      %s207 = scalar_select %p206, %s20, 0
      %s208 = sadd.s32 %s207, %s205
      %s209 = smul.addr %s208, 4
      %s210 = scalar_lea.vmem %s1, %s209
      %p211 = pneg %p84
      %p212 = pneg %p81
      %p213 = scmp.lt.s32.totalorder %s20, 0
      %s214 = scalar_select %p213, %s20, 0
      %s215 = scalar_lea.vmem %s2, %s214
      %p216 = pneg %p110
      %p217 = pneg %p107
      %p218 = pneg %p138
      %p219 = pneg %p135
      %p220 = scmp.lt.s32.totalorder %s19, 1
      %s221 = scalar_select %p220, %s19, 1
      %p222 = scmp.lt.s32.totalorder %s20, 0
      %s223 = scalar_select %p222, %s20, 0
      %s224 = smul.addr %s221, 32
      %s225 = sadd.s32 %s223, %s224
      %s226 = smul.addr %s225, 4
      %s227 = scalar_lea.vmem %s3, %s226
      %p228 = scmp.lt.s32.totalorder %s19, 1
      %s229 = scalar_select %p228, %s19, 1
      %p230 = scmp.lt.s32.totalorder %s21, 0
      %s231 = scalar_select %p230, %s21, 0
      %s232 = smul.addr %s229, 43
      %s233 = sadd.s32 %s231, %s232
      %s234 = smul.addr %s233, 4
      %s235 = scalar_lea.vmem %s0, %s234
      %s236 = smul.u32 16, %s21
      %p237 = scmp.lt.s32.totalorder %s236, 15
      %s238 = scalar_select %p237, %s236, 15
      %p239 = scmp.lt.s32.totalorder %s20, 0
      %s240 = scalar_select %p239, %s20, 0
      %s241 = sadd.s32 %s240, %s238
      %s242 = smul.addr %s241, 4
      %s243 = scalar_lea.vmem %s1, %s242
      %s244 = smul.u32 16, %s21
      %p245 = scmp.lt.s32.totalorder %s20, 0
      %s246 = scalar_select %p245, %s20, 0
      %s247 = scalar_lea.vmem %s2, %s246
      %p248 = scmp.lt.s32.totalorder %s19, 1
      %s249 = scalar_select %p248, %s19, 1
      %p250 = scmp.lt.s32.totalorder %s20, 0
      %s251 = scalar_select %p250, %s20, 0
      %s252 = smul.addr %s249, 32
      %s253 = sadd.s32 %s251, %s252
      %s254 = smul.addr %s253, 4
      %s255 = scalar_lea.vmem %s3, %s254
      %p256 = scmp.eq.s32.totalorder %s21, 0
      // Predicated region
      $region33: #{_bottleneck_v1b_forward.4} parent=31 // pred_check
        %p257 = pneg %p256
      $region34: #{_bottleneck_v1b_forward.4} parent=31 // pred_check_branch
        %259 = sbr.rel (%p257) target = $region36
      $region35: #{_bottleneck_v1b_forward.4} parent=31 // pred_region
        %260 = vst [vmem:[#allocation2] sm:$0xff] 0.0
        %261 = vst [vmem:[#allocation2 + $0x8] sm:$0xff] 0.0
        %262 = vst [vmem:[#allocation2 + $0x10] sm:$0xff] 0.0
        %263 = vst [vmem:[#allocation2 + $0x18] sm:$0xff] 0.0
        %264 = vst [vmem:[#allocation2 + $0x20] sm:$0xff] 0.0
        %265 = vst [vmem:[#allocation2 + $0x28] sm:$0xff] 0.0
        %266 = vst [vmem:[#allocation2 + $0x30] sm:$0xff] 0.0
        %267 = vst [vmem:[#allocation2 + $0x38] sm:$0xff] 0.0
        %268 = vst [vmem:[#allocation2 + $0x40] sm:$0xff] 0.0
        %269 = vst [vmem:[#allocation2 + $0x48] sm:$0xff] 0.0
        %270 = vst [vmem:[#allocation2 + $0x50] sm:$0xff] 0.0
        %271 = vst [vmem:[#allocation2 + $0x58] sm:$0xff] 0.0
        %272 = vst [vmem:[#allocation2 + $0x60] sm:$0xff] 0.0
        %273 = vst [vmem:[#allocation2 + $0x68] sm:$0xff] 0.0
        %274 = vst [vmem:[#allocation2 + $0x70] sm:$0xff] 0.0
        %275 = vst [vmem:[#allocation2 + $0x78] sm:$0xff] 0.0
        %276 = vst [vmem:[#allocation2 + $0x80] sm:$0xff] 0.0
        %277 = vst [vmem:[#allocation2 + $0x88] sm:$0xff] 0.0
        %278 = vst [vmem:[#allocation2 + $0x90] sm:$0xff] 0.0
        %279 = vst [vmem:[#allocation2 + $0x98] sm:$0xff] 0.0
        %280 = vst [vmem:[#allocation2 + $0xa0] sm:$0xff] 0.0
        %281 = vst [vmem:[#allocation2 + $0xa8] sm:$0xff] 0.0
        %282 = vst [vmem:[#allocation2 + $0xb0] sm:$0xff] 0.0
        %283 = vst [vmem:[#allocation2 + $0xb8] sm:$0xff] 0.0
        %284 = vst [vmem:[#allocation2 + $0xc0] sm:$0xff] 0.0
        %285 = vst [vmem:[#allocation2 + $0xc8] sm:$0xff] 0.0
        %286 = vst [vmem:[#allocation2 + $0xd0] sm:$0xff] 0.0
        %287 = vst [vmem:[#allocation2 + $0xd8] sm:$0xff] 0.0
        %288 = vst [vmem:[#allocation2 + $0xe0] sm:$0xff] 0.0
        %289 = vst [vmem:[#allocation2 + $0xe8] sm:$0xff] 0.0
        %290 = vst [vmem:[#allocation2 + $0xf0] sm:$0xff] 0.0
        %291 = vst [vmem:[#allocation2 + $0xf8] sm:$0xff] 0.0
        %292 = vst [vmem:[#allocation2 + $0x100] sm:$0xff] 0.0
        %293 = vst [vmem:[#allocation2 + $0x108] sm:$0xff] 0.0
        %294 = vst [vmem:[#allocation2 + $0x110] sm:$0xff] 0.0
        %295 = vst [vmem:[#allocation2 + $0x118] sm:$0xff] 0.0
      $region36: #{_bottleneck_v1b_forward.4} parent=31 // pred_fallthru
        _
      %v296 = vld [vmem:[%s235] sm:$0xf]
      %v297 = vld [vmem:[%s235 + $0x4] sm:$0xf]
      %v298 = vld [vmem:[%s235 + $0x8] sm:$0xf]
      %v299 = vld [vmem:[%s235 + $0xc] sm:$0xf]
      %v300 = vld [vmem:[%s235 + $0x10] sm:$0xf]
      %v301 = vld [vmem:[%s235 + $0x14] sm:$0xf]
      %v302 = vld [vmem:[%s235 + $0x18] sm:$0xf]
      %v303 = vld [vmem:[%s235 + $0x1c] sm:$0xf]
      %v304 = vld [vmem:[%s235 + $0x20] sm:$0xf]
      %v305 = vld [vmem:[%s235 + $0x24] sm:$0xf]
      %v306 = vld [vmem:[%s235 + $0x28] sm:$0xf]
      %v307 = vld [vmem:[%s235 + $0x2c] sm:$0xf]
      %v308 = vld [vmem:[%s235 + $0x30] sm:$0xf]
      %v309 = vld [vmem:[%s235 + $0x34] sm:$0xf]
      %v310 = vld [vmem:[%s235 + $0x38] sm:$0xf]
      %v311 = vld [vmem:[%s235 + $0x3c] sm:$0xf]
      %v312 = vld [vmem:[%s235 + $0x40] sm:$0xf]
      %v313 = vld [vmem:[%s235 + $0x44] sm:$0xf]
      %v314 = vld [vmem:[%s235 + $0x48] sm:$0xf]
      %v315 = vld [vmem:[%s235 + $0x4c] sm:$0xf]
      %v316 = vld [vmem:[%s235 + $0x50] sm:$0xf]
      %v317 = vld [vmem:[%s235 + $0x54] sm:$0xf]
      %v318 = vld [vmem:[%s235 + $0x58] sm:$0xf]
      %v319 = vld [vmem:[%s235 + $0x5c] sm:$0xf]
      %v320 = vld [vmem:[%s235 + $0x60] sm:$0xf]
      %v321 = vld [vmem:[%s235 + $0x64] sm:$0xf]
      %v322 = vld [vmem:[%s235 + $0x68] sm:$0xf]
      %v323 = vld [vmem:[%s235 + $0x6c] sm:$0xf]
      %v324 = vld [vmem:[%s235 + $0x70] sm:$0xf]
      %v325 = vld [vmem:[%s235 + $0x74] sm:$0xf]
      %v326 = vld [vmem:[%s235 + $0x78] sm:$0xf]
      %v327 = vld [vmem:[%s235 + $0x7c] sm:$0xf]
      %v328 = vld [vmem:[%s235 + $0x80] sm:$0xf]
      %v329 = vld [vmem:[%s235 + $0x84] sm:$0xf]
      %v330 = vld [vmem:[%s235 + $0x88] sm:$0xf]
      %v331 = vld [vmem:[%s235 + $0x8c] sm:$0xf]
      %v332 = vld [vmem:[%s243] sm:$0xf]
      %v333 = vld [vmem:[%s243 + $0x4] sm:$0xf]
      %v334 = vld [vmem:[%s243 + $0x8] sm:$0xf]
      %v335 = vld [vmem:[%s243 + $0xc] sm:$0xf]
      %v336 = vld [vmem:[%s243 + $0x10] sm:$0xf]
      %v337 = vld [vmem:[%s243 + $0x14] sm:$0xf]
      %v338 = vld [vmem:[%s243 + $0x18] sm:$0xf]
      %v339 = vld [vmem:[%s243 + $0x1c] sm:$0xf]
      %v340 = vld [vmem:[%s243 + $0x20] sm:$0xf]
      %v341 = vld [vmem:[%s243 + $0x24] sm:$0xf]
      %v342 = vld [vmem:[%s243 + $0x28] sm:$0xf]
      %v343 = vld [vmem:[%s243 + $0x2c] sm:$0xf]
      %v344 = vld [vmem:[%s243 + $0x30] sm:$0xf]
      %v345 = vld [vmem:[%s243 + $0x34] sm:$0xf]
      %v346 = vld [vmem:[%s243 + $0x38] sm:$0xf]
      %v347 = vld [vmem:[%s243 + $0x3c] sm:$0xf]
      %v348 = vld [vmem:[%s235 + $0x90] sm:$0x1]
      %s349 = scalar_lea.vmem %s243, 64
      %v350 = vld [vmem:[%s349] sm:$0xf]
      %v351 = vld [vmem:[%s349 + $0x4] sm:$0xf]
      %v352 = vld [vmem:[%s349 + $0x8] sm:$0xf]
      %v353 = vld [vmem:[%s349 + $0xc] sm:$0xf]
      %v354 = vld [vmem:[%s349 + $0x10] sm:$0xf]
      %v355 = vld [vmem:[%s349 + $0x14] sm:$0xf]
      %v356 = vld [vmem:[%s349 + $0x18] sm:$0xf]
      %v357 = vld [vmem:[%s349 + $0x1c] sm:$0xf]
      %v358 = vld [vmem:[%s349 + $0x20] sm:$0xf]
      %v359 = vld [vmem:[%s349 + $0x24] sm:$0xf]
      %v360 = vld [vmem:[%s349 + $0x28] sm:$0xf]
      %v361 = vld [vmem:[%s349 + $0x2c] sm:$0xf]
      %v362 = vld [vmem:[%s349 + $0x30] sm:$0xf]
      %v363 = vld [vmem:[%s349 + $0x34] sm:$0xf]
      %v364 = vld [vmem:[%s349 + $0x38] sm:$0xf]
      %v365 = vld [vmem:[%s349 + $0x3c] sm:$0xf]
      %v403 = vunpack.c.l.b16 %v296
      %v404 = vunpack.c.l.b16 %v297
      %v405 = vunpack.c.l.b16 %v298
      %v406 = vunpack.c.l.b16 %v299
      %v407 = vunpack.c.l.b16 %v300
      %v408 = vunpack.c.l.b16 %v301
      %v409 = vunpack.c.l.b16 %v302
      %v410 = vunpack.c.l.b16 %v303
      %v411 = vunpack.c.l.b16 %v304
      %v412 = vunpack.c.l.b16 %v305
      %v413 = vunpack.c.l.b16 %v306
      %v414 = vunpack.c.l.b16 %v307
      %v415 = vunpack.c.l.b16 %v308
      %v416 = vunpack.c.l.b16 %v309
      %v417 = vunpack.c.l.b16 %v310
      %v418 = vunpack.c.l.b16 %v311
      %v419 = vunpack.c.l.b16 %v312
      %v420 = vunpack.c.l.b16 %v313
      %v421 = vunpack.c.l.b16 %v314
      %v422 = vunpack.c.l.b16 %v315
      %v423 = vunpack.c.l.b16 %v316
      %v424 = vunpack.c.l.b16 %v317
      %v425 = vunpack.c.l.b16 %v318
      %v426 = vunpack.c.l.b16 %v319
      %v427 = vunpack.c.l.b16 %v320
      %v428 = vunpack.c.l.b16 %v321
      %v429 = vunpack.c.l.b16 %v322
      %v430 = vunpack.c.l.b16 %v323
      %v431 = vunpack.c.l.b16 %v324
      %v432 = vunpack.c.l.b16 %v325
      %v433 = vunpack.c.l.b16 %v326
      %v434 = vunpack.c.l.b16 %v327
      %v435 = vunpack.c.l.b16 %v328
      %v436 = vunpack.c.l.b16 %v329
      %v437 = vunpack.c.l.b16 %v330
      %v438 = vunpack.c.l.b16 %v331
      %v439 = vunpack.c.l.b16 %v348
      %v440 = vpack.c.b16 %v404, %v403
      %v441 = vpack.c.b16 %v406, %v405
      %v442 = vpack.c.b16 %v408, %v407
      %v443 = vpack.c.b16 %v410, %v409
      %v444 = vpack.c.b16 %v412, %v411
      %v445 = vpack.c.b16 %v414, %v413
      %v446 = vpack.c.b16 %v416, %v415
      %v447 = vpack.c.b16 %v418, %v417
      %v448 = vpack.c.b16 %v420, %v419
      %v449 = vpack.c.b16 %v422, %v421
      %v450 = vpack.c.b16 %v424, %v423
      %v451 = vpack.c.b16 %v426, %v425
      %v452 = vpack.c.b16 %v428, %v427
      %v453 = vpack.c.b16 %v430, %v429
      %v454 = vpack.c.b16 %v432, %v431
      %v455 = vpack.c.b16 %v434, %v433
      %v456 = vpack.c.b16 %v436, %v435
      %v457 = vpack.c.b16 %v438, %v437
      %v458 = vpack.c.b16 %v439, %v439
      %vm459 = vsmask.f32 7424
      %v461 = vshrl.u32 %v440, 16
      %v463 = vshll.u32 %v440, 16
      %v465 = vrot.slane %v463, 1
      %v466 = vor.u32 %v461, %v465
      %v468 = vshll.u32 %v441, 16
      %v470 = vrot.slane %v468, 1
      %v471 = vsel %vm459, %v466, %v470
      %v472 = vshrl.u32 %v441, 16
      %v474 = vor.u32 %v472, %v470
      %v476 = vshll.u32 %v442, 16
      %v478 = vrot.slane %v476, 1
      %v479 = vsel %vm459, %v474, %v478
      %v480 = vshrl.u32 %v442, 16
      %v482 = vor.u32 %v480, %v478
      %v484 = vshll.u32 %v443, 16
      %v486 = vrot.slane %v484, 1
      %v487 = vsel %vm459, %v482, %v486
      %v488 = vshrl.u32 %v443, 16
      %v490 = vor.u32 %v488, %v486
      %v492 = vshll.u32 %v444, 16
      %v494 = vrot.slane %v492, 1
      %v495 = vsel %vm459, %v490, %v494
      %v496 = vshrl.u32 %v444, 16
      %v498 = vor.u32 %v496, %v494
      %v500 = vshll.u32 %v445, 16
      %v502 = vrot.slane %v500, 1
      %v503 = vsel %vm459, %v498, %v502
      %v504 = vshrl.u32 %v445, 16
      %v506 = vor.u32 %v504, %v502
      %v508 = vshll.u32 %v446, 16
      %v510 = vrot.slane %v508, 1
      %v511 = vsel %vm459, %v506, %v510
      %v512 = vshrl.u32 %v446, 16
      %v514 = vor.u32 %v512, %v510
      %v516 = vshll.u32 %v447, 16
      %v518 = vrot.slane %v516, 1
      %v519 = vsel %vm459, %v514, %v518
      %v520 = vshrl.u32 %v447, 16
      %v522 = vor.u32 %v520, %v518
      %v524 = vshll.u32 %v448, 16
      %v526 = vrot.slane %v524, 1
      %v527 = vsel %vm459, %v522, %v526
      %v528 = vshrl.u32 %v448, 16
      %v530 = vor.u32 %v528, %v526
      %v532 = vshll.u32 %v449, 16
      %v534 = vrot.slane %v532, 1
      %v535 = vsel %vm459, %v530, %v534
      %v536 = vshrl.u32 %v449, 16
      %v538 = vor.u32 %v536, %v534
      %v540 = vshll.u32 %v450, 16
      %v542 = vrot.slane %v540, 1
      %v543 = vsel %vm459, %v538, %v542
      %v544 = vshrl.u32 %v450, 16
      %v546 = vor.u32 %v544, %v542
      %v548 = vshll.u32 %v451, 16
      %v550 = vrot.slane %v548, 1
      %v551 = vsel %vm459, %v546, %v550
      %v552 = vshrl.u32 %v451, 16
      %v554 = vor.u32 %v552, %v550
      %v556 = vshll.u32 %v452, 16
      %v558 = vrot.slane %v556, 1
      %v559 = vsel %vm459, %v554, %v558
      %v560 = vshrl.u32 %v452, 16
      %v562 = vor.u32 %v560, %v558
      %v564 = vshll.u32 %v453, 16
      %v566 = vrot.slane %v564, 1
      %v567 = vsel %vm459, %v562, %v566
      %v568 = vshrl.u32 %v453, 16
      %v570 = vor.u32 %v568, %v566
      %v572 = vshll.u32 %v454, 16
      %v574 = vrot.slane %v572, 1
      %v575 = vsel %vm459, %v570, %v574
      %v576 = vshrl.u32 %v454, 16
      %v578 = vor.u32 %v576, %v574
      %v580 = vshll.u32 %v455, 16
      %v582 = vrot.slane %v580, 1
      %v583 = vsel %vm459, %v578, %v582
      %v584 = vshrl.u32 %v455, 16
      %v586 = vor.u32 %v584, %v582
      %v588 = vshll.u32 %v456, 16
      %v590 = vrot.slane %v588, 1
      %v591 = vsel %vm459, %v586, %v590
      %v592 = vshrl.u32 %v456, 16
      %v594 = vor.u32 %v592, %v590
      %v596 = vshll.u32 %v457, 16
      %v598 = vrot.slane %v596, 1
      %v599 = vsel %vm459, %v594, %v598
      %v600 = vshrl.u32 %v457, 16
      %v602 = vor.u32 %v600, %v598
      %v604 = vshll.u32 %v458, 16
      %v606 = vrot.slane %v604, 1
      %v607 = vsel %vm459, %v602, %v606
      %v642 = vunpack.c.l.b16 %v350
      %v643 = vunpack.c.l.b16 %v351
      %v644 = vunpack.c.l.b16 %v352
      %v645 = vunpack.c.l.b16 %v353
      %v646 = vunpack.c.l.b16 %v354
      %v647 = vunpack.c.l.b16 %v355
      %v648 = vunpack.c.l.b16 %v356
      %v649 = vunpack.c.l.b16 %v357
      %v650 = vunpack.c.l.b16 %v358
      %v651 = vunpack.c.l.b16 %v359
      %v652 = vunpack.c.l.b16 %v360
      %v653 = vunpack.c.l.b16 %v361
      %v654 = vunpack.c.l.b16 %v362
      %v655 = vunpack.c.l.b16 %v363
      %v656 = vunpack.c.l.b16 %v364
      %v657 = vunpack.c.l.b16 %v365
      %v658 = vpack.c.b16 %v643, %v642
      %v659 = vpack.c.b16 %v645, %v644
      %v660 = vpack.c.b16 %v647, %v646
      %v661 = vpack.c.b16 %v649, %v648
      %v662 = vpack.c.b16 %v651, %v650
      %v663 = vpack.c.b16 %v653, %v652
      %v664 = vpack.c.b16 %v655, %v654
      %v665 = vpack.c.b16 %v657, %v656
      %674 = vmatpush.bf16.msra.mxu0 %v665
      %675 = vmatpush.bf16.msra.mxu0 %v664
      %676 = vmatpush.bf16.msra.mxu0 %v663
      %677 = vmatpush.bf16.msra.mxu0 %v662
      %678 = vmatpush.bf16.msra.mxu0 %v661
      %679 = vmatpush.bf16.msra.mxu0 %v660
      %680 = vmatpush.bf16.msra.mxu0 %v659
      %681 = vmatpush.bf16.msra.mxu0 %v658
      %682 = vmatmul.bf16.gmra.mxu0 %v471
      %v683 = vpop.f32.mrf.mxu0
      %v684 = vadd.f32 0.0, %v683
      %v685 = vpop.f32.mrf.mxu0
      %v686 = vadd.f32 0.0, %v685
      %687 = vmatmul.bf16.gmra.mxu0 %v479
      %v688 = vpop.f32.mrf.mxu0
      %v689 = vadd.f32 0.0, %v688
      %v690 = vpop.f32.mrf.mxu0
      %v691 = vadd.f32 0.0, %v690
      %692 = vmatmul.bf16.gmra.mxu0 %v487
      %v693 = vpop.f32.mrf.mxu0
      %v694 = vadd.f32 0.0, %v693
      %v695 = vpop.f32.mrf.mxu0
      %v696 = vadd.f32 0.0, %v695
      %697 = vmatmul.bf16.gmra.mxu0 %v495
      %v698 = vpop.f32.mrf.mxu0
      %v699 = vadd.f32 0.0, %v698
      %v700 = vpop.f32.mrf.mxu0
      %v701 = vadd.f32 0.0, %v700
      %702 = vmatmul.bf16.gmra.mxu0 %v503
      %v703 = vpop.f32.mrf.mxu0
      %v704 = vadd.f32 0.0, %v703
      %v705 = vpop.f32.mrf.mxu0
      %v706 = vadd.f32 0.0, %v705
      %707 = vmatmul.bf16.gmra.mxu0 %v511
      %v708 = vpop.f32.mrf.mxu0
      %v709 = vadd.f32 0.0, %v708
      %v710 = vpop.f32.mrf.mxu0
      %v711 = vadd.f32 0.0, %v710
      %712 = vmatmul.bf16.gmra.mxu0 %v519
      %v713 = vpop.f32.mrf.mxu0
      %v714 = vadd.f32 0.0, %v713
      %v715 = vpop.f32.mrf.mxu0
      %v716 = vadd.f32 0.0, %v715
      %717 = vmatmul.bf16.gmra.mxu0 %v527
      %v718 = vpop.f32.mrf.mxu0
      %v719 = vadd.f32 0.0, %v718
      %v720 = vpop.f32.mrf.mxu0
      %v721 = vadd.f32 0.0, %v720
      %722 = vmatmul.bf16.gmra.mxu0 %v535
      %v723 = vpop.f32.mrf.mxu0
      %v724 = vadd.f32 0.0, %v723
      %v725 = vpop.f32.mrf.mxu0
      %v726 = vadd.f32 0.0, %v725
      %727 = vmatmul.bf16.gmra.mxu0 %v543
      %v728 = vpop.f32.mrf.mxu0
      %v729 = vadd.f32 0.0, %v728
      %v730 = vpop.f32.mrf.mxu0
      %v731 = vadd.f32 0.0, %v730
      %732 = vmatmul.bf16.gmra.mxu0 %v551
      %v733 = vpop.f32.mrf.mxu0
      %v734 = vadd.f32 0.0, %v733
      %v735 = vpop.f32.mrf.mxu0
      %v736 = vadd.f32 0.0, %v735
      %737 = vmatmul.bf16.gmra.mxu0 %v559
      %v738 = vpop.f32.mrf.mxu0
      %v739 = vadd.f32 0.0, %v738
      %v740 = vpop.f32.mrf.mxu0
      %v741 = vadd.f32 0.0, %v740
      %742 = vmatmul.bf16.gmra.mxu0 %v567
      %v743 = vpop.f32.mrf.mxu0
      %v744 = vadd.f32 0.0, %v743
      %v745 = vpop.f32.mrf.mxu0
      %v746 = vadd.f32 0.0, %v745
      %747 = vmatmul.bf16.gmra.mxu0 %v575
      %v748 = vpop.f32.mrf.mxu0
      %v749 = vadd.f32 0.0, %v748
      %v750 = vpop.f32.mrf.mxu0
      %v751 = vadd.f32 0.0, %v750
      %752 = vmatmul.bf16.gmra.mxu0 %v583
      %v753 = vpop.f32.mrf.mxu0
      %v754 = vadd.f32 0.0, %v753
      %v755 = vpop.f32.mrf.mxu0
      %v756 = vadd.f32 0.0, %v755
      %757 = vmatmul.bf16.gmra.mxu0 %v591
      %v758 = vpop.f32.mrf.mxu0
      %v759 = vadd.f32 0.0, %v758
      %v760 = vpop.f32.mrf.mxu0
      %v761 = vadd.f32 0.0, %v760
      %762 = vmatmul.bf16.gmra.mxu0 %v599
      %v763 = vpop.f32.mrf.mxu0
      %v764 = vadd.f32 0.0, %v763
      %v765 = vpop.f32.mrf.mxu0
      %v766 = vadd.f32 0.0, %v765
      %767 = vmatmul.bf16.gmra.mxu0 %v607
      %v768 = vpop.f32.mrf.mxu0
      %v769 = vadd.f32 0.0, %v768
      %v770 = vpop.f32.mrf.mxu0
      %v771 = vadd.f32 0.0, %v770
      %772 = vdwg.mxu0
      %v807 = vunpack.c.l.b16 %v332
      %v808 = vunpack.c.l.b16 %v333
      %v809 = vunpack.c.l.b16 %v334
      %v810 = vunpack.c.l.b16 %v335
      %v811 = vunpack.c.l.b16 %v336
      %v812 = vunpack.c.l.b16 %v337
      %v813 = vunpack.c.l.b16 %v338
      %v814 = vunpack.c.l.b16 %v339
      %v815 = vunpack.c.l.b16 %v340
      %v816 = vunpack.c.l.b16 %v341
      %v817 = vunpack.c.l.b16 %v342
      %v818 = vunpack.c.l.b16 %v343
      %v819 = vunpack.c.l.b16 %v344
      %v820 = vunpack.c.l.b16 %v345
      %v821 = vunpack.c.l.b16 %v346
      %v822 = vunpack.c.l.b16 %v347
      %v823 = vpack.c.b16 %v808, %v807
      %v824 = vpack.c.b16 %v810, %v809
      %v825 = vpack.c.b16 %v812, %v811
      %v826 = vpack.c.b16 %v814, %v813
      %v827 = vpack.c.b16 %v816, %v815
      %v828 = vpack.c.b16 %v818, %v817
      %v829 = vpack.c.b16 %v820, %v819
      %v830 = vpack.c.b16 %v822, %v821
      %839 = vmatpush.bf16.msra.mxu0 %v830
      %840 = vmatpush.bf16.msra.mxu0 %v829
      %841 = vmatpush.bf16.msra.mxu0 %v828
      %842 = vmatpush.bf16.msra.mxu0 %v827
      %843 = vmatpush.bf16.msra.mxu0 %v826
      %844 = vmatpush.bf16.msra.mxu0 %v825
      %845 = vmatpush.bf16.msra.mxu0 %v824
      %846 = vmatpush.bf16.msra.mxu0 %v823
      %847 = vmatmul.bf16.gmra.mxu0 %v440
      %v848 = vpop.f32.mrf.mxu0
      %v849 = vadd.f32 %v684, %v848
      %v850 = vpop.f32.mrf.mxu0
      %v851 = vadd.f32 %v686, %v850
      %852 = vmatmul.bf16.gmra.mxu0 %v441
      %v853 = vpop.f32.mrf.mxu0
      %v854 = vadd.f32 %v689, %v853
      %v855 = vpop.f32.mrf.mxu0
      %v856 = vadd.f32 %v691, %v855
      %857 = vmatmul.bf16.gmra.mxu0 %v442
      %v858 = vpop.f32.mrf.mxu0
      %v859 = vadd.f32 %v694, %v858
      %v860 = vpop.f32.mrf.mxu0
      %v861 = vadd.f32 %v696, %v860
      %862 = vmatmul.bf16.gmra.mxu0 %v443
      %v863 = vpop.f32.mrf.mxu0
      %v864 = vadd.f32 %v699, %v863
      %v865 = vpop.f32.mrf.mxu0
      %v866 = vadd.f32 %v701, %v865
      %867 = vmatmul.bf16.gmra.mxu0 %v444
      %v868 = vpop.f32.mrf.mxu0
      %v869 = vadd.f32 %v704, %v868
      %v870 = vpop.f32.mrf.mxu0
      %v871 = vadd.f32 %v706, %v870
      %872 = vmatmul.bf16.gmra.mxu0 %v445
      %v873 = vpop.f32.mrf.mxu0
      %v874 = vadd.f32 %v709, %v873
      %v875 = vpop.f32.mrf.mxu0
      %v876 = vadd.f32 %v711, %v875
      %877 = vmatmul.bf16.gmra.mxu0 %v446
      %v878 = vpop.f32.mrf.mxu0
      %v879 = vadd.f32 %v714, %v878
      %v880 = vpop.f32.mrf.mxu0
      %v881 = vadd.f32 %v716, %v880
      %882 = vmatmul.bf16.gmra.mxu0 %v447
      %v883 = vpop.f32.mrf.mxu0
      %v884 = vadd.f32 %v719, %v883
      %v885 = vpop.f32.mrf.mxu0
      %v886 = vadd.f32 %v721, %v885
      %887 = vmatmul.bf16.gmra.mxu0 %v448
      %v888 = vpop.f32.mrf.mxu0
      %v889 = vadd.f32 %v724, %v888
      %v890 = vpop.f32.mrf.mxu0
      %v891 = vadd.f32 %v726, %v890
      %892 = vmatmul.bf16.gmra.mxu0 %v449
      %v893 = vpop.f32.mrf.mxu0
      %v894 = vadd.f32 %v729, %v893
      %v895 = vpop.f32.mrf.mxu0
      %v896 = vadd.f32 %v731, %v895
      %897 = vmatmul.bf16.gmra.mxu0 %v450
      %v898 = vpop.f32.mrf.mxu0
      %v899 = vadd.f32 %v734, %v898
      %v900 = vpop.f32.mrf.mxu0
      %v901 = vadd.f32 %v736, %v900
      %902 = vmatmul.bf16.gmra.mxu0 %v451
      %v903 = vpop.f32.mrf.mxu0
      %v904 = vadd.f32 %v739, %v903
      %v905 = vpop.f32.mrf.mxu0
      %v906 = vadd.f32 %v741, %v905
      %907 = vmatmul.bf16.gmra.mxu0 %v452
      %v908 = vpop.f32.mrf.mxu0
      %v909 = vadd.f32 %v744, %v908
      %v910 = vpop.f32.mrf.mxu0
      %v911 = vadd.f32 %v746, %v910
      %912 = vmatmul.bf16.gmra.mxu0 %v453
      %v913 = vpop.f32.mrf.mxu0
      %v914 = vadd.f32 %v749, %v913
      %v915 = vpop.f32.mrf.mxu0
      %v916 = vadd.f32 %v751, %v915
      %917 = vmatmul.bf16.gmra.mxu0 %v454
      %v918 = vpop.f32.mrf.mxu0
      %v919 = vadd.f32 %v754, %v918
      %v920 = vpop.f32.mrf.mxu0
      %v921 = vadd.f32 %v756, %v920
      %922 = vmatmul.bf16.gmra.mxu0 %v455
      %v923 = vpop.f32.mrf.mxu0
      %v924 = vadd.f32 %v759, %v923
      %v925 = vpop.f32.mrf.mxu0
      %v926 = vadd.f32 %v761, %v925
      %927 = vmatmul.bf16.gmra.mxu0 %v456
      %v928 = vpop.f32.mrf.mxu0
      %v929 = vadd.f32 %v764, %v928
      %v930 = vpop.f32.mrf.mxu0
      %v931 = vadd.f32 %v766, %v930
      %932 = vmatmul.bf16.gmra.mxu0 %v457
      %v933 = vpop.f32.mrf.mxu0
      %v934 = vadd.f32 %v769, %v933
      %v935 = vpop.f32.mrf.mxu0
      %v936 = vadd.f32 %v771, %v935
      %937 = vdwg.mxu0
      %v938 = vld [vmem:[%s235] sm:$0xe]
      %s939 = scalar_lea.vmem %s243, 128
      %v940 = vld [vmem:[%s939] sm:$0xf]
      %v941 = vld [vmem:[%s939 + $0x4] sm:$0xf]
      %v942 = vld [vmem:[%s939 + $0x8] sm:$0xf]
      %v943 = vld [vmem:[%s939 + $0xc] sm:$0xf]
      %v944 = vld [vmem:[%s939 + $0x10] sm:$0xf]
      %v945 = vld [vmem:[%s939 + $0x14] sm:$0xf]
      %v946 = vld [vmem:[%s939 + $0x18] sm:$0xf]
      %v947 = vld [vmem:[%s939 + $0x1c] sm:$0xf]
      %v948 = vld [vmem:[%s939 + $0x20] sm:$0xf]
      %v949 = vld [vmem:[%s939 + $0x24] sm:$0xf]
      %v950 = vld [vmem:[%s939 + $0x28] sm:$0xf]
      %v951 = vld [vmem:[%s939 + $0x2c] sm:$0xf]
      %v952 = vld [vmem:[%s939 + $0x30] sm:$0xf]
      %v953 = vld [vmem:[%s939 + $0x34] sm:$0xf]
      %v954 = vld [vmem:[%s939 + $0x38] sm:$0xf]
      %v955 = vld [vmem:[%s939 + $0x3c] sm:$0xf]
      %v957 = vunpack.c.l.b16 %v938
      %v958 = vpack.c.b16 %v404, %v957
      %vm959 = vcmask 1046528
      %v960 = vrot.slane %v958, 1
      %v961 = vrot.slane %v441, 1
      %v962 = vsel %vm959, %v960, %v961
      %v963 = vrot.slane %v442, 1
      %v964 = vsel %vm959, %v961, %v963
      %v965 = vrot.slane %v443, 1
      %v966 = vsel %vm959, %v963, %v965
      %v967 = vrot.slane %v444, 1
      %v968 = vsel %vm959, %v965, %v967
      %v969 = vrot.slane %v445, 1
      %v970 = vsel %vm959, %v967, %v969
      %v971 = vrot.slane %v446, 1
      %v972 = vsel %vm959, %v969, %v971
      %v973 = vrot.slane %v447, 1
      %v974 = vsel %vm959, %v971, %v973
      %v975 = vrot.slane %v448, 1
      %v976 = vsel %vm959, %v973, %v975
      %v977 = vrot.slane %v449, 1
      %v978 = vsel %vm959, %v975, %v977
      %v979 = vrot.slane %v450, 1
      %v980 = vsel %vm959, %v977, %v979
      %v981 = vrot.slane %v451, 1
      %v982 = vsel %vm959, %v979, %v981
      %v983 = vrot.slane %v452, 1
      %v984 = vsel %vm959, %v981, %v983
      %v985 = vrot.slane %v453, 1
      %v986 = vsel %vm959, %v983, %v985
      %v987 = vrot.slane %v454, 1
      %v988 = vsel %vm959, %v985, %v987
      %v989 = vrot.slane %v455, 1
      %v990 = vsel %vm959, %v987, %v989
      %v991 = vrot.slane %v456, 1
      %v992 = vsel %vm959, %v989, %v991
      %v993 = vrot.slane %v457, 1
      %v994 = vsel %vm959, %v991, %v993
      %v995 = vrot.slane %v458, 1
      %v996 = vsel %vm959, %v993, %v995
      %v1031 = vunpack.c.l.b16 %v940
      %v1032 = vunpack.c.l.b16 %v941
      %v1033 = vunpack.c.l.b16 %v942
      %v1034 = vunpack.c.l.b16 %v943
      %v1035 = vunpack.c.l.b16 %v944
      %v1036 = vunpack.c.l.b16 %v945
      %v1037 = vunpack.c.l.b16 %v946
      %v1038 = vunpack.c.l.b16 %v947
      %v1039 = vunpack.c.l.b16 %v948
      %v1040 = vunpack.c.l.b16 %v949
      %v1041 = vunpack.c.l.b16 %v950
      %v1042 = vunpack.c.l.b16 %v951
      %v1043 = vunpack.c.l.b16 %v952
      %v1044 = vunpack.c.l.b16 %v953
      %v1045 = vunpack.c.l.b16 %v954
      %v1046 = vunpack.c.l.b16 %v955
      %v1047 = vpack.c.b16 %v1032, %v1031
      %v1048 = vpack.c.b16 %v1034, %v1033
      %v1049 = vpack.c.b16 %v1036, %v1035
      %v1050 = vpack.c.b16 %v1038, %v1037
      %v1051 = vpack.c.b16 %v1040, %v1039
      %v1052 = vpack.c.b16 %v1042, %v1041
      %v1053 = vpack.c.b16 %v1044, %v1043
      %v1054 = vpack.c.b16 %v1046, %v1045
      %1063 = vmatpush.bf16.msra.mxu0 %v1054
      %1064 = vmatpush.bf16.msra.mxu0 %v1053
      %1065 = vmatpush.bf16.msra.mxu0 %v1052
      %1066 = vmatpush.bf16.msra.mxu0 %v1051
      %1067 = vmatpush.bf16.msra.mxu0 %v1050
      %1068 = vmatpush.bf16.msra.mxu0 %v1049
      %1069 = vmatpush.bf16.msra.mxu0 %v1048
      %1070 = vmatpush.bf16.msra.mxu0 %v1047
      %1071 = vmatmul.bf16.gmra.mxu0 %v962
      %v1072 = vpop.f32.mrf.mxu0
      %v1073 = vadd.f32 0.0, %v1072
      %v1074 = vpop.f32.mrf.mxu0
      %v1075 = vadd.f32 0.0, %v1074
      %1076 = vmatmul.bf16.gmra.mxu0 %v964
      %v1077 = vpop.f32.mrf.mxu0
      %v1078 = vadd.f32 0.0, %v1077
      %v1079 = vpop.f32.mrf.mxu0
      %v1080 = vadd.f32 0.0, %v1079
      %1081 = vmatmul.bf16.gmra.mxu0 %v966
      %v1082 = vpop.f32.mrf.mxu0
      %v1083 = vadd.f32 0.0, %v1082
      %v1084 = vpop.f32.mrf.mxu0
      %v1085 = vadd.f32 0.0, %v1084
      %1086 = vmatmul.bf16.gmra.mxu0 %v968
      %v1087 = vpop.f32.mrf.mxu0
      %v1088 = vadd.f32 0.0, %v1087
      %v1089 = vpop.f32.mrf.mxu0
      %v1090 = vadd.f32 0.0, %v1089
      %1091 = vmatmul.bf16.gmra.mxu0 %v970
      %v1092 = vpop.f32.mrf.mxu0
      %v1093 = vadd.f32 0.0, %v1092
      %v1094 = vpop.f32.mrf.mxu0
      %v1095 = vadd.f32 0.0, %v1094
      %1096 = vmatmul.bf16.gmra.mxu0 %v972
      %v1097 = vpop.f32.mrf.mxu0
      %v1098 = vadd.f32 0.0, %v1097
      %v1099 = vpop.f32.mrf.mxu0
      %v1100 = vadd.f32 0.0, %v1099
      %1101 = vmatmul.bf16.gmra.mxu0 %v974
      %v1102 = vpop.f32.mrf.mxu0
      %v1103 = vadd.f32 0.0, %v1102
      %v1104 = vpop.f32.mrf.mxu0
      %v1105 = vadd.f32 0.0, %v1104
      %1106 = vmatmul.bf16.gmra.mxu0 %v976
      %v1107 = vpop.f32.mrf.mxu0
      %v1108 = vadd.f32 0.0, %v1107
      %v1109 = vpop.f32.mrf.mxu0
      %v1110 = vadd.f32 0.0, %v1109
      %1111 = vmatmul.bf16.gmra.mxu0 %v978
      %v1112 = vpop.f32.mrf.mxu0
      %v1113 = vadd.f32 0.0, %v1112
      %v1114 = vpop.f32.mrf.mxu0
      %v1115 = vadd.f32 0.0, %v1114
      %1116 = vmatmul.bf16.gmra.mxu0 %v980
      %v1117 = vpop.f32.mrf.mxu0
      %v1118 = vadd.f32 0.0, %v1117
      %v1119 = vpop.f32.mrf.mxu0
      %v1120 = vadd.f32 0.0, %v1119
      %1121 = vmatmul.bf16.gmra.mxu0 %v982
      %v1122 = vpop.f32.mrf.mxu0
      %v1123 = vadd.f32 0.0, %v1122
      %v1124 = vpop.f32.mrf.mxu0
      %v1125 = vadd.f32 0.0, %v1124
      %1126 = vmatmul.bf16.gmra.mxu0 %v984
      %v1127 = vpop.f32.mrf.mxu0
      %v1128 = vadd.f32 0.0, %v1127
      %v1129 = vpop.f32.mrf.mxu0
      %v1130 = vadd.f32 0.0, %v1129
      %1131 = vmatmul.bf16.gmra.mxu0 %v986
      %v1132 = vpop.f32.mrf.mxu0
      %v1133 = vadd.f32 0.0, %v1132
      %v1134 = vpop.f32.mrf.mxu0
      %v1135 = vadd.f32 0.0, %v1134
      %1136 = vmatmul.bf16.gmra.mxu0 %v988
      %v1137 = vpop.f32.mrf.mxu0
      %v1138 = vadd.f32 0.0, %v1137
      %v1139 = vpop.f32.mrf.mxu0
      %v1140 = vadd.f32 0.0, %v1139
      %1141 = vmatmul.bf16.gmra.mxu0 %v990
      %v1142 = vpop.f32.mrf.mxu0
      %v1143 = vadd.f32 0.0, %v1142
      %v1144 = vpop.f32.mrf.mxu0
      %v1145 = vadd.f32 0.0, %v1144
      %1146 = vmatmul.bf16.gmra.mxu0 %v992
      %v1147 = vpop.f32.mrf.mxu0
      %v1148 = vadd.f32 0.0, %v1147
      %v1149 = vpop.f32.mrf.mxu0
      %v1150 = vadd.f32 0.0, %v1149
      %1151 = vmatmul.bf16.gmra.mxu0 %v994
      %v1152 = vpop.f32.mrf.mxu0
      %v1153 = vadd.f32 0.0, %v1152
      %v1154 = vpop.f32.mrf.mxu0
      %v1155 = vadd.f32 0.0, %v1154
      %1156 = vmatmul.bf16.gmra.mxu0 %v996
      %v1157 = vpop.f32.mrf.mxu0
      %v1158 = vadd.f32 0.0, %v1157
      %v1159 = vpop.f32.mrf.mxu0
      %v1160 = vadd.f32 0.0, %v1159
      %1161 = vdwg.mxu0
      %v1162 = vadd.f32 %v849, %v1073
      %v1163 = vadd.f32 %v851, %v1075
      %v1164 = vadd.f32 %v854, %v1078
      %v1165 = vadd.f32 %v856, %v1080
      %v1166 = vadd.f32 %v859, %v1083
      %v1167 = vadd.f32 %v861, %v1085
      %v1168 = vadd.f32 %v864, %v1088
      %v1169 = vadd.f32 %v866, %v1090
      %v1170 = vadd.f32 %v869, %v1093
      %v1171 = vadd.f32 %v871, %v1095
      %v1172 = vadd.f32 %v874, %v1098
      %v1173 = vadd.f32 %v876, %v1100
      %v1174 = vadd.f32 %v879, %v1103
      %v1175 = vadd.f32 %v881, %v1105
      %v1176 = vadd.f32 %v884, %v1108
      %v1177 = vadd.f32 %v886, %v1110
      %v1178 = vadd.f32 %v889, %v1113
      %v1179 = vadd.f32 %v891, %v1115
      %v1180 = vadd.f32 %v894, %v1118
      %v1181 = vadd.f32 %v896, %v1120
      %v1182 = vadd.f32 %v899, %v1123
      %v1183 = vadd.f32 %v901, %v1125
      %v1184 = vadd.f32 %v904, %v1128
      %v1185 = vadd.f32 %v906, %v1130
      %v1186 = vadd.f32 %v909, %v1133
      %v1187 = vadd.f32 %v911, %v1135
      %v1188 = vadd.f32 %v914, %v1138
      %v1189 = vadd.f32 %v916, %v1140
      %v1190 = vadd.f32 %v919, %v1143
      %v1191 = vadd.f32 %v921, %v1145
      %v1192 = vadd.f32 %v924, %v1148
      %v1193 = vadd.f32 %v926, %v1150
      %v1194 = vadd.f32 %v929, %v1153
      %v1195 = vadd.f32 %v931, %v1155
      %v1196 = vadd.f32 %v934, %v1158
      %v1197 = vadd.f32 %v936, %v1160
      %v1198 = vld [vmem:[%s235 + $0x8] sm:$0xe]
      %v1199 = vld [vmem:[%s235 + $0xc] sm:$0xf]
      %v1200 = vld [vmem:[%s235 + $0x10] sm:$0xf]
      %v1201 = vld [vmem:[%s235 + $0x14] sm:$0xf]
      %v1202 = vld [vmem:[%s235 + $0x18] sm:$0xf]
      %v1203 = vld [vmem:[%s235 + $0x1c] sm:$0xf]
      %v1204 = vld [vmem:[%s235 + $0x20] sm:$0xf]
      %v1205 = vld [vmem:[%s235 + $0x24] sm:$0xf]
      %v1206 = vld [vmem:[%s235 + $0x28] sm:$0xf]
      %v1207 = vld [vmem:[%s235 + $0x2c] sm:$0xf]
      %v1208 = vld [vmem:[%s235 + $0x30] sm:$0xf]
      %v1209 = vld [vmem:[%s235 + $0x34] sm:$0xf]
      %v1210 = vld [vmem:[%s235 + $0x38] sm:$0xf]
      %v1211 = vld [vmem:[%s235 + $0x3c] sm:$0xf]
      %v1212 = vld [vmem:[%s235 + $0x40] sm:$0xf]
      %v1213 = vld [vmem:[%s235 + $0x44] sm:$0xf]
      %v1214 = vld [vmem:[%s235 + $0x48] sm:$0xf]
      %v1215 = vld [vmem:[%s235 + $0x4c] sm:$0xf]
      %v1216 = vld [vmem:[%s235 + $0x50] sm:$0xf]
      %v1217 = vld [vmem:[%s235 + $0x54] sm:$0xf]
      %v1218 = vld [vmem:[%s235 + $0x58] sm:$0xf]
      %v1219 = vld [vmem:[%s235 + $0x5c] sm:$0xf]
      %v1220 = vld [vmem:[%s235 + $0x60] sm:$0xf]
      %v1221 = vld [vmem:[%s235 + $0x64] sm:$0xf]
      %v1222 = vld [vmem:[%s235 + $0x68] sm:$0xf]
      %v1223 = vld [vmem:[%s235 + $0x6c] sm:$0xf]
      %v1224 = vld [vmem:[%s235 + $0x70] sm:$0xf]
      %v1225 = vld [vmem:[%s235 + $0x74] sm:$0xf]
      %v1226 = vld [vmem:[%s235 + $0x78] sm:$0xf]
      %v1227 = vld [vmem:[%s235 + $0x7c] sm:$0xf]
      %v1228 = vld [vmem:[%s235 + $0x80] sm:$0xf]
      %v1229 = vld [vmem:[%s235 + $0x84] sm:$0xf]
      %v1230 = vld [vmem:[%s235 + $0x88] sm:$0xf]
      %v1231 = vld [vmem:[%s235 + $0x8c] sm:$0xf]
      %v1232 = vld [vmem:[%s235 + $0x90] sm:$0xf]
      %v1233 = vld [vmem:[%s235 + $0x94] sm:$0xf]
      %v1234 = vld [vmem:[%s235 + $0x98] sm:$0x1]
      %s1235 = scalar_lea.vmem %s243, 192
      %v1236 = vld [vmem:[%s1235] sm:$0xf]
      %v1237 = vld [vmem:[%s1235 + $0x4] sm:$0xf]
      %v1238 = vld [vmem:[%s1235 + $0x8] sm:$0xf]
      %v1239 = vld [vmem:[%s1235 + $0xc] sm:$0xf]
      %v1240 = vld [vmem:[%s1235 + $0x10] sm:$0xf]
      %v1241 = vld [vmem:[%s1235 + $0x14] sm:$0xf]
      %v1242 = vld [vmem:[%s1235 + $0x18] sm:$0xf]
      %v1243 = vld [vmem:[%s1235 + $0x1c] sm:$0xf]
      %v1244 = vld [vmem:[%s1235 + $0x20] sm:$0xf]
      %v1245 = vld [vmem:[%s1235 + $0x24] sm:$0xf]
      %v1246 = vld [vmem:[%s1235 + $0x28] sm:$0xf]
      %v1247 = vld [vmem:[%s1235 + $0x2c] sm:$0xf]
      %v1248 = vld [vmem:[%s1235 + $0x30] sm:$0xf]
      %v1249 = vld [vmem:[%s1235 + $0x34] sm:$0xf]
      %v1250 = vld [vmem:[%s1235 + $0x38] sm:$0xf]
      %v1251 = vld [vmem:[%s1235 + $0x3c] sm:$0xf]
      %v1289 = vunpack.c.l.b16 %v1198
      %v1290 = vunpack.c.l.b16 %v1199
      %v1291 = vunpack.c.l.b16 %v1200
      %v1292 = vunpack.c.l.b16 %v1201
      %v1293 = vunpack.c.l.b16 %v1202
      %v1294 = vunpack.c.l.b16 %v1203
      %v1295 = vunpack.c.l.b16 %v1204
      %v1296 = vunpack.c.l.b16 %v1205
      %v1297 = vunpack.c.l.b16 %v1206
      %v1298 = vunpack.c.l.b16 %v1207
      %v1299 = vunpack.c.l.b16 %v1208
      %v1300 = vunpack.c.l.b16 %v1209
      %v1301 = vunpack.c.l.b16 %v1210
      %v1302 = vunpack.c.l.b16 %v1211
      %v1303 = vunpack.c.l.b16 %v1212
      %v1304 = vunpack.c.l.b16 %v1213
      %v1305 = vunpack.c.l.b16 %v1214
      %v1306 = vunpack.c.l.b16 %v1215
      %v1307 = vunpack.c.l.b16 %v1216
      %v1308 = vunpack.c.l.b16 %v1217
      %v1309 = vunpack.c.l.b16 %v1218
      %v1310 = vunpack.c.l.b16 %v1219
      %v1311 = vunpack.c.l.b16 %v1220
      %v1312 = vunpack.c.l.b16 %v1221
      %v1313 = vunpack.c.l.b16 %v1222
      %v1314 = vunpack.c.l.b16 %v1223
      %v1315 = vunpack.c.l.b16 %v1224
      %v1316 = vunpack.c.l.b16 %v1225
      %v1317 = vunpack.c.l.b16 %v1226
      %v1318 = vunpack.c.l.b16 %v1227
      %v1319 = vunpack.c.l.b16 %v1228
      %v1320 = vunpack.c.l.b16 %v1229
      %v1321 = vunpack.c.l.b16 %v1230
      %v1322 = vunpack.c.l.b16 %v1231
      %v1323 = vunpack.c.l.b16 %v1232
      %v1324 = vunpack.c.l.b16 %v1233
      %v1325 = vunpack.c.l.b16 %v1234
      %v1326 = vpack.c.b16 %v1290, %v1289
      %v1327 = vpack.c.b16 %v1292, %v1291
      %v1328 = vpack.c.b16 %v1294, %v1293
      %v1329 = vpack.c.b16 %v1296, %v1295
      %v1330 = vpack.c.b16 %v1298, %v1297
      %v1331 = vpack.c.b16 %v1300, %v1299
      %v1332 = vpack.c.b16 %v1302, %v1301
      %v1333 = vpack.c.b16 %v1304, %v1303
      %v1334 = vpack.c.b16 %v1306, %v1305
      %v1335 = vpack.c.b16 %v1308, %v1307
      %v1336 = vpack.c.b16 %v1310, %v1309
      %v1337 = vpack.c.b16 %v1312, %v1311
      %v1338 = vpack.c.b16 %v1314, %v1313
      %v1339 = vpack.c.b16 %v1316, %v1315
      %v1340 = vpack.c.b16 %v1318, %v1317
      %v1341 = vpack.c.b16 %v1320, %v1319
      %v1342 = vpack.c.b16 %v1322, %v1321
      %v1343 = vpack.c.b16 %v1324, %v1323
      %v1344 = vpack.c.b16 %v1325, %v1325
      %v1345 = vrot.slane %v1326, 1
      %v1346 = vrot.slane %v1327, 1
      %v1347 = vsel %vm959, %v1345, %v1346
      %v1348 = vrot.slane %v1328, 1
      %v1349 = vsel %vm959, %v1346, %v1348
      %v1350 = vrot.slane %v1329, 1
      %v1351 = vsel %vm959, %v1348, %v1350
      %v1352 = vrot.slane %v1330, 1
      %v1353 = vsel %vm959, %v1350, %v1352
      %v1354 = vrot.slane %v1331, 1
      %v1355 = vsel %vm959, %v1352, %v1354
      %v1356 = vrot.slane %v1332, 1
      %v1357 = vsel %vm959, %v1354, %v1356
      %v1358 = vrot.slane %v1333, 1
      %v1359 = vsel %vm959, %v1356, %v1358
      %v1360 = vrot.slane %v1334, 1
      %v1361 = vsel %vm959, %v1358, %v1360
      %v1362 = vrot.slane %v1335, 1
      %v1363 = vsel %vm959, %v1360, %v1362
      %v1364 = vrot.slane %v1336, 1
      %v1365 = vsel %vm959, %v1362, %v1364
      %v1366 = vrot.slane %v1337, 1
      %v1367 = vsel %vm959, %v1364, %v1366
      %v1368 = vrot.slane %v1338, 1
      %v1369 = vsel %vm959, %v1366, %v1368
      %v1370 = vrot.slane %v1339, 1
      %v1371 = vsel %vm959, %v1368, %v1370
      %v1372 = vrot.slane %v1340, 1
      %v1373 = vsel %vm959, %v1370, %v1372
      %v1374 = vrot.slane %v1341, 1
      %v1375 = vsel %vm959, %v1372, %v1374
      %v1376 = vrot.slane %v1342, 1
      %v1377 = vsel %vm959, %v1374, %v1376
      %v1378 = vrot.slane %v1343, 1
      %v1379 = vsel %vm959, %v1376, %v1378
      %v1380 = vrot.slane %v1344, 1
      %v1381 = vsel %vm959, %v1378, %v1380
      %v1416 = vunpack.c.l.b16 %v1236
      %v1417 = vunpack.c.l.b16 %v1237
      %v1418 = vunpack.c.l.b16 %v1238
      %v1419 = vunpack.c.l.b16 %v1239
      %v1420 = vunpack.c.l.b16 %v1240
      %v1421 = vunpack.c.l.b16 %v1241
      %v1422 = vunpack.c.l.b16 %v1242
      %v1423 = vunpack.c.l.b16 %v1243
      %v1424 = vunpack.c.l.b16 %v1244
      %v1425 = vunpack.c.l.b16 %v1245
      %v1426 = vunpack.c.l.b16 %v1246
      %v1427 = vunpack.c.l.b16 %v1247
      %v1428 = vunpack.c.l.b16 %v1248
      %v1429 = vunpack.c.l.b16 %v1249
      %v1430 = vunpack.c.l.b16 %v1250
      %v1431 = vunpack.c.l.b16 %v1251
      %v1432 = vpack.c.b16 %v1417, %v1416
      %v1433 = vpack.c.b16 %v1419, %v1418
      %v1434 = vpack.c.b16 %v1421, %v1420
      %v1435 = vpack.c.b16 %v1423, %v1422
      %v1436 = vpack.c.b16 %v1425, %v1424
      %v1437 = vpack.c.b16 %v1427, %v1426
      %v1438 = vpack.c.b16 %v1429, %v1428
      %v1439 = vpack.c.b16 %v1431, %v1430
      %1448 = vmatpush.bf16.msra.mxu0 %v1439
      %1449 = vmatpush.bf16.msra.mxu0 %v1438
      %1450 = vmatpush.bf16.msra.mxu0 %v1437
      %1451 = vmatpush.bf16.msra.mxu0 %v1436
      %1452 = vmatpush.bf16.msra.mxu0 %v1435
      %1453 = vmatpush.bf16.msra.mxu0 %v1434
      %1454 = vmatpush.bf16.msra.mxu0 %v1433
      %1455 = vmatpush.bf16.msra.mxu0 %v1432
      %1456 = vmatmul.bf16.gmra.mxu0 %v1347
      %v1457 = vpop.f32.mrf.mxu0
      %v1458 = vadd.f32 0.0, %v1457
      %v1459 = vpop.f32.mrf.mxu0
      %v1460 = vadd.f32 0.0, %v1459
      %1461 = vmatmul.bf16.gmra.mxu0 %v1349
      %v1462 = vpop.f32.mrf.mxu0
      %v1463 = vadd.f32 0.0, %v1462
      %v1464 = vpop.f32.mrf.mxu0
      %v1465 = vadd.f32 0.0, %v1464
      %1466 = vmatmul.bf16.gmra.mxu0 %v1351
      %v1467 = vpop.f32.mrf.mxu0
      %v1468 = vadd.f32 0.0, %v1467
      %v1469 = vpop.f32.mrf.mxu0
      %v1470 = vadd.f32 0.0, %v1469
      %1471 = vmatmul.bf16.gmra.mxu0 %v1353
      %v1472 = vpop.f32.mrf.mxu0
      %v1473 = vadd.f32 0.0, %v1472
      %v1474 = vpop.f32.mrf.mxu0
      %v1475 = vadd.f32 0.0, %v1474
      %1476 = vmatmul.bf16.gmra.mxu0 %v1355
      %v1477 = vpop.f32.mrf.mxu0
      %v1478 = vadd.f32 0.0, %v1477
      %v1479 = vpop.f32.mrf.mxu0
      %v1480 = vadd.f32 0.0, %v1479
      %1481 = vmatmul.bf16.gmra.mxu0 %v1357
      %v1482 = vpop.f32.mrf.mxu0
      %v1483 = vadd.f32 0.0, %v1482
      %v1484 = vpop.f32.mrf.mxu0
      %v1485 = vadd.f32 0.0, %v1484
      %1486 = vmatmul.bf16.gmra.mxu0 %v1359
      %v1487 = vpop.f32.mrf.mxu0
      %v1488 = vadd.f32 0.0, %v1487
      %v1489 = vpop.f32.mrf.mxu0
      %v1490 = vadd.f32 0.0, %v1489
      %1491 = vmatmul.bf16.gmra.mxu0 %v1361
      %v1492 = vpop.f32.mrf.mxu0
      %v1493 = vadd.f32 0.0, %v1492
      %v1494 = vpop.f32.mrf.mxu0
      %v1495 = vadd.f32 0.0, %v1494
      %1496 = vmatmul.bf16.gmra.mxu0 %v1363
      %v1497 = vpop.f32.mrf.mxu0
      %v1498 = vadd.f32 0.0, %v1497
      %v1499 = vpop.f32.mrf.mxu0
      %v1500 = vadd.f32 0.0, %v1499
      %1501 = vmatmul.bf16.gmra.mxu0 %v1365
      %v1502 = vpop.f32.mrf.mxu0
      %v1503 = vadd.f32 0.0, %v1502
      %v1504 = vpop.f32.mrf.mxu0
      %v1505 = vadd.f32 0.0, %v1504
      %1506 = vmatmul.bf16.gmra.mxu0 %v1367
      %v1507 = vpop.f32.mrf.mxu0
      %v1508 = vadd.f32 0.0, %v1507
      %v1509 = vpop.f32.mrf.mxu0
      %v1510 = vadd.f32 0.0, %v1509
      %1511 = vmatmul.bf16.gmra.mxu0 %v1369
      %v1512 = vpop.f32.mrf.mxu0
      %v1513 = vadd.f32 0.0, %v1512
      %v1514 = vpop.f32.mrf.mxu0
      %v1515 = vadd.f32 0.0, %v1514
      %1516 = vmatmul.bf16.gmra.mxu0 %v1371
      %v1517 = vpop.f32.mrf.mxu0
      %v1518 = vadd.f32 0.0, %v1517
      %v1519 = vpop.f32.mrf.mxu0
      %v1520 = vadd.f32 0.0, %v1519
      %1521 = vmatmul.bf16.gmra.mxu0 %v1373
      %v1522 = vpop.f32.mrf.mxu0
      %v1523 = vadd.f32 0.0, %v1522
      %v1524 = vpop.f32.mrf.mxu0
      %v1525 = vadd.f32 0.0, %v1524
      %1526 = vmatmul.bf16.gmra.mxu0 %v1375
      %v1527 = vpop.f32.mrf.mxu0
      %v1528 = vadd.f32 0.0, %v1527
      %v1529 = vpop.f32.mrf.mxu0
      %v1530 = vadd.f32 0.0, %v1529
      %1531 = vmatmul.bf16.gmra.mxu0 %v1377
      %v1532 = vpop.f32.mrf.mxu0
      %v1533 = vadd.f32 0.0, %v1532
      %v1534 = vpop.f32.mrf.mxu0
      %v1535 = vadd.f32 0.0, %v1534
      %1536 = vmatmul.bf16.gmra.mxu0 %v1379
      %v1537 = vpop.f32.mrf.mxu0
      %v1538 = vadd.f32 0.0, %v1537
      %v1539 = vpop.f32.mrf.mxu0
      %v1540 = vadd.f32 0.0, %v1539
      %1541 = vmatmul.bf16.gmra.mxu0 %v1381
      %v1542 = vpop.f32.mrf.mxu0
      %v1543 = vadd.f32 0.0, %v1542
      %v1544 = vpop.f32.mrf.mxu0
      %v1545 = vadd.f32 0.0, %v1544
      %1546 = vdwg.mxu0
      %v1547 = vadd.f32 %v1162, %v1458
      %v1548 = vadd.f32 %v1163, %v1460
      %v1549 = vadd.f32 %v1164, %v1463
      %v1550 = vadd.f32 %v1165, %v1465
      %v1551 = vadd.f32 %v1166, %v1468
      %v1552 = vadd.f32 %v1167, %v1470
      %v1553 = vadd.f32 %v1168, %v1473
      %v1554 = vadd.f32 %v1169, %v1475
      %v1555 = vadd.f32 %v1170, %v1478
      %v1556 = vadd.f32 %v1171, %v1480
      %v1557 = vadd.f32 %v1172, %v1483
      %v1558 = vadd.f32 %v1173, %v1485
      %v1559 = vadd.f32 %v1174, %v1488
      %v1560 = vadd.f32 %v1175, %v1490
      %v1561 = vadd.f32 %v1176, %v1493
      %v1562 = vadd.f32 %v1177, %v1495
      %v1563 = vadd.f32 %v1178, %v1498
      %v1564 = vadd.f32 %v1179, %v1500
      %v1565 = vadd.f32 %v1180, %v1503
      %v1566 = vadd.f32 %v1181, %v1505
      %v1567 = vadd.f32 %v1182, %v1508
      %v1568 = vadd.f32 %v1183, %v1510
      %v1569 = vadd.f32 %v1184, %v1513
      %v1570 = vadd.f32 %v1185, %v1515
      %v1571 = vadd.f32 %v1186, %v1518
      %v1572 = vadd.f32 %v1187, %v1520
      %v1573 = vadd.f32 %v1188, %v1523
      %v1574 = vadd.f32 %v1189, %v1525
      %v1575 = vadd.f32 %v1190, %v1528
      %v1576 = vadd.f32 %v1191, %v1530
      %v1577 = vadd.f32 %v1192, %v1533
      %v1578 = vadd.f32 %v1193, %v1535
      %v1579 = vadd.f32 %v1194, %v1538
      %v1580 = vadd.f32 %v1195, %v1540
      %v1581 = vadd.f32 %v1196, %v1543
      %v1582 = vadd.f32 %v1197, %v1545
      %v1583 = vld [vmem:[%s235 + $0x98] sm:$0x3]
      %s1584 = scalar_lea.vmem %s243, 256
      %v1585 = vld [vmem:[%s1584] sm:$0xf]
      %v1586 = vld [vmem:[%s1584 + $0x4] sm:$0xf]
      %v1587 = vld [vmem:[%s1584 + $0x8] sm:$0xf]
      %v1588 = vld [vmem:[%s1584 + $0xc] sm:$0xf]
      %v1589 = vld [vmem:[%s1584 + $0x10] sm:$0xf]
      %v1590 = vld [vmem:[%s1584 + $0x14] sm:$0xf]
      %v1591 = vld [vmem:[%s1584 + $0x18] sm:$0xf]
      %v1592 = vld [vmem:[%s1584 + $0x1c] sm:$0xf]
      %v1593 = vld [vmem:[%s1584 + $0x20] sm:$0xf]
      %v1594 = vld [vmem:[%s1584 + $0x24] sm:$0xf]
      %v1595 = vld [vmem:[%s1584 + $0x28] sm:$0xf]
      %v1596 = vld [vmem:[%s1584 + $0x2c] sm:$0xf]
      %v1597 = vld [vmem:[%s1584 + $0x30] sm:$0xf]
      %v1598 = vld [vmem:[%s1584 + $0x34] sm:$0xf]
      %v1599 = vld [vmem:[%s1584 + $0x38] sm:$0xf]
      %v1600 = vld [vmem:[%s1584 + $0x3c] sm:$0xf]
      %v1602 = vunpack.c.l.b16 %v1583
      %v1603 = vpack.c.b16 %v1602, %v1602
      %vm1604 = vsmask.f32 6400
      %v1606 = vshrl.u32 %v1326, 16
      %v1608 = vrot.slane %v1606, 1
      %v1609 = vshll.u32 %v1326, 16
      %v1611 = vrot.slane %v1609, 2
      %v1612 = vor.u32 %v1608, %v1611
      %v1614 = vshrl.u32 %v1327, 16
      %v1616 = vrot.slane %v1614, 1
      %v1617 = vshll.u32 %v1327, 16
      %v1619 = vrot.slane %v1617, 2
      %v1620 = vor.u32 %v1616, %v1619
      %v1621 = vsel %vm1604, %v1612, %v1620
      %v1623 = vshrl.u32 %v1328, 16
      %v1625 = vrot.slane %v1623, 1
      %v1626 = vshll.u32 %v1328, 16
      %v1628 = vrot.slane %v1626, 2
      %v1629 = vor.u32 %v1625, %v1628
      %v1630 = vsel %vm1604, %v1620, %v1629
      %v1632 = vshrl.u32 %v1329, 16
      %v1634 = vrot.slane %v1632, 1
      %v1635 = vshll.u32 %v1329, 16
      %v1637 = vrot.slane %v1635, 2
      %v1638 = vor.u32 %v1634, %v1637
      %v1639 = vsel %vm1604, %v1629, %v1638
      %v1641 = vshrl.u32 %v1330, 16
      %v1643 = vrot.slane %v1641, 1
      %v1644 = vshll.u32 %v1330, 16
      %v1646 = vrot.slane %v1644, 2
      %v1647 = vor.u32 %v1643, %v1646
      %v1648 = vsel %vm1604, %v1638, %v1647
      %v1650 = vshrl.u32 %v1331, 16
      %v1652 = vrot.slane %v1650, 1
      %v1653 = vshll.u32 %v1331, 16
      %v1655 = vrot.slane %v1653, 2
      %v1656 = vor.u32 %v1652, %v1655
      %v1657 = vsel %vm1604, %v1647, %v1656
      %v1659 = vshrl.u32 %v1332, 16
      %v1661 = vrot.slane %v1659, 1
      %v1662 = vshll.u32 %v1332, 16
      %v1664 = vrot.slane %v1662, 2
      %v1665 = vor.u32 %v1661, %v1664
      %v1666 = vsel %vm1604, %v1656, %v1665
      %v1668 = vshrl.u32 %v1333, 16
      %v1670 = vrot.slane %v1668, 1
      %v1671 = vshll.u32 %v1333, 16
      %v1673 = vrot.slane %v1671, 2
      %v1674 = vor.u32 %v1670, %v1673
      %v1675 = vsel %vm1604, %v1665, %v1674
      %v1677 = vshrl.u32 %v1334, 16
      %v1679 = vrot.slane %v1677, 1
      %v1680 = vshll.u32 %v1334, 16
      %v1682 = vrot.slane %v1680, 2
      %v1683 = vor.u32 %v1679, %v1682
      %v1684 = vsel %vm1604, %v1674, %v1683
      %v1686 = vshrl.u32 %v1335, 16
      %v1688 = vrot.slane %v1686, 1
      %v1689 = vshll.u32 %v1335, 16
      %v1691 = vrot.slane %v1689, 2
      %v1692 = vor.u32 %v1688, %v1691
      %v1693 = vsel %vm1604, %v1683, %v1692
      %v1695 = vshrl.u32 %v1336, 16
      %v1697 = vrot.slane %v1695, 1
      %v1698 = vshll.u32 %v1336, 16
      %v1700 = vrot.slane %v1698, 2
      %v1701 = vor.u32 %v1697, %v1700
      %v1702 = vsel %vm1604, %v1692, %v1701
      %v1704 = vshrl.u32 %v1337, 16
      %v1706 = vrot.slane %v1704, 1
      %v1707 = vshll.u32 %v1337, 16
      %v1709 = vrot.slane %v1707, 2
      %v1710 = vor.u32 %v1706, %v1709
      %v1711 = vsel %vm1604, %v1701, %v1710
      %v1713 = vshrl.u32 %v1338, 16
      %v1715 = vrot.slane %v1713, 1
      %v1716 = vshll.u32 %v1338, 16
      %v1718 = vrot.slane %v1716, 2
      %v1719 = vor.u32 %v1715, %v1718
      %v1720 = vsel %vm1604, %v1710, %v1719
      %v1722 = vshrl.u32 %v1339, 16
      %v1724 = vrot.slane %v1722, 1
      %v1725 = vshll.u32 %v1339, 16
      %v1727 = vrot.slane %v1725, 2
      %v1728 = vor.u32 %v1724, %v1727
      %v1729 = vsel %vm1604, %v1719, %v1728
      %v1731 = vshrl.u32 %v1340, 16
      %v1733 = vrot.slane %v1731, 1
      %v1734 = vshll.u32 %v1340, 16
      %v1736 = vrot.slane %v1734, 2
      %v1737 = vor.u32 %v1733, %v1736
      %v1738 = vsel %vm1604, %v1728, %v1737
      %v1740 = vshrl.u32 %v1341, 16
      %v1742 = vrot.slane %v1740, 1
      %v1743 = vshll.u32 %v1341, 16
      %v1745 = vrot.slane %v1743, 2
      %v1746 = vor.u32 %v1742, %v1745
      %v1747 = vsel %vm1604, %v1737, %v1746
      %v1749 = vshrl.u32 %v1342, 16
      %v1751 = vrot.slane %v1749, 1
      %v1752 = vshll.u32 %v1342, 16
      %v1754 = vrot.slane %v1752, 2
      %v1755 = vor.u32 %v1751, %v1754
      %v1756 = vsel %vm1604, %v1746, %v1755
      %v1758 = vshrl.u32 %v1343, 16
      %v1760 = vrot.slane %v1758, 1
      %v1761 = vshll.u32 %v1343, 16
      %v1763 = vrot.slane %v1761, 2
      %v1764 = vor.u32 %v1760, %v1763
      %v1765 = vsel %vm1604, %v1755, %v1764
      %v1767 = vshrl.u32 %v1603, 16
      %v1769 = vrot.slane %v1767, 1
      %v1770 = vshll.u32 %v1603, 16
      %v1772 = vrot.slane %v1770, 2
      %v1773 = vor.u32 %v1769, %v1772
      %v1774 = vsel %vm1604, %v1764, %v1773
      %v1809 = vunpack.c.l.b16 %v1585
      %v1810 = vunpack.c.l.b16 %v1586
      %v1811 = vunpack.c.l.b16 %v1587
      %v1812 = vunpack.c.l.b16 %v1588
      %v1813 = vunpack.c.l.b16 %v1589
      %v1814 = vunpack.c.l.b16 %v1590
      %v1815 = vunpack.c.l.b16 %v1591
      %v1816 = vunpack.c.l.b16 %v1592
      %v1817 = vunpack.c.l.b16 %v1593
      %v1818 = vunpack.c.l.b16 %v1594
      %v1819 = vunpack.c.l.b16 %v1595
      %v1820 = vunpack.c.l.b16 %v1596
      %v1821 = vunpack.c.l.b16 %v1597
      %v1822 = vunpack.c.l.b16 %v1598
      %v1823 = vunpack.c.l.b16 %v1599
      %v1824 = vunpack.c.l.b16 %v1600
      %v1825 = vpack.c.b16 %v1810, %v1809
      %v1826 = vpack.c.b16 %v1812, %v1811
      %v1827 = vpack.c.b16 %v1814, %v1813
      %v1828 = vpack.c.b16 %v1816, %v1815
      %v1829 = vpack.c.b16 %v1818, %v1817
      %v1830 = vpack.c.b16 %v1820, %v1819
      %v1831 = vpack.c.b16 %v1822, %v1821
      %v1832 = vpack.c.b16 %v1824, %v1823
      %1841 = vmatpush.bf16.msra.mxu0 %v1832
      %1842 = vmatpush.bf16.msra.mxu0 %v1831
      %1843 = vmatpush.bf16.msra.mxu0 %v1830
      %1844 = vmatpush.bf16.msra.mxu0 %v1829
      %1845 = vmatpush.bf16.msra.mxu0 %v1828
      %1846 = vmatpush.bf16.msra.mxu0 %v1827
      %1847 = vmatpush.bf16.msra.mxu0 %v1826
      %1848 = vmatpush.bf16.msra.mxu0 %v1825
      %1849 = vmatmul.bf16.gmra.mxu0 %v1621
      %v1850 = vpop.f32.mrf.mxu0
      %v1851 = vadd.f32 0.0, %v1850
      %v1852 = vpop.f32.mrf.mxu0
      %v1853 = vadd.f32 0.0, %v1852
      %1854 = vmatmul.bf16.gmra.mxu0 %v1630
      %v1855 = vpop.f32.mrf.mxu0
      %v1856 = vadd.f32 0.0, %v1855
      %v1857 = vpop.f32.mrf.mxu0
      %v1858 = vadd.f32 0.0, %v1857
      %1859 = vmatmul.bf16.gmra.mxu0 %v1639
      %v1860 = vpop.f32.mrf.mxu0
      %v1861 = vadd.f32 0.0, %v1860
      %v1862 = vpop.f32.mrf.mxu0
      %v1863 = vadd.f32 0.0, %v1862
      %1864 = vmatmul.bf16.gmra.mxu0 %v1648
      %v1865 = vpop.f32.mrf.mxu0
      %v1866 = vadd.f32 0.0, %v1865
      %v1867 = vpop.f32.mrf.mxu0
      %v1868 = vadd.f32 0.0, %v1867
      %1869 = vmatmul.bf16.gmra.mxu0 %v1657
      %v1870 = vpop.f32.mrf.mxu0
      %v1871 = vadd.f32 0.0, %v1870
      %v1872 = vpop.f32.mrf.mxu0
      %v1873 = vadd.f32 0.0, %v1872
      %1874 = vmatmul.bf16.gmra.mxu0 %v1666
      %v1875 = vpop.f32.mrf.mxu0
      %v1876 = vadd.f32 0.0, %v1875
      %v1877 = vpop.f32.mrf.mxu0
      %v1878 = vadd.f32 0.0, %v1877
      %1879 = vmatmul.bf16.gmra.mxu0 %v1675
      %v1880 = vpop.f32.mrf.mxu0
      %v1881 = vadd.f32 0.0, %v1880
      %v1882 = vpop.f32.mrf.mxu0
      %v1883 = vadd.f32 0.0, %v1882
      %1884 = vmatmul.bf16.gmra.mxu0 %v1684
      %v1885 = vpop.f32.mrf.mxu0
      %v1886 = vadd.f32 0.0, %v1885
      %v1887 = vpop.f32.mrf.mxu0
      %v1888 = vadd.f32 0.0, %v1887
      %1889 = vmatmul.bf16.gmra.mxu0 %v1693
      %v1890 = vpop.f32.mrf.mxu0
      %v1891 = vadd.f32 0.0, %v1890
      %v1892 = vpop.f32.mrf.mxu0
      %v1893 = vadd.f32 0.0, %v1892
      %1894 = vmatmul.bf16.gmra.mxu0 %v1702
      %v1895 = vpop.f32.mrf.mxu0
      %v1896 = vadd.f32 0.0, %v1895
      %v1897 = vpop.f32.mrf.mxu0
      %v1898 = vadd.f32 0.0, %v1897
      %1899 = vmatmul.bf16.gmra.mxu0 %v1711
      %v1900 = vpop.f32.mrf.mxu0
      %v1901 = vadd.f32 0.0, %v1900
      %v1902 = vpop.f32.mrf.mxu0
      %v1903 = vadd.f32 0.0, %v1902
      %1904 = vmatmul.bf16.gmra.mxu0 %v1720
      %v1905 = vpop.f32.mrf.mxu0
      %v1906 = vadd.f32 0.0, %v1905
      %v1907 = vpop.f32.mrf.mxu0
      %v1908 = vadd.f32 0.0, %v1907
      %1909 = vmatmul.bf16.gmra.mxu0 %v1729
      %v1910 = vpop.f32.mrf.mxu0
      %v1911 = vadd.f32 0.0, %v1910
      %v1912 = vpop.f32.mrf.mxu0
      %v1913 = vadd.f32 0.0, %v1912
      %1914 = vmatmul.bf16.gmra.mxu0 %v1738
      %v1915 = vpop.f32.mrf.mxu0
      %v1916 = vadd.f32 0.0, %v1915
      %v1917 = vpop.f32.mrf.mxu0
      %v1918 = vadd.f32 0.0, %v1917
      %1919 = vmatmul.bf16.gmra.mxu0 %v1747
      %v1920 = vpop.f32.mrf.mxu0
      %v1921 = vadd.f32 0.0, %v1920
      %v1922 = vpop.f32.mrf.mxu0
      %v1923 = vadd.f32 0.0, %v1922
      %1924 = vmatmul.bf16.gmra.mxu0 %v1756
      %v1925 = vpop.f32.mrf.mxu0
      %v1926 = vadd.f32 0.0, %v1925
      %v1927 = vpop.f32.mrf.mxu0
      %v1928 = vadd.f32 0.0, %v1927
      %1929 = vmatmul.bf16.gmra.mxu0 %v1765
      %v1930 = vpop.f32.mrf.mxu0
      %v1931 = vadd.f32 0.0, %v1930
      %v1932 = vpop.f32.mrf.mxu0
      %v1933 = vadd.f32 0.0, %v1932
      %1934 = vmatmul.bf16.gmra.mxu0 %v1774
      %v1935 = vpop.f32.mrf.mxu0
      %v1936 = vadd.f32 0.0, %v1935
      %v1937 = vpop.f32.mrf.mxu0
      %v1938 = vadd.f32 0.0, %v1937
      %1939 = vdwg.mxu0
      %v1940 = vadd.f32 %v1547, %v1851
      %v1941 = vadd.f32 %v1548, %v1853
      %v1942 = vadd.f32 %v1549, %v1856
      %v1943 = vadd.f32 %v1550, %v1858
      %v1944 = vadd.f32 %v1551, %v1861
      %v1945 = vadd.f32 %v1552, %v1863
      %v1946 = vadd.f32 %v1553, %v1866
      %v1947 = vadd.f32 %v1554, %v1868
      %v1948 = vadd.f32 %v1555, %v1871
      %v1949 = vadd.f32 %v1556, %v1873
      %v1950 = vadd.f32 %v1557, %v1876
      %v1951 = vadd.f32 %v1558, %v1878
      %v1952 = vadd.f32 %v1559, %v1881
      %v1953 = vadd.f32 %v1560, %v1883
      %v1954 = vadd.f32 %v1561, %v1886
      %v1955 = vadd.f32 %v1562, %v1888
      %v1956 = vadd.f32 %v1563, %v1891
      %v1957 = vadd.f32 %v1564, %v1893
      %v1958 = vadd.f32 %v1565, %v1896
      %v1959 = vadd.f32 %v1566, %v1898
      %v1960 = vadd.f32 %v1567, %v1901
      %v1961 = vadd.f32 %v1568, %v1903
      %v1962 = vadd.f32 %v1569, %v1906
      %v1963 = vadd.f32 %v1570, %v1908
      %v1964 = vadd.f32 %v1571, %v1911
      %v1965 = vadd.f32 %v1572, %v1913
      %v1966 = vadd.f32 %v1573, %v1916
      %v1967 = vadd.f32 %v1574, %v1918
      %v1968 = vadd.f32 %v1575, %v1921
      %v1969 = vadd.f32 %v1576, %v1923
      %v1970 = vadd.f32 %v1577, %v1926
      %v1971 = vadd.f32 %v1578, %v1928
      %v1972 = vadd.f32 %v1579, %v1931
      %v1973 = vadd.f32 %v1580, %v1933
      %v1974 = vadd.f32 %v1581, %v1936
      %v1975 = vadd.f32 %v1582, %v1938
      %v1976 = vld [vmem:[%s235 + $0x8] sm:$0xc]
      %s1977 = scalar_lea.vmem %s243, 320
      %v1978 = vld [vmem:[%s1977] sm:$0xf]
      %v1979 = vld [vmem:[%s1977 + $0x4] sm:$0xf]
      %v1980 = vld [vmem:[%s1977 + $0x8] sm:$0xf]
      %v1981 = vld [vmem:[%s1977 + $0xc] sm:$0xf]
      %v1982 = vld [vmem:[%s1977 + $0x10] sm:$0xf]
      %v1983 = vld [vmem:[%s1977 + $0x14] sm:$0xf]
      %v1984 = vld [vmem:[%s1977 + $0x18] sm:$0xf]
      %v1985 = vld [vmem:[%s1977 + $0x1c] sm:$0xf]
      %v1986 = vld [vmem:[%s1977 + $0x20] sm:$0xf]
      %v1987 = vld [vmem:[%s1977 + $0x24] sm:$0xf]
      %v1988 = vld [vmem:[%s1977 + $0x28] sm:$0xf]
      %v1989 = vld [vmem:[%s1977 + $0x2c] sm:$0xf]
      %v1990 = vld [vmem:[%s1977 + $0x30] sm:$0xf]
      %v1991 = vld [vmem:[%s1977 + $0x34] sm:$0xf]
      %v1992 = vld [vmem:[%s1977 + $0x38] sm:$0xf]
      %v1993 = vld [vmem:[%s1977 + $0x3c] sm:$0xf]
      %v1995 = vunpack.c.l.b16 %v1976
      %v1996 = vpack.c.b16 %v1290, %v1995
      %vm1997 = vcmask 1045504
      %v1998 = vrot.slane %v1996, 2
      %v1999 = vrot.slane %v1327, 2
      %v2000 = vsel %vm1997, %v1998, %v1999
      %v2001 = vrot.slane %v1328, 2
      %v2002 = vsel %vm1997, %v1999, %v2001
      %v2003 = vrot.slane %v1329, 2
      %v2004 = vsel %vm1997, %v2001, %v2003
      %v2005 = vrot.slane %v1330, 2
      %v2006 = vsel %vm1997, %v2003, %v2005
      %v2007 = vrot.slane %v1331, 2
      %v2008 = vsel %vm1997, %v2005, %v2007
      %v2009 = vrot.slane %v1332, 2
      %v2010 = vsel %vm1997, %v2007, %v2009
      %v2011 = vrot.slane %v1333, 2
      %v2012 = vsel %vm1997, %v2009, %v2011
      %v2013 = vrot.slane %v1334, 2
      %v2014 = vsel %vm1997, %v2011, %v2013
      %v2015 = vrot.slane %v1335, 2
      %v2016 = vsel %vm1997, %v2013, %v2015
      %v2017 = vrot.slane %v1336, 2
      %v2018 = vsel %vm1997, %v2015, %v2017
      %v2019 = vrot.slane %v1337, 2
      %v2020 = vsel %vm1997, %v2017, %v2019
      %v2021 = vrot.slane %v1338, 2
      %v2022 = vsel %vm1997, %v2019, %v2021
      %v2023 = vrot.slane %v1339, 2
      %v2024 = vsel %vm1997, %v2021, %v2023
      %v2025 = vrot.slane %v1340, 2
      %v2026 = vsel %vm1997, %v2023, %v2025
      %v2027 = vrot.slane %v1341, 2
      %v2028 = vsel %vm1997, %v2025, %v2027
      %v2029 = vrot.slane %v1342, 2
      %v2030 = vsel %vm1997, %v2027, %v2029
      %v2031 = vrot.slane %v1343, 2
      %v2032 = vsel %vm1997, %v2029, %v2031
      %v2033 = vrot.slane %v1603, 2
      %v2034 = vsel %vm1997, %v2031, %v2033
      %v2069 = vunpack.c.l.b16 %v1978
      %v2070 = vunpack.c.l.b16 %v1979
      %v2071 = vunpack.c.l.b16 %v1980
      %v2072 = vunpack.c.l.b16 %v1981
      %v2073 = vunpack.c.l.b16 %v1982
      %v2074 = vunpack.c.l.b16 %v1983
      %v2075 = vunpack.c.l.b16 %v1984
      %v2076 = vunpack.c.l.b16 %v1985
      %v2077 = vunpack.c.l.b16 %v1986
      %v2078 = vunpack.c.l.b16 %v1987
      %v2079 = vunpack.c.l.b16 %v1988
      %v2080 = vunpack.c.l.b16 %v1989
      %v2081 = vunpack.c.l.b16 %v1990
      %v2082 = vunpack.c.l.b16 %v1991
      %v2083 = vunpack.c.l.b16 %v1992
      %v2084 = vunpack.c.l.b16 %v1993
      %v2085 = vpack.c.b16 %v2070, %v2069
      %v2086 = vpack.c.b16 %v2072, %v2071
      %v2087 = vpack.c.b16 %v2074, %v2073
      %v2088 = vpack.c.b16 %v2076, %v2075
      %v2089 = vpack.c.b16 %v2078, %v2077
      %v2090 = vpack.c.b16 %v2080, %v2079
      %v2091 = vpack.c.b16 %v2082, %v2081
      %v2092 = vpack.c.b16 %v2084, %v2083
      %2101 = vmatpush.bf16.msra.mxu0 %v2092
      %2102 = vmatpush.bf16.msra.mxu0 %v2091
      %2103 = vmatpush.bf16.msra.mxu0 %v2090
      %2104 = vmatpush.bf16.msra.mxu0 %v2089
      %2105 = vmatpush.bf16.msra.mxu0 %v2088
      %2106 = vmatpush.bf16.msra.mxu0 %v2087
      %2107 = vmatpush.bf16.msra.mxu0 %v2086
      %2108 = vmatpush.bf16.msra.mxu0 %v2085
      %2109 = vmatmul.bf16.gmra.mxu0 %v2000
      %v2110 = vpop.f32.mrf.mxu0
      %v2111 = vadd.f32 0.0, %v2110
      %v2112 = vpop.f32.mrf.mxu0
      %v2113 = vadd.f32 0.0, %v2112
      %2114 = vmatmul.bf16.gmra.mxu0 %v2002
      %v2115 = vpop.f32.mrf.mxu0
      %v2116 = vadd.f32 0.0, %v2115
      %v2117 = vpop.f32.mrf.mxu0
      %v2118 = vadd.f32 0.0, %v2117
      %2119 = vmatmul.bf16.gmra.mxu0 %v2004
      %v2120 = vpop.f32.mrf.mxu0
      %v2121 = vadd.f32 0.0, %v2120
      %v2122 = vpop.f32.mrf.mxu0
      %v2123 = vadd.f32 0.0, %v2122
      %2124 = vmatmul.bf16.gmra.mxu0 %v2006
      %v2125 = vpop.f32.mrf.mxu0
      %v2126 = vadd.f32 0.0, %v2125
      %v2127 = vpop.f32.mrf.mxu0
      %v2128 = vadd.f32 0.0, %v2127
      %2129 = vmatmul.bf16.gmra.mxu0 %v2008
      %v2130 = vpop.f32.mrf.mxu0
      %v2131 = vadd.f32 0.0, %v2130
      %v2132 = vpop.f32.mrf.mxu0
      %v2133 = vadd.f32 0.0, %v2132
      %2134 = vmatmul.bf16.gmra.mxu0 %v2010
      %v2135 = vpop.f32.mrf.mxu0
      %v2136 = vadd.f32 0.0, %v2135
      %v2137 = vpop.f32.mrf.mxu0
      %v2138 = vadd.f32 0.0, %v2137
      %2139 = vmatmul.bf16.gmra.mxu0 %v2012
      %v2140 = vpop.f32.mrf.mxu0
      %v2141 = vadd.f32 0.0, %v2140
      %v2142 = vpop.f32.mrf.mxu0
      %v2143 = vadd.f32 0.0, %v2142
      %2144 = vmatmul.bf16.gmra.mxu0 %v2014
      %v2145 = vpop.f32.mrf.mxu0
      %v2146 = vadd.f32 0.0, %v2145
      %v2147 = vpop.f32.mrf.mxu0
      %v2148 = vadd.f32 0.0, %v2147
      %2149 = vmatmul.bf16.gmra.mxu0 %v2016
      %v2150 = vpop.f32.mrf.mxu0
      %v2151 = vadd.f32 0.0, %v2150
      %v2152 = vpop.f32.mrf.mxu0
      %v2153 = vadd.f32 0.0, %v2152
      %2154 = vmatmul.bf16.gmra.mxu0 %v2018
      %v2155 = vpop.f32.mrf.mxu0
      %v2156 = vadd.f32 0.0, %v2155
      %v2157 = vpop.f32.mrf.mxu0
      %v2158 = vadd.f32 0.0, %v2157
      %2159 = vmatmul.bf16.gmra.mxu0 %v2020
      %v2160 = vpop.f32.mrf.mxu0
      %v2161 = vadd.f32 0.0, %v2160
      %v2162 = vpop.f32.mrf.mxu0
      %v2163 = vadd.f32 0.0, %v2162
      %2164 = vmatmul.bf16.gmra.mxu0 %v2022
      %v2165 = vpop.f32.mrf.mxu0
      %v2166 = vadd.f32 0.0, %v2165
      %v2167 = vpop.f32.mrf.mxu0
      %v2168 = vadd.f32 0.0, %v2167
      %2169 = vmatmul.bf16.gmra.mxu0 %v2024
      %v2170 = vpop.f32.mrf.mxu0
      %v2171 = vadd.f32 0.0, %v2170
      %v2172 = vpop.f32.mrf.mxu0
      %v2173 = vadd.f32 0.0, %v2172
      %2174 = vmatmul.bf16.gmra.mxu0 %v2026
      %v2175 = vpop.f32.mrf.mxu0
      %v2176 = vadd.f32 0.0, %v2175
      %v2177 = vpop.f32.mrf.mxu0
      %v2178 = vadd.f32 0.0, %v2177
      %2179 = vmatmul.bf16.gmra.mxu0 %v2028
      %v2180 = vpop.f32.mrf.mxu0
      %v2181 = vadd.f32 0.0, %v2180
      %v2182 = vpop.f32.mrf.mxu0
      %v2183 = vadd.f32 0.0, %v2182
      %2184 = vmatmul.bf16.gmra.mxu0 %v2030
      %v2185 = vpop.f32.mrf.mxu0
      %v2186 = vadd.f32 0.0, %v2185
      %v2187 = vpop.f32.mrf.mxu0
      %v2188 = vadd.f32 0.0, %v2187
      %2189 = vmatmul.bf16.gmra.mxu0 %v2032
      %v2190 = vpop.f32.mrf.mxu0
      %v2191 = vadd.f32 0.0, %v2190
      %v2192 = vpop.f32.mrf.mxu0
      %v2193 = vadd.f32 0.0, %v2192
      %2194 = vmatmul.bf16.gmra.mxu0 %v2034
      %v2195 = vpop.f32.mrf.mxu0
      %v2196 = vadd.f32 0.0, %v2195
      %v2197 = vpop.f32.mrf.mxu0
      %v2198 = vadd.f32 0.0, %v2197
      %2199 = vdwg.mxu0
      %v2200 = vadd.f32 %v1940, %v2111
      %v2201 = vadd.f32 %v1941, %v2113
      %v2202 = vadd.f32 %v1942, %v2116
      %v2203 = vadd.f32 %v1943, %v2118
      %v2204 = vadd.f32 %v1944, %v2121
      %v2205 = vadd.f32 %v1945, %v2123
      %v2206 = vadd.f32 %v1946, %v2126
      %v2207 = vadd.f32 %v1947, %v2128
      %v2208 = vadd.f32 %v1948, %v2131
      %v2209 = vadd.f32 %v1949, %v2133
      %v2210 = vadd.f32 %v1950, %v2136
      %v2211 = vadd.f32 %v1951, %v2138
      %v2212 = vadd.f32 %v1952, %v2141
      %v2213 = vadd.f32 %v1953, %v2143
      %v2214 = vadd.f32 %v1954, %v2146
      %v2215 = vadd.f32 %v1955, %v2148
      %v2216 = vadd.f32 %v1956, %v2151
      %v2217 = vadd.f32 %v1957, %v2153
      %v2218 = vadd.f32 %v1958, %v2156
      %v2219 = vadd.f32 %v1959, %v2158
      %v2220 = vadd.f32 %v1960, %v2161
      %v2221 = vadd.f32 %v1961, %v2163
      %v2222 = vadd.f32 %v1962, %v2166
      %v2223 = vadd.f32 %v1963, %v2168
      %v2224 = vadd.f32 %v1964, %v2171
      %v2225 = vadd.f32 %v1965, %v2173
      %v2226 = vadd.f32 %v1966, %v2176
      %v2227 = vadd.f32 %v1967, %v2178
      %v2228 = vadd.f32 %v1968, %v2181
      %v2229 = vadd.f32 %v1969, %v2183
      %v2230 = vadd.f32 %v1970, %v2186
      %v2231 = vadd.f32 %v1971, %v2188
      %v2232 = vadd.f32 %v1972, %v2191
      %v2233 = vadd.f32 %v1973, %v2193
      %v2234 = vadd.f32 %v1974, %v2196
      %v2235 = vadd.f32 %v1975, %v2198
      %v2236 = vld [vmem:[%s235 + $0x10] sm:$0xc]
      %v2237 = vld [vmem:[%s235 + $0x14] sm:$0xf]
      %v2238 = vld [vmem:[%s235 + $0x18] sm:$0xf]
      %v2239 = vld [vmem:[%s235 + $0x1c] sm:$0xf]
      %v2240 = vld [vmem:[%s235 + $0x20] sm:$0xf]
      %v2241 = vld [vmem:[%s235 + $0x24] sm:$0xf]
      %v2242 = vld [vmem:[%s235 + $0x28] sm:$0xf]
      %v2243 = vld [vmem:[%s235 + $0x2c] sm:$0xf]
      %v2244 = vld [vmem:[%s235 + $0x30] sm:$0xf]
      %v2245 = vld [vmem:[%s235 + $0x34] sm:$0xf]
      %v2246 = vld [vmem:[%s235 + $0x38] sm:$0xf]
      %v2247 = vld [vmem:[%s235 + $0x3c] sm:$0xf]
      %v2248 = vld [vmem:[%s235 + $0x40] sm:$0xf]
      %v2249 = vld [vmem:[%s235 + $0x44] sm:$0xf]
      %v2250 = vld [vmem:[%s235 + $0x48] sm:$0xf]
      %v2251 = vld [vmem:[%s235 + $0x4c] sm:$0xf]
      %v2252 = vld [vmem:[%s235 + $0x50] sm:$0xf]
      %v2253 = vld [vmem:[%s235 + $0x54] sm:$0xf]
      %v2254 = vld [vmem:[%s235 + $0x58] sm:$0xf]
      %v2255 = vld [vmem:[%s235 + $0x5c] sm:$0xf]
      %v2256 = vld [vmem:[%s235 + $0x60] sm:$0xf]
      %v2257 = vld [vmem:[%s235 + $0x64] sm:$0xf]
      %v2258 = vld [vmem:[%s235 + $0x68] sm:$0xf]
      %v2259 = vld [vmem:[%s235 + $0x6c] sm:$0xf]
      %v2260 = vld [vmem:[%s235 + $0x70] sm:$0xf]
      %v2261 = vld [vmem:[%s235 + $0x74] sm:$0xf]
      %v2262 = vld [vmem:[%s235 + $0x78] sm:$0xf]
      %v2263 = vld [vmem:[%s235 + $0x7c] sm:$0xf]
      %v2264 = vld [vmem:[%s235 + $0x80] sm:$0xf]
      %v2265 = vld [vmem:[%s235 + $0x84] sm:$0xf]
      %v2266 = vld [vmem:[%s235 + $0x88] sm:$0xf]
      %v2267 = vld [vmem:[%s235 + $0x8c] sm:$0xf]
      %v2268 = vld [vmem:[%s235 + $0x90] sm:$0xf]
      %v2269 = vld [vmem:[%s235 + $0x94] sm:$0xf]
      %v2270 = vld [vmem:[%s235 + $0x98] sm:$0xf]
      %v2271 = vld [vmem:[%s235 + $0x9c] sm:$0xf]
      %v2272 = vld [vmem:[%s235 + $0xa0] sm:$0x3]
      %s2273 = scalar_lea.vmem %s243, 384
      %v2274 = vld [vmem:[%s2273] sm:$0xf]
      %v2275 = vld [vmem:[%s2273 + $0x4] sm:$0xf]
      %v2276 = vld [vmem:[%s2273 + $0x8] sm:$0xf]
      %v2277 = vld [vmem:[%s2273 + $0xc] sm:$0xf]
      %v2278 = vld [vmem:[%s2273 + $0x10] sm:$0xf]
      %v2279 = vld [vmem:[%s2273 + $0x14] sm:$0xf]
      %v2280 = vld [vmem:[%s2273 + $0x18] sm:$0xf]
      %v2281 = vld [vmem:[%s2273 + $0x1c] sm:$0xf]
      %v2282 = vld [vmem:[%s2273 + $0x20] sm:$0xf]
      %v2283 = vld [vmem:[%s2273 + $0x24] sm:$0xf]
      %v2284 = vld [vmem:[%s2273 + $0x28] sm:$0xf]
      %v2285 = vld [vmem:[%s2273 + $0x2c] sm:$0xf]
      %v2286 = vld [vmem:[%s2273 + $0x30] sm:$0xf]
      %v2287 = vld [vmem:[%s2273 + $0x34] sm:$0xf]
      %v2288 = vld [vmem:[%s2273 + $0x38] sm:$0xf]
      %v2289 = vld [vmem:[%s2273 + $0x3c] sm:$0xf]
      %v2327 = vunpack.c.l.b16 %v2236
      %v2328 = vunpack.c.l.b16 %v2237
      %v2329 = vunpack.c.l.b16 %v2238
      %v2330 = vunpack.c.l.b16 %v2239
      %v2331 = vunpack.c.l.b16 %v2240
      %v2332 = vunpack.c.l.b16 %v2241
      %v2333 = vunpack.c.l.b16 %v2242
      %v2334 = vunpack.c.l.b16 %v2243
      %v2335 = vunpack.c.l.b16 %v2244
      %v2336 = vunpack.c.l.b16 %v2245
      %v2337 = vunpack.c.l.b16 %v2246
      %v2338 = vunpack.c.l.b16 %v2247
      %v2339 = vunpack.c.l.b16 %v2248
      %v2340 = vunpack.c.l.b16 %v2249
      %v2341 = vunpack.c.l.b16 %v2250
      %v2342 = vunpack.c.l.b16 %v2251
      %v2343 = vunpack.c.l.b16 %v2252
      %v2344 = vunpack.c.l.b16 %v2253
      %v2345 = vunpack.c.l.b16 %v2254
      %v2346 = vunpack.c.l.b16 %v2255
      %v2347 = vunpack.c.l.b16 %v2256
      %v2348 = vunpack.c.l.b16 %v2257
      %v2349 = vunpack.c.l.b16 %v2258
      %v2350 = vunpack.c.l.b16 %v2259
      %v2351 = vunpack.c.l.b16 %v2260
      %v2352 = vunpack.c.l.b16 %v2261
      %v2353 = vunpack.c.l.b16 %v2262
      %v2354 = vunpack.c.l.b16 %v2263
      %v2355 = vunpack.c.l.b16 %v2264
      %v2356 = vunpack.c.l.b16 %v2265
      %v2357 = vunpack.c.l.b16 %v2266
      %v2358 = vunpack.c.l.b16 %v2267
      %v2359 = vunpack.c.l.b16 %v2268
      %v2360 = vunpack.c.l.b16 %v2269
      %v2361 = vunpack.c.l.b16 %v2270
      %v2362 = vunpack.c.l.b16 %v2271
      %v2363 = vunpack.c.l.b16 %v2272
      %v2364 = vpack.c.b16 %v2328, %v2327
      %v2365 = vpack.c.b16 %v2330, %v2329
      %v2366 = vpack.c.b16 %v2332, %v2331
      %v2367 = vpack.c.b16 %v2334, %v2333
      %v2368 = vpack.c.b16 %v2336, %v2335
      %v2369 = vpack.c.b16 %v2338, %v2337
      %v2370 = vpack.c.b16 %v2340, %v2339
      %v2371 = vpack.c.b16 %v2342, %v2341
      %v2372 = vpack.c.b16 %v2344, %v2343
      %v2373 = vpack.c.b16 %v2346, %v2345
      %v2374 = vpack.c.b16 %v2348, %v2347
      %v2375 = vpack.c.b16 %v2350, %v2349
      %v2376 = vpack.c.b16 %v2352, %v2351
      %v2377 = vpack.c.b16 %v2354, %v2353
      %v2378 = vpack.c.b16 %v2356, %v2355
      %v2379 = vpack.c.b16 %v2358, %v2357
      %v2380 = vpack.c.b16 %v2360, %v2359
      %v2381 = vpack.c.b16 %v2362, %v2361
      %v2382 = vpack.c.b16 %v2363, %v2363
      %v2383 = vrot.slane %v2364, 2
      %v2384 = vrot.slane %v2365, 2
      %v2385 = vsel %vm1997, %v2383, %v2384
      %v2386 = vrot.slane %v2366, 2
      %v2387 = vsel %vm1997, %v2384, %v2386
      %v2388 = vrot.slane %v2367, 2
      %v2389 = vsel %vm1997, %v2386, %v2388
      %v2390 = vrot.slane %v2368, 2
      %v2391 = vsel %vm1997, %v2388, %v2390
      %v2392 = vrot.slane %v2369, 2
      %v2393 = vsel %vm1997, %v2390, %v2392
      %v2394 = vrot.slane %v2370, 2
      %v2395 = vsel %vm1997, %v2392, %v2394
      %v2396 = vrot.slane %v2371, 2
      %v2397 = vsel %vm1997, %v2394, %v2396
      %v2398 = vrot.slane %v2372, 2
      %v2399 = vsel %vm1997, %v2396, %v2398
      %v2400 = vrot.slane %v2373, 2
      %v2401 = vsel %vm1997, %v2398, %v2400
      %v2402 = vrot.slane %v2374, 2
      %v2403 = vsel %vm1997, %v2400, %v2402
      %v2404 = vrot.slane %v2375, 2
      %v2405 = vsel %vm1997, %v2402, %v2404
      %v2406 = vrot.slane %v2376, 2
      %v2407 = vsel %vm1997, %v2404, %v2406
      %v2408 = vrot.slane %v2377, 2
      %v2409 = vsel %vm1997, %v2406, %v2408
      %v2410 = vrot.slane %v2378, 2
      %v2411 = vsel %vm1997, %v2408, %v2410
      %v2412 = vrot.slane %v2379, 2
      %v2413 = vsel %vm1997, %v2410, %v2412
      %v2414 = vrot.slane %v2380, 2
      %v2415 = vsel %vm1997, %v2412, %v2414
      %v2416 = vrot.slane %v2381, 2
      %v2417 = vsel %vm1997, %v2414, %v2416
      %v2418 = vrot.slane %v2382, 2
      %v2419 = vsel %vm1997, %v2416, %v2418
      %v2454 = vunpack.c.l.b16 %v2274
      %v2455 = vunpack.c.l.b16 %v2275
      %v2456 = vunpack.c.l.b16 %v2276
      %v2457 = vunpack.c.l.b16 %v2277
      %v2458 = vunpack.c.l.b16 %v2278
      %v2459 = vunpack.c.l.b16 %v2279
      %v2460 = vunpack.c.l.b16 %v2280
      %v2461 = vunpack.c.l.b16 %v2281
      %v2462 = vunpack.c.l.b16 %v2282
      %v2463 = vunpack.c.l.b16 %v2283
      %v2464 = vunpack.c.l.b16 %v2284
      %v2465 = vunpack.c.l.b16 %v2285
      %v2466 = vunpack.c.l.b16 %v2286
      %v2467 = vunpack.c.l.b16 %v2287
      %v2468 = vunpack.c.l.b16 %v2288
      %v2469 = vunpack.c.l.b16 %v2289
      %v2470 = vpack.c.b16 %v2455, %v2454
      %v2471 = vpack.c.b16 %v2457, %v2456
      %v2472 = vpack.c.b16 %v2459, %v2458
      %v2473 = vpack.c.b16 %v2461, %v2460
      %v2474 = vpack.c.b16 %v2463, %v2462
      %v2475 = vpack.c.b16 %v2465, %v2464
      %v2476 = vpack.c.b16 %v2467, %v2466
      %v2477 = vpack.c.b16 %v2469, %v2468
      %2486 = vmatpush.bf16.msra.mxu0 %v2477
      %2487 = vmatpush.bf16.msra.mxu0 %v2476
      %2488 = vmatpush.bf16.msra.mxu0 %v2475
      %2489 = vmatpush.bf16.msra.mxu0 %v2474
      %2490 = vmatpush.bf16.msra.mxu0 %v2473
      %2491 = vmatpush.bf16.msra.mxu0 %v2472
      %2492 = vmatpush.bf16.msra.mxu0 %v2471
      %2493 = vmatpush.bf16.msra.mxu0 %v2470
      %2494 = vmatmul.bf16.gmra.mxu0 %v2385
      %v2495 = vpop.f32.mrf.mxu0
      %v2496 = vadd.f32 0.0, %v2495
      %v2497 = vpop.f32.mrf.mxu0
      %v2498 = vadd.f32 0.0, %v2497
      %2499 = vmatmul.bf16.gmra.mxu0 %v2387
      %v2500 = vpop.f32.mrf.mxu0
      %v2501 = vadd.f32 0.0, %v2500
      %v2502 = vpop.f32.mrf.mxu0
      %v2503 = vadd.f32 0.0, %v2502
      %2504 = vmatmul.bf16.gmra.mxu0 %v2389
      %v2505 = vpop.f32.mrf.mxu0
      %v2506 = vadd.f32 0.0, %v2505
      %v2507 = vpop.f32.mrf.mxu0
      %v2508 = vadd.f32 0.0, %v2507
      %2509 = vmatmul.bf16.gmra.mxu0 %v2391
      %v2510 = vpop.f32.mrf.mxu0
      %v2511 = vadd.f32 0.0, %v2510
      %v2512 = vpop.f32.mrf.mxu0
      %v2513 = vadd.f32 0.0, %v2512
      %2514 = vmatmul.bf16.gmra.mxu0 %v2393
      %v2515 = vpop.f32.mrf.mxu0
      %v2516 = vadd.f32 0.0, %v2515
      %v2517 = vpop.f32.mrf.mxu0
      %v2518 = vadd.f32 0.0, %v2517
      %2519 = vmatmul.bf16.gmra.mxu0 %v2395
      %v2520 = vpop.f32.mrf.mxu0
      %v2521 = vadd.f32 0.0, %v2520
      %v2522 = vpop.f32.mrf.mxu0
      %v2523 = vadd.f32 0.0, %v2522
      %2524 = vmatmul.bf16.gmra.mxu0 %v2397
      %v2525 = vpop.f32.mrf.mxu0
      %v2526 = vadd.f32 0.0, %v2525
      %v2527 = vpop.f32.mrf.mxu0
      %v2528 = vadd.f32 0.0, %v2527
      %2529 = vmatmul.bf16.gmra.mxu0 %v2399
      %v2530 = vpop.f32.mrf.mxu0
      %v2531 = vadd.f32 0.0, %v2530
      %v2532 = vpop.f32.mrf.mxu0
      %v2533 = vadd.f32 0.0, %v2532
      %2534 = vmatmul.bf16.gmra.mxu0 %v2401
      %v2535 = vpop.f32.mrf.mxu0
      %v2536 = vadd.f32 0.0, %v2535
      %v2537 = vpop.f32.mrf.mxu0
      %v2538 = vadd.f32 0.0, %v2537
      %2539 = vmatmul.bf16.gmra.mxu0 %v2403
      %v2540 = vpop.f32.mrf.mxu0
      %v2541 = vadd.f32 0.0, %v2540
      %v2542 = vpop.f32.mrf.mxu0
      %v2543 = vadd.f32 0.0, %v2542
      %2544 = vmatmul.bf16.gmra.mxu0 %v2405
      %v2545 = vpop.f32.mrf.mxu0
      %v2546 = vadd.f32 0.0, %v2545
      %v2547 = vpop.f32.mrf.mxu0
      %v2548 = vadd.f32 0.0, %v2547
      %2549 = vmatmul.bf16.gmra.mxu0 %v2407
      %v2550 = vpop.f32.mrf.mxu0
      %v2551 = vadd.f32 0.0, %v2550
      %v2552 = vpop.f32.mrf.mxu0
      %v2553 = vadd.f32 0.0, %v2552
      %2554 = vmatmul.bf16.gmra.mxu0 %v2409
      %v2555 = vpop.f32.mrf.mxu0
      %v2556 = vadd.f32 0.0, %v2555
      %v2557 = vpop.f32.mrf.mxu0
      %v2558 = vadd.f32 0.0, %v2557
      %2559 = vmatmul.bf16.gmra.mxu0 %v2411
      %v2560 = vpop.f32.mrf.mxu0
      %v2561 = vadd.f32 0.0, %v2560
      %v2562 = vpop.f32.mrf.mxu0
      %v2563 = vadd.f32 0.0, %v2562
      %2564 = vmatmul.bf16.gmra.mxu0 %v2413
      %v2565 = vpop.f32.mrf.mxu0
      %v2566 = vadd.f32 0.0, %v2565
      %v2567 = vpop.f32.mrf.mxu0
      %v2568 = vadd.f32 0.0, %v2567
      %2569 = vmatmul.bf16.gmra.mxu0 %v2415
      %v2570 = vpop.f32.mrf.mxu0
      %v2571 = vadd.f32 0.0, %v2570
      %v2572 = vpop.f32.mrf.mxu0
      %v2573 = vadd.f32 0.0, %v2572
      %2574 = vmatmul.bf16.gmra.mxu0 %v2417
      %v2575 = vpop.f32.mrf.mxu0
      %v2576 = vadd.f32 0.0, %v2575
      %v2577 = vpop.f32.mrf.mxu0
      %v2578 = vadd.f32 0.0, %v2577
      %2579 = vmatmul.bf16.gmra.mxu0 %v2419
      %v2580 = vpop.f32.mrf.mxu0
      %v2581 = vadd.f32 0.0, %v2580
      %v2582 = vpop.f32.mrf.mxu0
      %v2583 = vadd.f32 0.0, %v2582
      %2584 = vdwg.mxu0
      %v2585 = vadd.f32 %v2200, %v2496
      %v2586 = vadd.f32 %v2201, %v2498
      %v2587 = vadd.f32 %v2202, %v2501
      %v2588 = vadd.f32 %v2203, %v2503
      %v2589 = vadd.f32 %v2204, %v2506
      %v2590 = vadd.f32 %v2205, %v2508
      %v2591 = vadd.f32 %v2206, %v2511
      %v2592 = vadd.f32 %v2207, %v2513
      %v2593 = vadd.f32 %v2208, %v2516
      %v2594 = vadd.f32 %v2209, %v2518
      %v2595 = vadd.f32 %v2210, %v2521
      %v2596 = vadd.f32 %v2211, %v2523
      %v2597 = vadd.f32 %v2212, %v2526
      %v2598 = vadd.f32 %v2213, %v2528
      %v2599 = vadd.f32 %v2214, %v2531
      %v2600 = vadd.f32 %v2215, %v2533
      %v2601 = vadd.f32 %v2216, %v2536
      %v2602 = vadd.f32 %v2217, %v2538
      %v2603 = vadd.f32 %v2218, %v2541
      %v2604 = vadd.f32 %v2219, %v2543
      %v2605 = vadd.f32 %v2220, %v2546
      %v2606 = vadd.f32 %v2221, %v2548
      %v2607 = vadd.f32 %v2222, %v2551
      %v2608 = vadd.f32 %v2223, %v2553
      %v2609 = vadd.f32 %v2224, %v2556
      %v2610 = vadd.f32 %v2225, %v2558
      %v2611 = vadd.f32 %v2226, %v2561
      %v2612 = vadd.f32 %v2227, %v2563
      %v2613 = vadd.f32 %v2228, %v2566
      %v2614 = vadd.f32 %v2229, %v2568
      %v2615 = vadd.f32 %v2230, %v2571
      %v2616 = vadd.f32 %v2231, %v2573
      %v2617 = vadd.f32 %v2232, %v2576
      %v2618 = vadd.f32 %v2233, %v2578
      %v2619 = vadd.f32 %v2234, %v2581
      %v2620 = vadd.f32 %v2235, %v2583
      %v2621 = vld [vmem:[%s235 + $0xa0] sm:$0x7]
      %s2622 = scalar_lea.vmem %s243, 448
      %v2623 = vld [vmem:[%s2622] sm:$0xf]
      %v2624 = vld [vmem:[%s2622 + $0x4] sm:$0xf]
      %v2625 = vld [vmem:[%s2622 + $0x8] sm:$0xf]
      %v2626 = vld [vmem:[%s2622 + $0xc] sm:$0xf]
      %v2627 = vld [vmem:[%s2622 + $0x10] sm:$0xf]
      %v2628 = vld [vmem:[%s2622 + $0x14] sm:$0xf]
      %v2629 = vld [vmem:[%s2622 + $0x18] sm:$0xf]
      %v2630 = vld [vmem:[%s2622 + $0x1c] sm:$0xf]
      %v2631 = vld [vmem:[%s2622 + $0x20] sm:$0xf]
      %v2632 = vld [vmem:[%s2622 + $0x24] sm:$0xf]
      %v2633 = vld [vmem:[%s2622 + $0x28] sm:$0xf]
      %v2634 = vld [vmem:[%s2622 + $0x2c] sm:$0xf]
      %v2635 = vld [vmem:[%s2622 + $0x30] sm:$0xf]
      %v2636 = vld [vmem:[%s2622 + $0x34] sm:$0xf]
      %v2637 = vld [vmem:[%s2622 + $0x38] sm:$0xf]
      %v2638 = vld [vmem:[%s2622 + $0x3c] sm:$0xf]
      %v2640 = vunpack.c.l.b16 %v2621
      %v2641 = vpack.c.b16 %v2640, %v2640
      %vm2642 = vsmask.f32 5376
      %v2644 = vshrl.u32 %v2364, 16
      %v2646 = vrot.slane %v2644, 2
      %v2647 = vshll.u32 %v2364, 16
      %v2649 = vrot.slane %v2647, 3
      %v2650 = vor.u32 %v2646, %v2649
      %v2652 = vshrl.u32 %v2365, 16
      %v2654 = vrot.slane %v2652, 2
      %v2655 = vshll.u32 %v2365, 16
      %v2657 = vrot.slane %v2655, 3
      %v2658 = vor.u32 %v2654, %v2657
      %v2659 = vsel %vm2642, %v2650, %v2658
      %v2661 = vshrl.u32 %v2366, 16
      %v2663 = vrot.slane %v2661, 2
      %v2664 = vshll.u32 %v2366, 16
      %v2666 = vrot.slane %v2664, 3
      %v2667 = vor.u32 %v2663, %v2666
      %v2668 = vsel %vm2642, %v2658, %v2667
      %v2670 = vshrl.u32 %v2367, 16
      %v2672 = vrot.slane %v2670, 2
      %v2673 = vshll.u32 %v2367, 16
      %v2675 = vrot.slane %v2673, 3
      %v2676 = vor.u32 %v2672, %v2675
      %v2677 = vsel %vm2642, %v2667, %v2676
      %v2679 = vshrl.u32 %v2368, 16
      %v2681 = vrot.slane %v2679, 2
      %v2682 = vshll.u32 %v2368, 16
      %v2684 = vrot.slane %v2682, 3
      %v2685 = vor.u32 %v2681, %v2684
      %v2686 = vsel %vm2642, %v2676, %v2685
      %v2688 = vshrl.u32 %v2369, 16
      %v2690 = vrot.slane %v2688, 2
      %v2691 = vshll.u32 %v2369, 16
      %v2693 = vrot.slane %v2691, 3
      %v2694 = vor.u32 %v2690, %v2693
      %v2695 = vsel %vm2642, %v2685, %v2694
      %v2697 = vshrl.u32 %v2370, 16
      %v2699 = vrot.slane %v2697, 2
      %v2700 = vshll.u32 %v2370, 16
      %v2702 = vrot.slane %v2700, 3
      %v2703 = vor.u32 %v2699, %v2702
      %v2704 = vsel %vm2642, %v2694, %v2703
      %v2706 = vshrl.u32 %v2371, 16
      %v2708 = vrot.slane %v2706, 2
      %v2709 = vshll.u32 %v2371, 16
      %v2711 = vrot.slane %v2709, 3
      %v2712 = vor.u32 %v2708, %v2711
      %v2713 = vsel %vm2642, %v2703, %v2712
      %v2715 = vshrl.u32 %v2372, 16
      %v2717 = vrot.slane %v2715, 2
      %v2718 = vshll.u32 %v2372, 16
      %v2720 = vrot.slane %v2718, 3
      %v2721 = vor.u32 %v2717, %v2720
      %v2722 = vsel %vm2642, %v2712, %v2721
      %v2724 = vshrl.u32 %v2373, 16
      %v2726 = vrot.slane %v2724, 2
      %v2727 = vshll.u32 %v2373, 16
      %v2729 = vrot.slane %v2727, 3
      %v2730 = vor.u32 %v2726, %v2729
      %v2731 = vsel %vm2642, %v2721, %v2730
      %v2733 = vshrl.u32 %v2374, 16
      %v2735 = vrot.slane %v2733, 2
      %v2736 = vshll.u32 %v2374, 16
      %v2738 = vrot.slane %v2736, 3
      %v2739 = vor.u32 %v2735, %v2738
      %v2740 = vsel %vm2642, %v2730, %v2739
      %v2742 = vshrl.u32 %v2375, 16
      %v2744 = vrot.slane %v2742, 2
      %v2745 = vshll.u32 %v2375, 16
      %v2747 = vrot.slane %v2745, 3
      %v2748 = vor.u32 %v2744, %v2747
      %v2749 = vsel %vm2642, %v2739, %v2748
      %v2751 = vshrl.u32 %v2376, 16
      %v2753 = vrot.slane %v2751, 2
      %v2754 = vshll.u32 %v2376, 16
      %v2756 = vrot.slane %v2754, 3
      %v2757 = vor.u32 %v2753, %v2756
      %v2758 = vsel %vm2642, %v2748, %v2757
      %v2760 = vshrl.u32 %v2377, 16
      %v2762 = vrot.slane %v2760, 2
      %v2763 = vshll.u32 %v2377, 16
      %v2765 = vrot.slane %v2763, 3
      %v2766 = vor.u32 %v2762, %v2765
      %v2767 = vsel %vm2642, %v2757, %v2766
      %v2769 = vshrl.u32 %v2378, 16
      %v2771 = vrot.slane %v2769, 2
      %v2772 = vshll.u32 %v2378, 16
      %v2774 = vrot.slane %v2772, 3
      %v2775 = vor.u32 %v2771, %v2774
      %v2776 = vsel %vm2642, %v2766, %v2775
      %v2778 = vshrl.u32 %v2379, 16
      %v2780 = vrot.slane %v2778, 2
      %v2781 = vshll.u32 %v2379, 16
      %v2783 = vrot.slane %v2781, 3
      %v2784 = vor.u32 %v2780, %v2783
      %v2785 = vsel %vm2642, %v2775, %v2784
      %v2787 = vshrl.u32 %v2380, 16
      %v2789 = vrot.slane %v2787, 2
      %v2790 = vshll.u32 %v2380, 16
      %v2792 = vrot.slane %v2790, 3
      %v2793 = vor.u32 %v2789, %v2792
      %v2794 = vsel %vm2642, %v2784, %v2793
      %v2796 = vshrl.u32 %v2381, 16
      %v2798 = vrot.slane %v2796, 2
      %v2799 = vshll.u32 %v2381, 16
      %v2801 = vrot.slane %v2799, 3
      %v2802 = vor.u32 %v2798, %v2801
      %v2803 = vsel %vm2642, %v2793, %v2802
      %v2805 = vshrl.u32 %v2641, 16
      %v2807 = vrot.slane %v2805, 2
      %v2808 = vshll.u32 %v2641, 16
      %v2810 = vrot.slane %v2808, 3
      %v2811 = vor.u32 %v2807, %v2810
      %v2812 = vsel %vm2642, %v2802, %v2811
      %v2847 = vunpack.c.l.b16 %v2623
      %v2848 = vunpack.c.l.b16 %v2624
      %v2849 = vunpack.c.l.b16 %v2625
      %v2850 = vunpack.c.l.b16 %v2626
      %v2851 = vunpack.c.l.b16 %v2627
      %v2852 = vunpack.c.l.b16 %v2628
      %v2853 = vunpack.c.l.b16 %v2629
      %v2854 = vunpack.c.l.b16 %v2630
      %v2855 = vunpack.c.l.b16 %v2631
      %v2856 = vunpack.c.l.b16 %v2632
      %v2857 = vunpack.c.l.b16 %v2633
      %v2858 = vunpack.c.l.b16 %v2634
      %v2859 = vunpack.c.l.b16 %v2635
      %v2860 = vunpack.c.l.b16 %v2636
      %v2861 = vunpack.c.l.b16 %v2637
      %v2862 = vunpack.c.l.b16 %v2638
      %v2863 = vpack.c.b16 %v2848, %v2847
      %v2864 = vpack.c.b16 %v2850, %v2849
      %v2865 = vpack.c.b16 %v2852, %v2851
      %v2866 = vpack.c.b16 %v2854, %v2853
      %v2867 = vpack.c.b16 %v2856, %v2855
      %v2868 = vpack.c.b16 %v2858, %v2857
      %v2869 = vpack.c.b16 %v2860, %v2859
      %v2870 = vpack.c.b16 %v2862, %v2861
      %2879 = vmatpush.bf16.msra.mxu0 %v2870
      %2880 = vmatpush.bf16.msra.mxu0 %v2869
      %2881 = vmatpush.bf16.msra.mxu0 %v2868
      %2882 = vmatpush.bf16.msra.mxu0 %v2867
      %2883 = vmatpush.bf16.msra.mxu0 %v2866
      %2884 = vmatpush.bf16.msra.mxu0 %v2865
      %2885 = vmatpush.bf16.msra.mxu0 %v2864
      %2886 = vmatpush.bf16.msra.mxu0 %v2863
      %2887 = vmatmul.bf16.gmra.mxu0 %v2659
      %v2888 = vpop.f32.mrf.mxu0
      %v2889 = vadd.f32 0.0, %v2888
      %v2890 = vpop.f32.mrf.mxu0
      %v2891 = vadd.f32 0.0, %v2890
      %2892 = vmatmul.bf16.gmra.mxu0 %v2668
      %v2893 = vpop.f32.mrf.mxu0
      %v2894 = vadd.f32 0.0, %v2893
      %v2895 = vpop.f32.mrf.mxu0
      %v2896 = vadd.f32 0.0, %v2895
      %2897 = vmatmul.bf16.gmra.mxu0 %v2677
      %v2898 = vpop.f32.mrf.mxu0
      %v2899 = vadd.f32 0.0, %v2898
      %v2900 = vpop.f32.mrf.mxu0
      %v2901 = vadd.f32 0.0, %v2900
      %2902 = vmatmul.bf16.gmra.mxu0 %v2686
      %v2903 = vpop.f32.mrf.mxu0
      %v2904 = vadd.f32 0.0, %v2903
      %v2905 = vpop.f32.mrf.mxu0
      %v2906 = vadd.f32 0.0, %v2905
      %2907 = vmatmul.bf16.gmra.mxu0 %v2695
      %v2908 = vpop.f32.mrf.mxu0
      %v2909 = vadd.f32 0.0, %v2908
      %v2910 = vpop.f32.mrf.mxu0
      %v2911 = vadd.f32 0.0, %v2910
      %2912 = vmatmul.bf16.gmra.mxu0 %v2704
      %v2913 = vpop.f32.mrf.mxu0
      %v2914 = vadd.f32 0.0, %v2913
      %v2915 = vpop.f32.mrf.mxu0
      %v2916 = vadd.f32 0.0, %v2915
      %2917 = vmatmul.bf16.gmra.mxu0 %v2713
      %v2918 = vpop.f32.mrf.mxu0
      %v2919 = vadd.f32 0.0, %v2918
      %v2920 = vpop.f32.mrf.mxu0
      %v2921 = vadd.f32 0.0, %v2920
      %2922 = vmatmul.bf16.gmra.mxu0 %v2722
      %v2923 = vpop.f32.mrf.mxu0
      %v2924 = vadd.f32 0.0, %v2923
      %v2925 = vpop.f32.mrf.mxu0
      %v2926 = vadd.f32 0.0, %v2925
      %2927 = vmatmul.bf16.gmra.mxu0 %v2731
      %v2928 = vpop.f32.mrf.mxu0
      %v2929 = vadd.f32 0.0, %v2928
      %v2930 = vpop.f32.mrf.mxu0
      %v2931 = vadd.f32 0.0, %v2930
      %2932 = vmatmul.bf16.gmra.mxu0 %v2740
      %v2933 = vpop.f32.mrf.mxu0
      %v2934 = vadd.f32 0.0, %v2933
      %v2935 = vpop.f32.mrf.mxu0
      %v2936 = vadd.f32 0.0, %v2935
      %2937 = vmatmul.bf16.gmra.mxu0 %v2749
      %v2938 = vpop.f32.mrf.mxu0
      %v2939 = vadd.f32 0.0, %v2938
      %v2940 = vpop.f32.mrf.mxu0
      %v2941 = vadd.f32 0.0, %v2940
      %2942 = vmatmul.bf16.gmra.mxu0 %v2758
      %v2943 = vpop.f32.mrf.mxu0
      %v2944 = vadd.f32 0.0, %v2943
      %v2945 = vpop.f32.mrf.mxu0
      %v2946 = vadd.f32 0.0, %v2945
      %2947 = vmatmul.bf16.gmra.mxu0 %v2767
      %v2948 = vpop.f32.mrf.mxu0
      %v2949 = vadd.f32 0.0, %v2948
      %v2950 = vpop.f32.mrf.mxu0
      %v2951 = vadd.f32 0.0, %v2950
      %2952 = vmatmul.bf16.gmra.mxu0 %v2776
      %v2953 = vpop.f32.mrf.mxu0
      %v2954 = vadd.f32 0.0, %v2953
      %v2955 = vpop.f32.mrf.mxu0
      %v2956 = vadd.f32 0.0, %v2955
      %2957 = vmatmul.bf16.gmra.mxu0 %v2785
      %v2958 = vpop.f32.mrf.mxu0
      %v2959 = vadd.f32 0.0, %v2958
      %v2960 = vpop.f32.mrf.mxu0
      %v2961 = vadd.f32 0.0, %v2960
      %2962 = vmatmul.bf16.gmra.mxu0 %v2794
      %v2963 = vpop.f32.mrf.mxu0
      %v2964 = vadd.f32 0.0, %v2963
      %v2965 = vpop.f32.mrf.mxu0
      %v2966 = vadd.f32 0.0, %v2965
      %2967 = vmatmul.bf16.gmra.mxu0 %v2803
      %v2968 = vpop.f32.mrf.mxu0
      %v2969 = vadd.f32 0.0, %v2968
      %v2970 = vpop.f32.mrf.mxu0
      %v2971 = vadd.f32 0.0, %v2970
      %2972 = vmatmul.bf16.gmra.mxu0 %v2812
      %v2973 = vpop.f32.mrf.mxu0
      %v2974 = vadd.f32 0.0, %v2973
      %v2975 = vpop.f32.mrf.mxu0
      %v2976 = vadd.f32 0.0, %v2975
      %2977 = vdwg.mxu0
      %v2978 = vadd.f32 %v2585, %v2889
      %v2979 = vadd.f32 %v2586, %v2891
      %v2980 = vadd.f32 %v2587, %v2894
      %v2981 = vadd.f32 %v2588, %v2896
      %v2982 = vadd.f32 %v2589, %v2899
      %v2983 = vadd.f32 %v2590, %v2901
      %v2984 = vadd.f32 %v2591, %v2904
      %v2985 = vadd.f32 %v2592, %v2906
      %v2986 = vadd.f32 %v2593, %v2909
      %v2987 = vadd.f32 %v2594, %v2911
      %v2988 = vadd.f32 %v2595, %v2914
      %v2989 = vadd.f32 %v2596, %v2916
      %v2990 = vadd.f32 %v2597, %v2919
      %v2991 = vadd.f32 %v2598, %v2921
      %v2992 = vadd.f32 %v2599, %v2924
      %v2993 = vadd.f32 %v2600, %v2926
      %v2994 = vadd.f32 %v2601, %v2929
      %v2995 = vadd.f32 %v2602, %v2931
      %v2996 = vadd.f32 %v2603, %v2934
      %v2997 = vadd.f32 %v2604, %v2936
      %v2998 = vadd.f32 %v2605, %v2939
      %v2999 = vadd.f32 %v2606, %v2941
      %v3000 = vadd.f32 %v2607, %v2944
      %v3001 = vadd.f32 %v2608, %v2946
      %v3002 = vadd.f32 %v2609, %v2949
      %v3003 = vadd.f32 %v2610, %v2951
      %v3004 = vadd.f32 %v2611, %v2954
      %v3005 = vadd.f32 %v2612, %v2956
      %v3006 = vadd.f32 %v2613, %v2959
      %v3007 = vadd.f32 %v2614, %v2961
      %v3008 = vadd.f32 %v2615, %v2964
      %v3009 = vadd.f32 %v2616, %v2966
      %v3010 = vadd.f32 %v2617, %v2969
      %v3011 = vadd.f32 %v2618, %v2971
      %v3012 = vadd.f32 %v2619, %v2974
      %v3013 = vadd.f32 %v2620, %v2976
      %v3014 = vld [vmem:[%s235 + $0x10] sm:$0x8]
      %s3015 = scalar_lea.vmem %s243, 512
      %v3016 = vld [vmem:[%s3015] sm:$0xf]
      %v3017 = vld [vmem:[%s3015 + $0x4] sm:$0xf]
      %v3018 = vld [vmem:[%s3015 + $0x8] sm:$0xf]
      %v3019 = vld [vmem:[%s3015 + $0xc] sm:$0xf]
      %v3020 = vld [vmem:[%s3015 + $0x10] sm:$0xf]
      %v3021 = vld [vmem:[%s3015 + $0x14] sm:$0xf]
      %v3022 = vld [vmem:[%s3015 + $0x18] sm:$0xf]
      %v3023 = vld [vmem:[%s3015 + $0x1c] sm:$0xf]
      %v3024 = vld [vmem:[%s3015 + $0x20] sm:$0xf]
      %v3025 = vld [vmem:[%s3015 + $0x24] sm:$0xf]
      %v3026 = vld [vmem:[%s3015 + $0x28] sm:$0xf]
      %v3027 = vld [vmem:[%s3015 + $0x2c] sm:$0xf]
      %v3028 = vld [vmem:[%s3015 + $0x30] sm:$0xf]
      %v3029 = vld [vmem:[%s3015 + $0x34] sm:$0xf]
      %v3030 = vld [vmem:[%s3015 + $0x38] sm:$0xf]
      %v3031 = vld [vmem:[%s3015 + $0x3c] sm:$0xf]
      %v3033 = vunpack.c.l.b16 %v3014
      %v3034 = vpack.c.b16 %v2328, %v3033
      %vm3035 = vcmask 1044480
      %v3036 = vrot.slane %v3034, 3
      %v3037 = vrot.slane %v2365, 3
      %v3038 = vsel %vm3035, %v3036, %v3037
      %v3039 = vrot.slane %v2366, 3
      %v3040 = vsel %vm3035, %v3037, %v3039
      %v3041 = vrot.slane %v2367, 3
      %v3042 = vsel %vm3035, %v3039, %v3041
      %v3043 = vrot.slane %v2368, 3
      %v3044 = vsel %vm3035, %v3041, %v3043
      %v3045 = vrot.slane %v2369, 3
      %v3046 = vsel %vm3035, %v3043, %v3045
      %v3047 = vrot.slane %v2370, 3
      %v3048 = vsel %vm3035, %v3045, %v3047
      %v3049 = vrot.slane %v2371, 3
      %v3050 = vsel %vm3035, %v3047, %v3049
      %v3051 = vrot.slane %v2372, 3
      %v3052 = vsel %vm3035, %v3049, %v3051
      %v3053 = vrot.slane %v2373, 3
      %v3054 = vsel %vm3035, %v3051, %v3053
      %v3055 = vrot.slane %v2374, 3
      %v3056 = vsel %vm3035, %v3053, %v3055
      %v3057 = vrot.slane %v2375, 3
      %v3058 = vsel %vm3035, %v3055, %v3057
      %v3059 = vrot.slane %v2376, 3
      %v3060 = vsel %vm3035, %v3057, %v3059
      %v3061 = vrot.slane %v2377, 3
      %v3062 = vsel %vm3035, %v3059, %v3061
      %v3063 = vrot.slane %v2378, 3
      %v3064 = vsel %vm3035, %v3061, %v3063
      %v3065 = vrot.slane %v2379, 3
      %v3066 = vsel %vm3035, %v3063, %v3065
      %v3067 = vrot.slane %v2380, 3
      %v3068 = vsel %vm3035, %v3065, %v3067
      %v3069 = vrot.slane %v2381, 3
      %v3070 = vsel %vm3035, %v3067, %v3069
      %v3071 = vrot.slane %v2641, 3
      %v3072 = vsel %vm3035, %v3069, %v3071
      %v3107 = vunpack.c.l.b16 %v3016
      %v3108 = vunpack.c.l.b16 %v3017
      %v3109 = vunpack.c.l.b16 %v3018
      %v3110 = vunpack.c.l.b16 %v3019
      %v3111 = vunpack.c.l.b16 %v3020
      %v3112 = vunpack.c.l.b16 %v3021
      %v3113 = vunpack.c.l.b16 %v3022
      %v3114 = vunpack.c.l.b16 %v3023
      %v3115 = vunpack.c.l.b16 %v3024
      %v3116 = vunpack.c.l.b16 %v3025
      %v3117 = vunpack.c.l.b16 %v3026
      %v3118 = vunpack.c.l.b16 %v3027
      %v3119 = vunpack.c.l.b16 %v3028
      %v3120 = vunpack.c.l.b16 %v3029
      %v3121 = vunpack.c.l.b16 %v3030
      %v3122 = vunpack.c.l.b16 %v3031
      %v3123 = vpack.c.b16 %v3108, %v3107
      %v3124 = vpack.c.b16 %v3110, %v3109
      %v3125 = vpack.c.b16 %v3112, %v3111
      %v3126 = vpack.c.b16 %v3114, %v3113
      %v3127 = vpack.c.b16 %v3116, %v3115
      %v3128 = vpack.c.b16 %v3118, %v3117
      %v3129 = vpack.c.b16 %v3120, %v3119
      %v3130 = vpack.c.b16 %v3122, %v3121
      %3139 = vmatpush.bf16.msra.mxu0 %v3130
      %3140 = vmatpush.bf16.msra.mxu0 %v3129
      %3141 = vmatpush.bf16.msra.mxu0 %v3128
      %3142 = vmatpush.bf16.msra.mxu0 %v3127
      %3143 = vmatpush.bf16.msra.mxu0 %v3126
      %3144 = vmatpush.bf16.msra.mxu0 %v3125
      %3145 = vmatpush.bf16.msra.mxu0 %v3124
      %3146 = vmatpush.bf16.msra.mxu0 %v3123
      %3147 = vmatmul.bf16.gmra.mxu0 %v3038
      %v3148 = vpop.f32.mrf.mxu0
      %v3149 = vadd.f32 0.0, %v3148
      %v3150 = vpop.f32.mrf.mxu0
      %v3151 = vadd.f32 0.0, %v3150
      %3152 = vmatmul.bf16.gmra.mxu0 %v3040
      %v3153 = vpop.f32.mrf.mxu0
      %v3154 = vadd.f32 0.0, %v3153
      %v3155 = vpop.f32.mrf.mxu0
      %v3156 = vadd.f32 0.0, %v3155
      %3157 = vmatmul.bf16.gmra.mxu0 %v3042
      %v3158 = vpop.f32.mrf.mxu0
      %v3159 = vadd.f32 0.0, %v3158
      %v3160 = vpop.f32.mrf.mxu0
      %v3161 = vadd.f32 0.0, %v3160
      %3162 = vmatmul.bf16.gmra.mxu0 %v3044
      %v3163 = vpop.f32.mrf.mxu0
      %v3164 = vadd.f32 0.0, %v3163
      %v3165 = vpop.f32.mrf.mxu0
      %v3166 = vadd.f32 0.0, %v3165
      %3167 = vmatmul.bf16.gmra.mxu0 %v3046
      %v3168 = vpop.f32.mrf.mxu0
      %v3169 = vadd.f32 0.0, %v3168
      %v3170 = vpop.f32.mrf.mxu0
      %v3171 = vadd.f32 0.0, %v3170
      %3172 = vmatmul.bf16.gmra.mxu0 %v3048
      %v3173 = vpop.f32.mrf.mxu0
      %v3174 = vadd.f32 0.0, %v3173
      %v3175 = vpop.f32.mrf.mxu0
      %v3176 = vadd.f32 0.0, %v3175
      %3177 = vmatmul.bf16.gmra.mxu0 %v3050
      %v3178 = vpop.f32.mrf.mxu0
      %v3179 = vadd.f32 0.0, %v3178
      %v3180 = vpop.f32.mrf.mxu0
      %v3181 = vadd.f32 0.0, %v3180
      %3182 = vmatmul.bf16.gmra.mxu0 %v3052
      %v3183 = vpop.f32.mrf.mxu0
      %v3184 = vadd.f32 0.0, %v3183
      %v3185 = vpop.f32.mrf.mxu0
      %v3186 = vadd.f32 0.0, %v3185
      %3187 = vmatmul.bf16.gmra.mxu0 %v3054
      %v3188 = vpop.f32.mrf.mxu0
      %v3189 = vadd.f32 0.0, %v3188
      %v3190 = vpop.f32.mrf.mxu0
      %v3191 = vadd.f32 0.0, %v3190
      %3192 = vmatmul.bf16.gmra.mxu0 %v3056
      %v3193 = vpop.f32.mrf.mxu0
      %v3194 = vadd.f32 0.0, %v3193
      %v3195 = vpop.f32.mrf.mxu0
      %v3196 = vadd.f32 0.0, %v3195
      %3197 = vmatmul.bf16.gmra.mxu0 %v3058
      %v3198 = vpop.f32.mrf.mxu0
      %v3199 = vadd.f32 0.0, %v3198
      %v3200 = vpop.f32.mrf.mxu0
      %v3201 = vadd.f32 0.0, %v3200
      %3202 = vmatmul.bf16.gmra.mxu0 %v3060
      %v3203 = vpop.f32.mrf.mxu0
      %v3204 = vadd.f32 0.0, %v3203
      %v3205 = vpop.f32.mrf.mxu0
      %v3206 = vadd.f32 0.0, %v3205
      %3207 = vmatmul.bf16.gmra.mxu0 %v3062
      %v3208 = vpop.f32.mrf.mxu0
      %v3209 = vadd.f32 0.0, %v3208
      %v3210 = vpop.f32.mrf.mxu0
      %v3211 = vadd.f32 0.0, %v3210
      %3212 = vmatmul.bf16.gmra.mxu0 %v3064
      %v3213 = vpop.f32.mrf.mxu0
      %v3214 = vadd.f32 0.0, %v3213
      %v3215 = vpop.f32.mrf.mxu0
      %v3216 = vadd.f32 0.0, %v3215
      %3217 = vmatmul.bf16.gmra.mxu0 %v3066
      %v3218 = vpop.f32.mrf.mxu0
      %v3219 = vadd.f32 0.0, %v3218
      %v3220 = vpop.f32.mrf.mxu0
      %v3221 = vadd.f32 0.0, %v3220
      %3222 = vmatmul.bf16.gmra.mxu0 %v3068
      %v3223 = vpop.f32.mrf.mxu0
      %v3224 = vadd.f32 0.0, %v3223
      %v3225 = vpop.f32.mrf.mxu0
      %v3226 = vadd.f32 0.0, %v3225
      %3227 = vmatmul.bf16.gmra.mxu0 %v3070
      %v3228 = vpop.f32.mrf.mxu0
      %v3229 = vadd.f32 0.0, %v3228
      %v3230 = vpop.f32.mrf.mxu0
      %v3231 = vadd.f32 0.0, %v3230
      %3232 = vmatmul.bf16.gmra.mxu0 %v3072
      %v3233 = vpop.f32.mrf.mxu0
      %v3234 = vadd.f32 0.0, %v3233
      %v3235 = vpop.f32.mrf.mxu0
      %v3236 = vadd.f32 0.0, %v3235
      %3237 = vdwg.mxu0
      %v3238 = vadd.f32 %v2978, %v3149
      %v3239 = vadd.f32 %v2979, %v3151
      %v3240 = vadd.f32 %v2980, %v3154
      %v3241 = vadd.f32 %v2981, %v3156
      %v3242 = vadd.f32 %v2982, %v3159
      %v3243 = vadd.f32 %v2983, %v3161
      %v3244 = vadd.f32 %v2984, %v3164
      %v3245 = vadd.f32 %v2985, %v3166
      %v3246 = vadd.f32 %v2986, %v3169
      %v3247 = vadd.f32 %v2987, %v3171
      %v3248 = vadd.f32 %v2988, %v3174
      %v3249 = vadd.f32 %v2989, %v3176
      %v3250 = vadd.f32 %v2990, %v3179
      %v3251 = vadd.f32 %v2991, %v3181
      %v3252 = vadd.f32 %v2992, %v3184
      %v3253 = vadd.f32 %v2993, %v3186
      %v3254 = vadd.f32 %v2994, %v3189
      %v3255 = vadd.f32 %v2995, %v3191
      %v3256 = vadd.f32 %v2996, %v3194
      %v3257 = vadd.f32 %v2997, %v3196
      %v3258 = vadd.f32 %v2998, %v3199
      %v3259 = vadd.f32 %v2999, %v3201
      %v3260 = vadd.f32 %v3000, %v3204
      %v3261 = vadd.f32 %v3001, %v3206
      %v3262 = vadd.f32 %v3002, %v3209
      %v3263 = vadd.f32 %v3003, %v3211
      %v3264 = vadd.f32 %v3004, %v3214
      %v3265 = vadd.f32 %v3005, %v3216
      %v3266 = vadd.f32 %v3006, %v3219
      %v3267 = vadd.f32 %v3007, %v3221
      %v3268 = vadd.f32 %v3008, %v3224
      %v3269 = vadd.f32 %v3009, %v3226
      %v3270 = vadd.f32 %v3010, %v3229
      %v3271 = vadd.f32 %v3011, %v3231
      %v3272 = vadd.f32 %v3012, %v3234
      %v3273 = vadd.f32 %v3013, %v3236
      %v3274 = vld [vmem:[#allocation2] sm:$0xff]
      %v3275 = vld [vmem:[#allocation2 + $0x8] sm:$0xff]
      %v3276 = vld [vmem:[#allocation2 + $0x10] sm:$0xff]
      %v3277 = vld [vmem:[#allocation2 + $0x18] sm:$0xff]
      %v3278 = vld [vmem:[#allocation2 + $0x20] sm:$0xff]
      %v3279 = vld [vmem:[#allocation2 + $0x28] sm:$0xff]
      %v3280 = vld [vmem:[#allocation2 + $0x30] sm:$0xff]
      %v3281 = vld [vmem:[#allocation2 + $0x38] sm:$0xff]
      %v3282 = vld [vmem:[#allocation2 + $0x40] sm:$0xff]
      %v3283 = vld [vmem:[#allocation2 + $0x48] sm:$0xff]
      %v3284 = vld [vmem:[#allocation2 + $0x50] sm:$0xff]
      %v3285 = vld [vmem:[#allocation2 + $0x58] sm:$0xff]
      %v3286 = vld [vmem:[#allocation2 + $0x60] sm:$0xff]
      %v3287 = vld [vmem:[#allocation2 + $0x68] sm:$0xff]
      %v3288 = vld [vmem:[#allocation2 + $0x70] sm:$0xff]
      %v3289 = vld [vmem:[#allocation2 + $0x78] sm:$0xff]
      %v3290 = vld [vmem:[#allocation2 + $0x80] sm:$0xff]
      %v3291 = vld [vmem:[#allocation2 + $0x88] sm:$0xff]
      %v3292 = vld [vmem:[#allocation2 + $0x90] sm:$0xff]
      %v3293 = vld [vmem:[#allocation2 + $0x98] sm:$0xff]
      %v3294 = vld [vmem:[#allocation2 + $0xa0] sm:$0xff]
      %v3295 = vld [vmem:[#allocation2 + $0xa8] sm:$0xff]
      %v3296 = vld [vmem:[#allocation2 + $0xb0] sm:$0xff]
      %v3297 = vld [vmem:[#allocation2 + $0xb8] sm:$0xff]
      %v3298 = vld [vmem:[#allocation2 + $0xc0] sm:$0xff]
      %v3299 = vld [vmem:[#allocation2 + $0xc8] sm:$0xff]
      %v3300 = vld [vmem:[#allocation2 + $0xd0] sm:$0xff]
      %v3301 = vld [vmem:[#allocation2 + $0xd8] sm:$0xff]
      %v3302 = vld [vmem:[#allocation2 + $0xe0] sm:$0xff]
      %v3303 = vld [vmem:[#allocation2 + $0xe8] sm:$0xff]
      %v3304 = vld [vmem:[#allocation2 + $0xf0] sm:$0xff]
      %v3305 = vld [vmem:[#allocation2 + $0xf8] sm:$0xff]
      %v3306 = vld [vmem:[#allocation2 + $0x100] sm:$0xff]
      %v3307 = vld [vmem:[#allocation2 + $0x108] sm:$0xff]
      %v3308 = vld [vmem:[#allocation2 + $0x110] sm:$0xff]
      %v3309 = vld [vmem:[#allocation2 + $0x118] sm:$0xff]
      %v3310 = vadd.f32 %v3274, %v3238
      %v3311 = vadd.f32 %v3275, %v3239
      %v3312 = vadd.f32 %v3276, %v3240
      %v3313 = vadd.f32 %v3277, %v3241
      %v3314 = vadd.f32 %v3278, %v3242
      %v3315 = vadd.f32 %v3279, %v3243
      %v3316 = vadd.f32 %v3280, %v3244
      %v3317 = vadd.f32 %v3281, %v3245
      %v3318 = vadd.f32 %v3282, %v3246
      %v3319 = vadd.f32 %v3283, %v3247
      %v3320 = vadd.f32 %v3284, %v3248
      %v3321 = vadd.f32 %v3285, %v3249
      %v3322 = vadd.f32 %v3286, %v3250
      %v3323 = vadd.f32 %v3287, %v3251
      %v3324 = vadd.f32 %v3288, %v3252
      %v3325 = vadd.f32 %v3289, %v3253
      %v3326 = vadd.f32 %v3290, %v3254
      %v3327 = vadd.f32 %v3291, %v3255
      %v3328 = vadd.f32 %v3292, %v3256
      %v3329 = vadd.f32 %v3293, %v3257
      %v3330 = vadd.f32 %v3294, %v3258
      %v3331 = vadd.f32 %v3295, %v3259
      %v3332 = vadd.f32 %v3296, %v3260
      %v3333 = vadd.f32 %v3297, %v3261
      %v3334 = vadd.f32 %v3298, %v3262
      %v3335 = vadd.f32 %v3299, %v3263
      %v3336 = vadd.f32 %v3300, %v3264
      %v3337 = vadd.f32 %v3301, %v3265
      %v3338 = vadd.f32 %v3302, %v3266
      %v3339 = vadd.f32 %v3303, %v3267
      %v3340 = vadd.f32 %v3304, %v3268
      %v3341 = vadd.f32 %v3305, %v3269
      %v3342 = vadd.f32 %v3306, %v3270
      %v3343 = vadd.f32 %v3307, %v3271
      %v3344 = vadd.f32 %v3308, %v3272
      %v3345 = vadd.f32 %v3309, %v3273
      %3346 = vst [vmem:[#allocation2] sm:$0xff] %v3310
      %3347 = vst [vmem:[#allocation2 + $0x8] sm:$0xff] %v3311
      %3348 = vst [vmem:[#allocation2 + $0x10] sm:$0xff] %v3312
      %3349 = vst [vmem:[#allocation2 + $0x18] sm:$0xff] %v3313
      %3350 = vst [vmem:[#allocation2 + $0x20] sm:$0xff] %v3314
      %3351 = vst [vmem:[#allocation2 + $0x28] sm:$0xff] %v3315
      %3352 = vst [vmem:[#allocation2 + $0x30] sm:$0xff] %v3316
      %3353 = vst [vmem:[#allocation2 + $0x38] sm:$0xff] %v3317
      %3354 = vst [vmem:[#allocation2 + $0x40] sm:$0xff] %v3318
      %3355 = vst [vmem:[#allocation2 + $0x48] sm:$0xff] %v3319
      %3356 = vst [vmem:[#allocation2 + $0x50] sm:$0xff] %v3320
      %3357 = vst [vmem:[#allocation2 + $0x58] sm:$0xff] %v3321
      %3358 = vst [vmem:[#allocation2 + $0x60] sm:$0xff] %v3322
      %3359 = vst [vmem:[#allocation2 + $0x68] sm:$0xff] %v3323
      %3360 = vst [vmem:[#allocation2 + $0x70] sm:$0xff] %v3324
      %3361 = vst [vmem:[#allocation2 + $0x78] sm:$0xff] %v3325
      %3362 = vst [vmem:[#allocation2 + $0x80] sm:$0xff] %v3326
      %3363 = vst [vmem:[#allocation2 + $0x88] sm:$0xff] %v3327
      %3364 = vst [vmem:[#allocation2 + $0x90] sm:$0xff] %v3328
      %3365 = vst [vmem:[#allocation2 + $0x98] sm:$0xff] %v3329
      %3366 = vst [vmem:[#allocation2 + $0xa0] sm:$0xff] %v3330
      %3367 = vst [vmem:[#allocation2 + $0xa8] sm:$0xff] %v3331
      %3368 = vst [vmem:[#allocation2 + $0xb0] sm:$0xff] %v3332
      %3369 = vst [vmem:[#allocation2 + $0xb8] sm:$0xff] %v3333
      %3370 = vst [vmem:[#allocation2 + $0xc0] sm:$0xff] %v3334
      %3371 = vst [vmem:[#allocation2 + $0xc8] sm:$0xff] %v3335
      %3372 = vst [vmem:[#allocation2 + $0xd0] sm:$0xff] %v3336
      %3373 = vst [vmem:[#allocation2 + $0xd8] sm:$0xff] %v3337
      %3374 = vst [vmem:[#allocation2 + $0xe0] sm:$0xff] %v3338
      %3375 = vst [vmem:[#allocation2 + $0xe8] sm:$0xff] %v3339
      %3376 = vst [vmem:[#allocation2 + $0xf0] sm:$0xff] %v3340
      %3377 = vst [vmem:[#allocation2 + $0xf8] sm:$0xff] %v3341
      %3378 = vst [vmem:[#allocation2 + $0x100] sm:$0xff] %v3342
      %3379 = vst [vmem:[#allocation2 + $0x108] sm:$0xff] %v3343
      %3380 = vst [vmem:[#allocation2 + $0x110] sm:$0xff] %v3344
      %3381 = vst [vmem:[#allocation2 + $0x118] sm:$0xff] %v3345
      // Predicated region
      $region37: #{_bottleneck_v1b_forward.4} parent=31 // pred_check
        %p3382 = pneg %p256
      $region38: #{_bottleneck_v1b_forward.4} parent=31 // pred_check_branch
        %3384 = sbr.rel (%p3382) target = $region40
      $region39: #{_bottleneck_v1b_forward.4} parent=31 // pred_region
        %v3385 = vld [vmem:[#allocation2] sm:$0xff]
        %v3386 = vld [vmem:[#allocation2 + $0x8] sm:$0xff]
        %v3387 = vld [vmem:[#allocation2 + $0x10] sm:$0xff]
        %v3388 = vld [vmem:[#allocation2 + $0x18] sm:$0xff]
        %v3389 = vld [vmem:[#allocation2 + $0x20] sm:$0xff]
        %v3390 = vld [vmem:[#allocation2 + $0x28] sm:$0xff]
        %v3391 = vld [vmem:[#allocation2 + $0x30] sm:$0xff]
        %v3392 = vld [vmem:[#allocation2 + $0x38] sm:$0xff]
        %v3393 = vld [vmem:[#allocation2 + $0x40] sm:$0xff]
        %v3394 = vld [vmem:[#allocation2 + $0x48] sm:$0xff]
        %v3395 = vld [vmem:[#allocation2 + $0x50] sm:$0xff]
        %v3396 = vld [vmem:[#allocation2 + $0x58] sm:$0xff]
        %v3397 = vld [vmem:[#allocation2 + $0x60] sm:$0xff]
        %v3398 = vld [vmem:[#allocation2 + $0x68] sm:$0xff]
        %v3399 = vld [vmem:[#allocation2 + $0x70] sm:$0xff]
        %v3400 = vld [vmem:[#allocation2 + $0x78] sm:$0xff]
        %v3401 = vld [vmem:[#allocation2 + $0x80] sm:$0xff]
        %v3402 = vld [vmem:[#allocation2 + $0x88] sm:$0xff]
        %v3403 = vld [vmem:[#allocation2 + $0x90] sm:$0xff]
        %v3404 = vld [vmem:[#allocation2 + $0x98] sm:$0xff]
        %v3405 = vld [vmem:[#allocation2 + $0xa0] sm:$0xff]
        %v3406 = vld [vmem:[#allocation2 + $0xa8] sm:$0xff]
        %v3407 = vld [vmem:[#allocation2 + $0xb0] sm:$0xff]
        %v3408 = vld [vmem:[#allocation2 + $0xb8] sm:$0xff]
        %v3409 = vld [vmem:[#allocation2 + $0xc0] sm:$0xff]
        %v3410 = vld [vmem:[#allocation2 + $0xc8] sm:$0xff]
        %v3411 = vld [vmem:[#allocation2 + $0xd0] sm:$0xff]
        %v3412 = vld [vmem:[#allocation2 + $0xd8] sm:$0xff]
        %v3413 = vld [vmem:[#allocation2 + $0xe0] sm:$0xff]
        %v3414 = vld [vmem:[#allocation2 + $0xe8] sm:$0xff]
        %v3415 = vld [vmem:[#allocation2 + $0xf0] sm:$0xff]
        %v3416 = vld [vmem:[#allocation2 + $0xf8] sm:$0xff]
        %v3417 = vld [vmem:[#allocation2 + $0x100] sm:$0xff]
        %v3418 = vld [vmem:[#allocation2 + $0x108] sm:$0xff]
        %v3419 = vld [vmem:[#allocation2 + $0x110] sm:$0xff]
        %v3420 = vld [vmem:[#allocation2 + $0x118] sm:$0xff]
        %v3421 = vld [vmem:[%s247] sm:$0x1]
        %v3423 = vperm.slane %v3421, 0
        %v3425 = vadd.f32 %v3385, %v3423
        %v3426 = vadd.f32 %v3386, %v3423
        %v3427 = vadd.f32 %v3387, %v3423
        %v3428 = vadd.f32 %v3388, %v3423
        %v3429 = vadd.f32 %v3389, %v3423
        %v3430 = vadd.f32 %v3390, %v3423
        %v3431 = vadd.f32 %v3391, %v3423
        %v3432 = vadd.f32 %v3392, %v3423
        %v3433 = vadd.f32 %v3393, %v3423
        %v3434 = vadd.f32 %v3394, %v3423
        %v3435 = vadd.f32 %v3395, %v3423
        %v3436 = vadd.f32 %v3396, %v3423
        %v3437 = vadd.f32 %v3397, %v3423
        %v3438 = vadd.f32 %v3398, %v3423
        %v3439 = vadd.f32 %v3399, %v3423
        %v3440 = vadd.f32 %v3400, %v3423
        %v3441 = vadd.f32 %v3401, %v3423
        %v3442 = vadd.f32 %v3402, %v3423
        %v3443 = vadd.f32 %v3403, %v3423
        %v3444 = vadd.f32 %v3404, %v3423
        %v3445 = vadd.f32 %v3405, %v3423
        %v3446 = vadd.f32 %v3406, %v3423
        %v3447 = vadd.f32 %v3407, %v3423
        %v3448 = vadd.f32 %v3408, %v3423
        %v3449 = vadd.f32 %v3409, %v3423
        %v3450 = vadd.f32 %v3410, %v3423
        %v3451 = vadd.f32 %v3411, %v3423
        %v3452 = vadd.f32 %v3412, %v3423
        %v3453 = vadd.f32 %v3413, %v3423
        %v3454 = vadd.f32 %v3414, %v3423
        %v3455 = vadd.f32 %v3415, %v3423
        %v3456 = vadd.f32 %v3416, %v3423
        %v3457 = vadd.f32 %v3417, %v3423
        %v3458 = vadd.f32 %v3418, %v3423
        %v3459 = vadd.f32 %v3419, %v3423
        %v3460 = vadd.f32 %v3420, %v3423
        %v3461 = vmax.f32 %v3425, 0.0
        %v3462 = vmax.f32 %v3426, 0.0
        %v3463 = vmax.f32 %v3427, 0.0
        %v3464 = vmax.f32 %v3428, 0.0
        %v3465 = vmax.f32 %v3429, 0.0
        %v3466 = vmax.f32 %v3430, 0.0
        %v3467 = vmax.f32 %v3431, 0.0
        %v3468 = vmax.f32 %v3432, 0.0
        %v3469 = vmax.f32 %v3433, 0.0
        %v3470 = vmax.f32 %v3434, 0.0
        %v3471 = vmax.f32 %v3435, 0.0
        %v3472 = vmax.f32 %v3436, 0.0
        %v3473 = vmax.f32 %v3437, 0.0
        %v3474 = vmax.f32 %v3438, 0.0
        %v3475 = vmax.f32 %v3439, 0.0
        %v3476 = vmax.f32 %v3440, 0.0
        %v3477 = vmax.f32 %v3441, 0.0
        %v3478 = vmax.f32 %v3442, 0.0
        %v3479 = vmax.f32 %v3443, 0.0
        %v3480 = vmax.f32 %v3444, 0.0
        %v3481 = vmax.f32 %v3445, 0.0
        %v3482 = vmax.f32 %v3446, 0.0
        %v3483 = vmax.f32 %v3447, 0.0
        %v3484 = vmax.f32 %v3448, 0.0
        %v3485 = vmax.f32 %v3449, 0.0
        %v3486 = vmax.f32 %v3450, 0.0
        %v3487 = vmax.f32 %v3451, 0.0
        %v3488 = vmax.f32 %v3452, 0.0
        %v3489 = vmax.f32 %v3453, 0.0
        %v3490 = vmax.f32 %v3454, 0.0
        %v3491 = vmax.f32 %v3455, 0.0
        %v3492 = vmax.f32 %v3456, 0.0
        %v3493 = vmax.f32 %v3457, 0.0
        %v3494 = vmax.f32 %v3458, 0.0
        %v3495 = vmax.f32 %v3459, 0.0
        %v3496 = vmax.f32 %v3460, 0.0
        %v3497 = vpack.c.bf16 %v3461, %v3461
        %v3498 = vpack.c.bf16 %v3462, %v3462
        %v3499 = vpack.c.bf16 %v3463, %v3463
        %v3500 = vpack.c.bf16 %v3464, %v3464
        %v3501 = vpack.c.bf16 %v3465, %v3465
        %v3502 = vpack.c.bf16 %v3466, %v3466
        %v3503 = vpack.c.bf16 %v3467, %v3467
        %v3504 = vpack.c.bf16 %v3468, %v3468
        %v3505 = vpack.c.bf16 %v3469, %v3469
        %v3506 = vpack.c.bf16 %v3470, %v3470
        %v3507 = vpack.c.bf16 %v3471, %v3471
        %v3508 = vpack.c.bf16 %v3472, %v3472
        %v3509 = vpack.c.bf16 %v3473, %v3473
        %v3510 = vpack.c.bf16 %v3474, %v3474
        %v3511 = vpack.c.bf16 %v3475, %v3475
        %v3512 = vpack.c.bf16 %v3476, %v3476
        %v3513 = vpack.c.bf16 %v3477, %v3477
        %v3514 = vpack.c.bf16 %v3478, %v3478
        %v3515 = vpack.c.bf16 %v3479, %v3479
        %v3516 = vpack.c.bf16 %v3480, %v3480
        %v3517 = vpack.c.bf16 %v3481, %v3481
        %v3518 = vpack.c.bf16 %v3482, %v3482
        %v3519 = vpack.c.bf16 %v3483, %v3483
        %v3520 = vpack.c.bf16 %v3484, %v3484
        %v3521 = vpack.c.bf16 %v3485, %v3485
        %v3522 = vpack.c.bf16 %v3486, %v3486
        %v3523 = vpack.c.bf16 %v3487, %v3487
        %v3524 = vpack.c.bf16 %v3488, %v3488
        %v3525 = vpack.c.bf16 %v3489, %v3489
        %v3526 = vpack.c.bf16 %v3490, %v3490
        %v3527 = vpack.c.bf16 %v3491, %v3491
        %v3528 = vpack.c.bf16 %v3492, %v3492
        %v3529 = vpack.c.bf16 %v3493, %v3493
        %v3530 = vpack.c.bf16 %v3494, %v3494
        %v3531 = vpack.c.bf16 %v3495, %v3495
        %v3532 = vpack.c.bf16 %v3496, %v3496
        %3533 = vst [vmem:[%s255] sm:$0xf] %v3497
        %3534 = vst [vmem:[%s255 + $0x4] sm:$0xf] %v3498
        %vm3538 = vcmask 1042432
        %vm3539 = vcmask 1046532
        %vm3540 = vmor %vm3538, %vm3539
        %v3541 = vrot.slane %v3499, 5
        %v3542 = vrot.slane %v3541, 4
        %v3543 = vrot.slane %v3500, 5
        %v3544 = vsel %vm3540, %v3542, %v3543
        %v3545 = vrot.slane %v3543, 4
        %v3546 = vrot.slane %v3501, 5
        %v3547 = vsel %vm3540, %v3545, %v3546
        %s3550 = scalar_lea.vmem %s255, 8
        %3551 = vst [vmem:[%s3550] sm:$0xf] %v3544
        %3552 = vst [vmem:[%s3550 + $0x4] sm:$0xf] %v3547
        %vm3555 = vcmask 1041408
        %vm3556 = vcmask 1045508
        %vm3557 = vmor %vm3555, %vm3556
        %v3558 = vrot.slane %v3501, 6
        %v3559 = vrot.slane %v3558, 4
        %v3560 = vrot.slane %v3502, 6
        %v3561 = vsel %vm3557, %v3559, %v3560
        %v3562 = vrot.slane %v3560, 4
        %v3563 = vrot.slane %v3503, 6
        %v3564 = vsel %vm3557, %v3562, %v3563
        %s3567 = scalar_lea.vmem %s255, 16
        %3568 = vst [vmem:[%s3567] sm:$0xf] %v3561
        %3569 = vst [vmem:[%s3567 + $0x4] sm:$0xf] %v3564
        %vm3572 = vcmask 1040384
        %vm3573 = vcmask 1044484
        %vm3574 = vmor %vm3572, %vm3573
        %v3575 = vrot.slane %v3503, 7
        %v3576 = vrot.slane %v3575, 4
        %v3577 = vrot.slane %v3504, 7
        %v3578 = vsel %vm3574, %v3576, %v3577
        %v3579 = vrot.slane %v3577, 4
        %v3580 = vrot.slane %v3505, 7
        %v3581 = vsel %vm3574, %v3579, %v3580
        %s3584 = scalar_lea.vmem %s255, 24
        %3585 = vst [vmem:[%s3584] sm:$0xf] %v3578
        %3586 = vst [vmem:[%s3584 + $0x4] sm:$0xf] %v3581
        %s3587 = scalar_lea.vmem %s255, 32
        %3588 = vst [vmem:[%s3587] sm:$0xf] %v3506
        %3589 = vst [vmem:[%s3587 + $0x4] sm:$0xf] %v3507
        %v3593 = vrot.slane %v3508, 5
        %v3594 = vrot.slane %v3593, 4
        %v3595 = vrot.slane %v3509, 5
        %v3596 = vsel %vm3540, %v3594, %v3595
        %v3597 = vrot.slane %v3595, 4
        %v3598 = vrot.slane %v3510, 5
        %v3599 = vsel %vm3540, %v3597, %v3598
        %s3602 = scalar_lea.vmem %s255, 40
        %3603 = vst [vmem:[%s3602] sm:$0xf] %v3596
        %3604 = vst [vmem:[%s3602 + $0x4] sm:$0xf] %v3599
        %v3607 = vrot.slane %v3510, 6
        %v3608 = vrot.slane %v3607, 4
        %v3609 = vrot.slane %v3511, 6
        %v3610 = vsel %vm3557, %v3608, %v3609
        %v3611 = vrot.slane %v3609, 4
        %v3612 = vrot.slane %v3512, 6
        %v3613 = vsel %vm3557, %v3611, %v3612
        %s3616 = scalar_lea.vmem %s255, 48
        %3617 = vst [vmem:[%s3616] sm:$0xf] %v3610
        %3618 = vst [vmem:[%s3616 + $0x4] sm:$0xf] %v3613
        %v3621 = vrot.slane %v3512, 7
        %v3622 = vrot.slane %v3621, 4
        %v3623 = vrot.slane %v3513, 7
        %v3624 = vsel %vm3574, %v3622, %v3623
        %v3625 = vrot.slane %v3623, 4
        %v3626 = vrot.slane %v3514, 7
        %v3627 = vsel %vm3574, %v3625, %v3626
        %s3630 = scalar_lea.vmem %s255, 56
        %3631 = vst [vmem:[%s3630] sm:$0xf] %v3624
        %3632 = vst [vmem:[%s3630 + $0x4] sm:$0xf] %v3627
        %s3633 = scalar_lea.vmem %s255, 64
        %3634 = vst [vmem:[%s3633] sm:$0xf] %v3515
        %3635 = vst [vmem:[%s3633 + $0x4] sm:$0xf] %v3516
        %v3639 = vrot.slane %v3517, 5
        %v3640 = vrot.slane %v3639, 4
        %v3641 = vrot.slane %v3518, 5
        %v3642 = vsel %vm3540, %v3640, %v3641
        %v3643 = vrot.slane %v3641, 4
        %v3644 = vrot.slane %v3519, 5
        %v3645 = vsel %vm3540, %v3643, %v3644
        %s3648 = scalar_lea.vmem %s255, 72
        %3649 = vst [vmem:[%s3648] sm:$0xf] %v3642
        %3650 = vst [vmem:[%s3648 + $0x4] sm:$0xf] %v3645
        %v3653 = vrot.slane %v3519, 6
        %v3654 = vrot.slane %v3653, 4
        %v3655 = vrot.slane %v3520, 6
        %v3656 = vsel %vm3557, %v3654, %v3655
        %v3657 = vrot.slane %v3655, 4
        %v3658 = vrot.slane %v3521, 6
        %v3659 = vsel %vm3557, %v3657, %v3658
        %s3662 = scalar_lea.vmem %s255, 80
        %3663 = vst [vmem:[%s3662] sm:$0xf] %v3656
        %3664 = vst [vmem:[%s3662 + $0x4] sm:$0xf] %v3659
        %v3667 = vrot.slane %v3521, 7
        %v3668 = vrot.slane %v3667, 4
        %v3669 = vrot.slane %v3522, 7
        %v3670 = vsel %vm3574, %v3668, %v3669
        %v3671 = vrot.slane %v3669, 4
        %v3672 = vrot.slane %v3523, 7
        %v3673 = vsel %vm3574, %v3671, %v3672
        %s3676 = scalar_lea.vmem %s255, 88
        %3677 = vst [vmem:[%s3676] sm:$0xf] %v3670
        %3678 = vst [vmem:[%s3676 + $0x4] sm:$0xf] %v3673
        %s3679 = scalar_lea.vmem %s255, 96
        %3680 = vst [vmem:[%s3679] sm:$0xf] %v3524
        %3681 = vst [vmem:[%s3679 + $0x4] sm:$0xf] %v3525
        %v3685 = vrot.slane %v3526, 5
        %v3686 = vrot.slane %v3685, 4
        %v3687 = vrot.slane %v3527, 5
        %v3688 = vsel %vm3540, %v3686, %v3687
        %v3689 = vrot.slane %v3687, 4
        %v3690 = vrot.slane %v3528, 5
        %v3691 = vsel %vm3540, %v3689, %v3690
        %s3694 = scalar_lea.vmem %s255, 104
        %3695 = vst [vmem:[%s3694] sm:$0xf] %v3688
        %3696 = vst [vmem:[%s3694 + $0x4] sm:$0xf] %v3691
        %v3699 = vrot.slane %v3528, 6
        %v3700 = vrot.slane %v3699, 4
        %v3701 = vrot.slane %v3529, 6
        %v3702 = vsel %vm3557, %v3700, %v3701
        %v3703 = vrot.slane %v3701, 4
        %v3704 = vrot.slane %v3530, 6
        %v3705 = vsel %vm3557, %v3703, %v3704
        %s3708 = scalar_lea.vmem %s255, 112
        %3709 = vst [vmem:[%s3708] sm:$0xf] %v3702
        %3710 = vst [vmem:[%s3708 + $0x4] sm:$0xf] %v3705
        %v3713 = vrot.slane %v3530, 7
        %v3714 = vrot.slane %v3713, 4
        %v3715 = vrot.slane %v3531, 7
        %v3716 = vsel %vm3574, %v3714, %v3715
        %v3717 = vrot.slane %v3715, 4
        %v3718 = vrot.slane %v3532, 7
        %v3719 = vsel %vm3574, %v3717, %v3718
        %s3722 = scalar_lea.vmem %s255, 120
        %3723 = vst [vmem:[%s3722] sm:$0xf] %v3716
        %3724 = vst [vmem:[%s3722 + $0x4] sm:$0xf] %v3719
      $region40: #{_bottleneck_v1b_forward.4} parent=31 // pred_fallthru
        _
      %p3725 = scmp.lt.s32.totalorder %s19, 1
      %s3726 = scalar_select %p3725, %s19, 1
      %p3727 = scmp.lt.s32.totalorder %s20, 0
      %s3728 = scalar_select %p3727, %s20, 0
      %s3729 = smul.addr %s3726, 32
      %s3730 = sadd.s32 %s3728, %s3729
      %s3731 = smul.addr %s3730, 4
      %s3732 = scalar_lea.vmem %s3, %s3731
      // Predicated region
      $region41: #{_bottleneck_v1b_forward.4} parent=31 // pred_check
        %p3733 = pneg %p135
      $region42: #{_bottleneck_v1b_forward.4} parent=31 // pred_check_branch
        %3735 = sbr.rel (%p3733) target = $region44
      $region43: #{_bottleneck_v1b_forward.4} parent=31 // pred_region
        _
      $region44: #{_bottleneck_v1b_forward.4} parent=31 // pred_fallthru
        _
    $region32: #{_bottleneck_v1b_forward.4} parent=5 // pred_fallthru
      _
    %p3736 = scmp.le.s32.totalorder 2, %s9
    // Predicated region
    $region45: #{_bottleneck_v1b_forward.4} parent=5 // pred_check
      %p3737 = pneg %p3736
    $region46: #{_bottleneck_v1b_forward.4} parent=5 // pred_check_branch
      %3739 = sbr.rel (%p3737) target = $region48
    $region47: #{_bottleneck_v1b_forward.4} parent=5 // pred_region
      %s3740 = ssub.s32 %s9, 2
      // Predicated region
      $region49: #{_bottleneck_v1b_forward.4} parent=47 // pred_check
        %p3741 = pneg %p141
      $region50: #{_bottleneck_v1b_forward.4} parent=47 // pred_check_branch
        %3743 = sbr.rel (%p3741) target = $region52
      $region51: #{_bottleneck_v1b_forward.4} parent=47 // pred_region
        %p3744 = scmp.lt.s32.totalorder %s22, 1
        %s3745 = scalar_select %p3744, %s22, 1
        %p3746 = scmp.lt.s32.totalorder %s23, 0
        %s3747 = scalar_select %p3746, %s23, 0
        %s3748 = smul.addr %s3745, 32
        %s3749 = sadd.s32 %s3747, %s3748
        %s3750 = smul.addr %s3749, 4
        %s3751 = scalar_lea.vmem %s3, %s3750
      $region52: #{_bottleneck_v1b_forward.4} parent=47 // pred_fallthru
        _
    $region48: #{_bottleneck_v1b_forward.4} parent=5 // pred_fallthru
      _
  $region6: #{_bottleneck_v1b_forward.4} parent=0 // loop_footer
    %s13 = sadd.s32 1, %s9
  $region7: #{_bottleneck_v1b_forward.4} parent=0 // loop_footer_branch
    %8 = sbr.rel target = $region3
  $region8: #{_bottleneck_v1b_forward.4} parent=0 // loop_exit
    _

</llo_original>
